<compile_context>
chip_gen: v6e
topology: v6e:2x2x1
jax: 0.10.0
libtpu: 0.0.40
codegen_flags: <defaults>
</compile_context>

<pallas_src>
import functools

import jax
import jax.numpy as jnp
from jax.experimental import pallas as pl
from jax.experimental.pallas import tpu as pltpu


# ---------------------------------------------------------------------------
# Fused encoder + decoder kernel (single grid point, loops unrolled)
# ---------------------------------------------------------------------------
def _seq2seq_kernel(src_emb_ref, tgt_emb_ref, dec_emb_ref,
                    enc_w_ref, enc_b_ref, dec_w_ref, dec_b_ref,
                    fcw_ref, fcb_ref, out_ref):
    src_len, B, E = src_emb_ref.shape
    tgt_len = tgt_emb_ref.shape[0]
    H = fcw_ref.shape[0]
    V = out_ref.shape[2]

    def lstm_step(x, h, c, w_ref, b_ref):
        """x [B,E], h/c [B,H] -> (h_new, c_new). One fused gate matmul."""
        # [x|h] @ [[W_ih],[W_hh]]: weights were concatenated host-side, so the
        # only in-kernel cost is a cheap lane concat within a single vreg.
        xh = jnp.concatenate([x, h], axis=1)                        # [B, E+H]
        gates = (jnp.dot(xh, w_ref[...], preferred_element_type=jnp.float32)
                 + b_ref[...])                                      # [B, 4H]
        # Full-lane-width transcendentals (EUP slot), slice only afterwards.
        sig = jax.nn.sigmoid(gates)
        tng = jnp.tanh(gates)
        i_g = sig[:, 0 * H:1 * H]
        f_g = sig[:, 1 * H:2 * H]
        g_g = tng[:, 2 * H:3 * H]
        o_g = sig[:, 3 * H:4 * H]
        c_new = f_g * c + i_g * g_g
        h_new = o_g * jnp.tanh(c_new)
        return h_new, c_new

    # ----------------- encoder: fully unrolled over source time -------------
    h = jnp.zeros((B, H), jnp.float32)
    c = jnp.zeros((B, H), jnp.float32)
    for t in range(src_len):
        h, c = lstm_step(src_emb_ref[t], h, c, enc_w_ref, enc_b_ref)

    # ----------------- decoder: fully unrolled over target time -------------
    out_ref[0] = jnp.zeros((B, V), jnp.float32)      # PyTorch: outputs[0] == 0
    x = tgt_emb_ref[0]                               # x = target[0], embedded
    lane = jax.lax.broadcasted_iota(jnp.int32, (B, V), 1)
    for s in range(tgt_len - 1):                     # output time step t = s+1
        h, c = lstm_step(x, h, c, dec_w_ref, dec_b_ref)
        logits = (jnp.dot(h, fcw_ref[...], preferred_element_type=jnp.float32)
                  + fcb_ref[...])                    # [B, V] lane-dense
        out_ref[s + 1] = logits

        if s + 1 < tgt_len - 1:   # last step's next-input is never consumed
            # TODO(synk): random.random() < teacher_force_ratio replaced with a
            # deterministic alternating schedule for reproducibility.
            teacher_force = ((s + 1) % 2) == 1       # static per unrolled step
            if teacher_force:
                x = tgt_emb_ref[s + 1]               # teacher-forced input
            else:
                # Greedy token: first-occurrence argmax (torch semantics),
                # embedding lookup as one-hot @ table on the MXU.
                row_max = jnp.max(logits, axis=1, keepdims=True)
                first_max = jnp.min(jnp.where(logits == row_max, lane, V),
                                    axis=1, keepdims=True)           # [B, 1]
                guess_oh = (lane == first_max).astype(jnp.float32)   # [B, V]
                x = jnp.dot(guess_oh, dec_emb_ref[...],
                            preferred_element_type=jnp.float32)      # [B, E]


def seq2seq_pallas_call(params, src_emb, tgt_emb):
    """src_emb [src_len,B,E], tgt_emb [tgt_len,B,E] -> outputs [tgt_len,B,V]."""
    src_len, B, E = src_emb.shape
    tgt_len = tgt_emb.shape[0]
    H = params["fc_w"].shape[0]
    V = params["fc_b"].shape[1]
    c2 = lambda i: (0, 0)
    c3 = lambda i: (0, 0, 0)
    return pl.pallas_call(
        _seq2seq_kernel,
        out_shape=jax.ShapeDtypeStruct((tgt_len, B, V), jnp.float32),
        grid_spec=pltpu.PrefetchScalarGridSpec(
            num_scalar_prefetch=0,
            grid=(1,),                                   # single grid point
            in_specs=[pl.BlockSpec((src_len, B, E), c3),  # src embeddings
                      pl.BlockSpec((tgt_len, B, E), c3),  # tgt embeddings
                      pl.BlockSpec((V, E), c2),           # dec emb table
                      pl.BlockSpec((E + H, 4 * H), c2),   # enc fused W
                      pl.BlockSpec((1, 4 * H), c2),       # enc bias
                      pl.BlockSpec((E + H, 4 * H), c2),   # dec fused W
                      pl.BlockSpec((1, 4 * H), c2),       # dec bias
                      pl.BlockSpec((H, V), c2),           # fc W
                      pl.BlockSpec((1, V), c2)],          # fc b
            out_specs=pl.BlockSpec((tgt_len, B, V), c3)),
        compiler_params=pltpu.CompilerParams(
            dimension_semantics=("arbitrary",)),
    )(src_emb, tgt_emb, params["dec_emb"],
      params["enc_w"], params["enc_b"],
      params["dec_w"], params["dec_b"],
      params["fc_w"], params["fc_b"])


# ---------------------------------------------------------------------------
# Parameters (deterministic).  Single bias per LSTM == b_ih + b_hh of
# torch.nn.LSTM; a real weight-loading path must sum the two PyTorch biases
# and concatenate W_ih^T / W_hh^T along the input axis.
# ---------------------------------------------------------------------------
def init_params(key, vocab_size, embed_dim, hidden_dim):
    ks = jax.random.split(key, 10)
    s = 1.0 / jnp.sqrt(hidden_dim)

    def u(k, shape):
        return jax.random.uniform(k, shape, jnp.float32, -s, s)

    return {
        "enc_emb": u(ks[0], (vocab_size, embed_dim)),
        "enc_w":   jnp.concatenate(
            [u(ks[1], (embed_dim, 4 * hidden_dim)),
             u(ks[2], (hidden_dim, 4 * hidden_dim))], axis=0),  # [E+H, 4H]
        "enc_b":   u(ks[3], (1, 4 * hidden_dim)),
        "dec_emb": u(ks[4], (vocab_size, embed_dim)),
        "dec_w":   jnp.concatenate(
            [u(ks[5], (embed_dim, 4 * hidden_dim)),
             u(ks[6], (hidden_dim, 4 * hidden_dim))], axis=0),  # [E+H, 4H]
        "dec_b":   u(ks[7], (1, 4 * hidden_dim)),
        "fc_w":    u(ks[8], (hidden_dim, vocab_size)),
        "fc_b":    u(ks[9], (1, vocab_size)),
    }


# ---------------------------------------------------------------------------
# Full forward (jit: one dispatch for the whole seq2seq pass)
# ---------------------------------------------------------------------------
@functools.partial(jax.jit, static_argnames=("teacher_force_ratio",))
def seq2seq_forward(params, source, target, teacher_force_ratio=0.5):
    del teacher_force_ratio  # deterministic schedule inside the kernel (TODO)
    # One vectorized embedding gather per phase (all timesteps at once).
    src_emb = jnp.take(params["enc_emb"], source, axis=0)   # [src_len, B, E]
    tgt_emb = jnp.take(params["dec_emb"], target, axis=0)   # [tgt_len, B, E]
    return seq2seq_pallas_call(params, src_emb, tgt_emb)


# ---------------------------------------------------------------------------
# Main
# ---------------------------------------------------------------------------
if __name__ == "__main__":
    VOCAB = 128     # stand-in for len(english.vocab); lane-aligned logits
    EMBED = 32
    HIDDEN = 32     # 4*HIDDEN = 128 -> lane-aligned gate matmul
    SRC_LEN = 6
    TGT_LEN = 8
    BATCH = 8       # one sublane tile

    key = jax.random.PRNGKey(0)
    k_par, k_src, k_tgt = jax.random.split(key, 3)

    params = init_params(k_par, VOCAB, EMBED, HIDDEN)
    source = jax.random.randint(k_src, (SRC_LEN, BATCH), 0, VOCAB, jnp.int32)
    target = jax.random.randint(k_tgt, (TGT_LEN, BATCH), 0, VOCAB, jnp.int32)

    outputs = seq2seq_forward(params, source, target)
    outputs = jax.block_until_ready(outputs)

    assert outputs.shape == (TGT_LEN, BATCH, VOCAB)
    assert bool(jnp.all(outputs[0] == 0.0))
    assert bool(jnp.all(jnp.isfinite(outputs)))
    print("KERNEL_OK")
</pallas_src>

<mosaic_0001>
module attributes {stable_mosaic.version = 11 : i64} {
  func.func @_seq2seq_kernel(%arg0: i32, %arg1: memref<6x8x32xf32, #tpu.memory_space<vmem>>, %arg2: memref<8x8x32xf32, #tpu.memory_space<vmem>>, %arg3: memref<128x32xf32, #tpu.memory_space<vmem>>, %arg4: memref<64x128xf32, #tpu.memory_space<vmem>>, %arg5: memref<1x128xf32, #tpu.memory_space<vmem>>, %arg6: memref<64x128xf32, #tpu.memory_space<vmem>>, %arg7: memref<1x128xf32, #tpu.memory_space<vmem>>, %arg8: memref<32x128xf32, #tpu.memory_space<vmem>>, %arg9: memref<1x128xf32, #tpu.memory_space<vmem>>, %arg10: memref<8x8x128xf32, #tpu.memory_space<vmem>>) attributes {dimension_semantics = [#tpu.dimension_semantics<arbitrary>], iteration_bounds = array<i64: 1>, scalar_prefetch = 0 : i64, scratch_operands = 0 : i64, tpu.core_type = #tpu.core_type<tc>, window_params = [{pipeline_mode = #tpu.pipeline_mode<synchronous>, transform_indices = @transform_0, window_bounds = array<i64: 6, 8, 32>}, {pipeline_mode = #tpu.pipeline_mode<synchronous>, transform_indices = @transform_1, window_bounds = array<i64: 8, 8, 32>}, {pipeline_mode = #tpu.pipeline_mode<synchronous>, transform_indices = @transform_2, window_bounds = array<i64: 128, 32>}, {pipeline_mode = #tpu.pipeline_mode<synchronous>, transform_indices = @transform_3, window_bounds = array<i64: 64, 128>}, {pipeline_mode = #tpu.pipeline_mode<synchronous>, transform_indices = @transform_4, window_bounds = array<i64: 1, 128>}, {pipeline_mode = #tpu.pipeline_mode<synchronous>, transform_indices = @transform_5, window_bounds = array<i64: 64, 128>}, {pipeline_mode = #tpu.pipeline_mode<synchronous>, transform_indices = @transform_6, window_bounds = array<i64: 1, 128>}, {pipeline_mode = #tpu.pipeline_mode<synchronous>, transform_indices = @transform_7, window_bounds = array<i64: 32, 128>}, {pipeline_mode = #tpu.pipeline_mode<synchronous>, transform_indices = @transform_8, window_bounds = array<i64: 1, 128>}, {pipeline_mode = #tpu.pipeline_mode<synchronous>, transform_indices = @transform_9, window_bounds = array<i64: 8, 8, 128>}]} {
    %cst = arith.constant 0.000000e+00 : f32
    %0 = vector.broadcast %cst : f32 to vector<8x32xf32>
    %cst_0 = arith.constant 0.000000e+00 : f32
    %1 = vector.broadcast %cst_0 : f32 to vector<8x32xf32>
    %c0 = arith.constant 0 : index
    %c0_1 = arith.constant 0 : index
    %c0_2 = arith.constant 0 : index
    %2 = vector.load %arg1[%c0, %c0_1, %c0_2] : memref<6x8x32xf32, #tpu.memory_space<vmem>>, vector<1x8x32xf32>
    %3 = vector.shape_cast %2 : vector<1x8x32xf32> to vector<8x32xf32>
    %4 = tpu.concatenate %3, %0 in 1 : vector<8x32xf32>, vector<8x32xf32> -> vector<8x64xf32>
    %c0_3 = arith.constant 0 : index
    %c0_4 = arith.constant 0 : index
    %5 = vector.load %arg4[%c0_3, %c0_4] : memref<64x128xf32, #tpu.memory_space<vmem>>, vector<64x128xf32>
    %cst_5 = arith.constant dense<0.000000e+00> : vector<8x128xf32>
    %6 = tpu.matmul %4, %5, %cst_5 {dimension_numbers = #tpu.dot_dimension_numbers<[1], [0], [0], [1], [0, 0, 1, 1], [], []>} : vector<8x64xf32>, vector<64x128xf32>, vector<8x128xf32> -> vector<8x128xf32>
    %c0_6 = arith.constant 0 : index
    %c0_7 = arith.constant 0 : index
    %7 = vector.load %arg5[%c0_6, %c0_7] : memref<1x128xf32, #tpu.memory_space<vmem>>, vector<1x128xf32>
    %8 = vector.broadcast %7 : vector<1x128xf32> to vector<8x128xf32>
    %9 = arith.addf %6, %8 : vector<8x128xf32>
    %10 = arith.negf %9 : vector<8x128xf32>
    %11 = math.exp %10 : vector<8x128xf32>
    %cst_8 = arith.constant 1.000000e+00 : f32
    %12 = vector.broadcast %cst_8 : f32 to vector<8x128xf32>
    %13 = arith.addf %12, %11 : vector<8x128xf32>
    %14 = arith.divf %12, %13 : vector<8x128xf32>
    %15 = math.tanh %9 : vector<8x128xf32>
    %16 = vector.extract_strided_slice %14 {offsets = [0, 0], sizes = [8, 32], strides = [1, 1]} : vector<8x128xf32> to vector<8x32xf32>
    %17 = vector.extract_strided_slice %14 {offsets = [0, 32], sizes = [8, 32], strides = [1, 1]} : vector<8x128xf32> to vector<8x32xf32>
    %18 = vector.extract_strided_slice %15 {offsets = [0, 64], sizes = [8, 32], strides = [1, 1]} : vector<8x128xf32> to vector<8x32xf32>
    %19 = vector.extract_strided_slice %14 {offsets = [0, 96], sizes = [8, 32], strides = [1, 1]} : vector<8x128xf32> to vector<8x32xf32>
    %20 = arith.mulf %17, %1 : vector<8x32xf32>
    %21 = arith.mulf %16, %18 : vector<8x32xf32>
    %22 = arith.addf %20, %21 : vector<8x32xf32>
    %23 = math.tanh %22 : vector<8x32xf32>
    %24 = arith.mulf %19, %23 : vector<8x32xf32>
    %c1 = arith.constant 1 : index
    %c0_9 = arith.constant 0 : index
    %c0_10 = arith.constant 0 : index
    %25 = vector.load %arg1[%c1, %c0_9, %c0_10] : memref<6x8x32xf32, #tpu.memory_space<vmem>>, vector<1x8x32xf32>
    %26 = vector.shape_cast %25 : vector<1x8x32xf32> to vector<8x32xf32>
    %27 = tpu.concatenate %26, %24 in 1 : vector<8x32xf32>, vector<8x32xf32> -> vector<8x64xf32>
    %c0_11 = arith.constant 0 : index
    %c0_12 = arith.constant 0 : index
    %28 = vector.load %arg4[%c0_11, %c0_12] : memref<64x128xf32, #tpu.memory_space<vmem>>, vector<64x128xf32>
    %cst_13 = arith.constant dense<0.000000e+00> : vector<8x128xf32>
    %29 = tpu.matmul %27, %28, %cst_13 {dimension_numbers = #tpu.dot_dimension_numbers<[1], [0], [0], [1], [0, 0, 1, 1], [], []>} : vector<8x64xf32>, vector<64x128xf32>, vector<8x128xf32> -> vector<8x128xf32>
    %c0_14 = arith.constant 0 : index
    %c0_15 = arith.constant 0 : index
    %30 = vector.load %arg5[%c0_14, %c0_15] : memref<1x128xf32, #tpu.memory_space<vmem>>, vector<1x128xf32>
    %31 = vector.broadcast %30 : vector<1x128xf32> to vector<8x128xf32>
    %32 = arith.addf %29, %31 : vector<8x128xf32>
    %33 = arith.negf %32 : vector<8x128xf32>
    %34 = math.exp %33 : vector<8x128xf32>
    %cst_16 = arith.constant 1.000000e+00 : f32
    %35 = vector.broadcast %cst_16 : f32 to vector<8x128xf32>
    %36 = arith.addf %35, %34 : vector<8x128xf32>
    %37 = arith.divf %35, %36 : vector<8x128xf32>
    %38 = math.tanh %32 : vector<8x128xf32>
    %39 = vector.extract_strided_slice %37 {offsets = [0, 0], sizes = [8, 32], strides = [1, 1]} : vector<8x128xf32> to vector<8x32xf32>
    %40 = vector.extract_strided_slice %37 {offsets = [0, 32], sizes = [8, 32], strides = [1, 1]} : vector<8x128xf32> to vector<8x32xf32>
    %41 = vector.extract_strided_slice %38 {offsets = [0, 64], sizes = [8, 32], strides = [1, 1]} : vector<8x128xf32> to vector<8x32xf32>
    %42 = vector.extract_strided_slice %37 {offsets = [0, 96], sizes = [8, 32], strides = [1, 1]} : vector<8x128xf32> to vector<8x32xf32>
    %43 = arith.mulf %40, %22 : vector<8x32xf32>
    %44 = arith.mulf %39, %41 : vector<8x32xf32>
    %45 = arith.addf %43, %44 : vector<8x32xf32>
    %46 = math.tanh %45 : vector<8x32xf32>
    %47 = arith.mulf %42, %46 : vector<8x32xf32>
    %c2 = arith.constant 2 : index
    %c0_17 = arith.constant 0 : index
    %c0_18 = arith.constant 0 : index
    %48 = vector.load %arg1[%c2, %c0_17, %c0_18] : memref<6x8x32xf32, #tpu.memory_space<vmem>>, vector<1x8x32xf32>
    %49 = vector.shape_cast %48 : vector<1x8x32xf32> to vector<8x32xf32>
    %50 = tpu.concatenate %49, %47 in 1 : vector<8x32xf32>, vector<8x32xf32> -> vector<8x64xf32>
    %c0_19 = arith.constant 0 : index
    %c0_20 = arith.constant 0 : index
    %51 = vector.load %arg4[%c0_19, %c0_20] : memref<64x128xf32, #tpu.memory_space<vmem>>, vector<64x128xf32>
    %cst_21 = arith.constant dense<0.000000e+00> : vector<8x128xf32>
    %52 = tpu.matmul %50, %51, %cst_21 {dimension_numbers = #tpu.dot_dimension_numbers<[1], [0], [0], [1], [0, 0, 1, 1], [], []>} : vector<8x64xf32>, vector<64x128xf32>, vector<8x128xf32> -> vector<8x128xf32>
    %c0_22 = arith.constant 0 : index
    %c0_23 = arith.constant 0 : index
    %53 = vector.load %arg5[%c0_22, %c0_23] : memref<1x128xf32, #tpu.memory_space<vmem>>, vector<1x128xf32>
    %54 = vector.broadcast %53 : vector<1x128xf32> to vector<8x128xf32>
    %55 = arith.addf %52, %54 : vector<8x128xf32>
    %56 = arith.negf %55 : vector<8x128xf32>
    %57 = math.exp %56 : vector<8x128xf32>
    %cst_24 = arith.constant 1.000000e+00 : f32
    %58 = vector.broadcast %cst_24 : f32 to vector<8x128xf32>
    %59 = arith.addf %58, %57 : vector<8x128xf32>
    %60 = arith.divf %58, %59 : vector<8x128xf32>
    %61 = math.tanh %55 : vector<8x128xf32>
    %62 = vector.extract_strided_slice %60 {offsets = [0, 0], sizes = [8, 32], strides = [1, 1]} : vector<8x128xf32> to vector<8x32xf32>
    %63 = vector.extract_strided_slice %60 {offsets = [0, 32], sizes = [8, 32], strides = [1, 1]} : vector<8x128xf32> to vector<8x32xf32>
    %64 = vector.extract_strided_slice %61 {offsets = [0, 64], sizes = [8, 32], strides = [1, 1]} : vector<8x128xf32> to vector<8x32xf32>
    %65 = vector.extract_strided_slice %60 {offsets = [0, 96], sizes = [8, 32], strides = [1, 1]} : vector<8x128xf32> to vector<8x32xf32>
    %66 = arith.mulf %63, %45 : vector<8x32xf32>
    %67 = arith.mulf %62, %64 : vector<8x32xf32>
    %68 = arith.addf %66, %67 : vector<8x32xf32>
    %69 = math.tanh %68 : vector<8x32xf32>
    %70 = arith.mulf %65, %69 : vector<8x32xf32>
    %c3 = arith.constant 3 : index
    %c0_25 = arith.constant 0 : index
    %c0_26 = arith.constant 0 : index
    %71 = vector.load %arg1[%c3, %c0_25, %c0_26] : memref<6x8x32xf32, #tpu.memory_space<vmem>>, vector<1x8x32xf32>
    %72 = vector.shape_cast %71 : vector<1x8x32xf32> to vector<8x32xf32>
    %73 = tpu.concatenate %72, %70 in 1 : vector<8x32xf32>, vector<8x32xf32> -> vector<8x64xf32>
    %c0_27 = arith.constant 0 : index
    %c0_28 = arith.constant 0 : index
    %74 = vector.load %arg4[%c0_27, %c0_28] : memref<64x128xf32, #tpu.memory_space<vmem>>, vector<64x128xf32>
    %cst_29 = arith.constant dense<0.000000e+00> : vector<8x128xf32>
    %75 = tpu.matmul %73, %74, %cst_29 {dimension_numbers = #tpu.dot_dimension_numbers<[1], [0], [0], [1], [0, 0, 1, 1], [], []>} : vector<8x64xf32>, vector<64x128xf32>, vector<8x128xf32> -> vector<8x128xf32>
    %c0_30 = arith.constant 0 : index
    %c0_31 = arith.constant 0 : index
    %76 = vector.load %arg5[%c0_30, %c0_31] : memref<1x128xf32, #tpu.memory_space<vmem>>, vector<1x128xf32>
    %77 = vector.broadcast %76 : vector<1x128xf32> to vector<8x128xf32>
    %78 = arith.addf %75, %77 : vector<8x128xf32>
    %79 = arith.negf %78 : vector<8x128xf32>
    %80 = math.exp %79 : vector<8x128xf32>
    %cst_32 = arith.constant 1.000000e+00 : f32
    %81 = vector.broadcast %cst_32 : f32 to vector<8x128xf32>
    %82 = arith.addf %81, %80 : vector<8x128xf32>
    %83 = arith.divf %81, %82 : vector<8x128xf32>
    %84 = math.tanh %78 : vector<8x128xf32>
    %85 = vector.extract_strided_slice %83 {offsets = [0, 0], sizes = [8, 32], strides = [1, 1]} : vector<8x128xf32> to vector<8x32xf32>
    %86 = vector.extract_strided_slice %83 {offsets = [0, 32], sizes = [8, 32], strides = [1, 1]} : vector<8x128xf32> to vector<8x32xf32>
    %87 = vector.extract_strided_slice %84 {offsets = [0, 64], sizes = [8, 32], strides = [1, 1]} : vector<8x128xf32> to vector<8x32xf32>
    %88 = vector.extract_strided_slice %83 {offsets = [0, 96], sizes = [8, 32], strides = [1, 1]} : vector<8x128xf32> to vector<8x32xf32>
    %89 = arith.mulf %86, %68 : vector<8x32xf32>
    %90 = arith.mulf %85, %87 : vector<8x32xf32>
    %91 = arith.addf %89, %90 : vector<8x32xf32>
    %92 = math.tanh %91 : vector<8x32xf32>
    %93 = arith.mulf %88, %92 : vector<8x32xf32>
    %c4 = arith.constant 4 : index
    %c0_33 = arith.constant 0 : index
    %c0_34 = arith.constant 0 : index
    %94 = vector.load %arg1[%c4, %c0_33, %c0_34] : memref<6x8x32xf32, #tpu.memory_space<vmem>>, vector<1x8x32xf32>
    %95 = vector.shape_cast %94 : vector<1x8x32xf32> to vector<8x32xf32>
    %96 = tpu.concatenate %95, %93 in 1 : vector<8x32xf32>, vector<8x32xf32> -> vector<8x64xf32>
    %c0_35 = arith.constant 0 : index
    %c0_36 = arith.constant 0 : index
    %97 = vector.load %arg4[%c0_35, %c0_36] : memref<64x128xf32, #tpu.memory_space<vmem>>, vector<64x128xf32>
    %cst_37 = arith.constant dense<0.000000e+00> : vector<8x128xf32>
    %98 = tpu.matmul %96, %97, %cst_37 {dimension_numbers = #tpu.dot_dimension_numbers<[1], [0], [0], [1], [0, 0, 1, 1], [], []>} : vector<8x64xf32>, vector<64x128xf32>, vector<8x128xf32> -> vector<8x128xf32>
    %c0_38 = arith.constant 0 : index
    %c0_39 = arith.constant 0 : index
    %99 = vector.load %arg5[%c0_38, %c0_39] : memref<1x128xf32, #tpu.memory_space<vmem>>, vector<1x128xf32>
    %100 = vector.broadcast %99 : vector<1x128xf32> to vector<8x128xf32>
    %101 = arith.addf %98, %100 : vector<8x128xf32>
    %102 = arith.negf %101 : vector<8x128xf32>
    %103 = math.exp %102 : vector<8x128xf32>
    %cst_40 = arith.constant 1.000000e+00 : f32
    %104 = vector.broadcast %cst_40 : f32 to vector<8x128xf32>
    %105 = arith.addf %104, %103 : vector<8x128xf32>
    %106 = arith.divf %104, %105 : vector<8x128xf32>
    %107 = math.tanh %101 : vector<8x128xf32>
    %108 = vector.extract_strided_slice %106 {offsets = [0, 0], sizes = [8, 32], strides = [1, 1]} : vector<8x128xf32> to vector<8x32xf32>
    %109 = vector.extract_strided_slice %106 {offsets = [0, 32], sizes = [8, 32], strides = [1, 1]} : vector<8x128xf32> to vector<8x32xf32>
    %110 = vector.extract_strided_slice %107 {offsets = [0, 64], sizes = [8, 32], strides = [1, 1]} : vector<8x128xf32> to vector<8x32xf32>
    %111 = vector.extract_strided_slice %106 {offsets = [0, 96], sizes = [8, 32], strides = [1, 1]} : vector<8x128xf32> to vector<8x32xf32>
    %112 = arith.mulf %109, %91 : vector<8x32xf32>
    %113 = arith.mulf %108, %110 : vector<8x32xf32>
    %114 = arith.addf %112, %113 : vector<8x32xf32>
    %115 = math.tanh %114 : vector<8x32xf32>
    %116 = arith.mulf %111, %115 : vector<8x32xf32>
    %c5 = arith.constant 5 : index
    %c0_41 = arith.constant 0 : index
    %c0_42 = arith.constant 0 : index
    %117 = vector.load %arg1[%c5, %c0_41, %c0_42] : memref<6x8x32xf32, #tpu.memory_space<vmem>>, vector<1x8x32xf32>
    %118 = vector.shape_cast %117 : vector<1x8x32xf32> to vector<8x32xf32>
    %119 = tpu.concatenate %118, %116 in 1 : vector<8x32xf32>, vector<8x32xf32> -> vector<8x64xf32>
    %c0_43 = arith.constant 0 : index
    %c0_44 = arith.constant 0 : index
    %120 = vector.load %arg4[%c0_43, %c0_44] : memref<64x128xf32, #tpu.memory_space<vmem>>, vector<64x128xf32>
    %cst_45 = arith.constant dense<0.000000e+00> : vector<8x128xf32>
    %121 = tpu.matmul %119, %120, %cst_45 {dimension_numbers = #tpu.dot_dimension_numbers<[1], [0], [0], [1], [0, 0, 1, 1], [], []>} : vector<8x64xf32>, vector<64x128xf32>, vector<8x128xf32> -> vector<8x128xf32>
    %c0_46 = arith.constant 0 : index
    %c0_47 = arith.constant 0 : index
    %122 = vector.load %arg5[%c0_46, %c0_47] : memref<1x128xf32, #tpu.memory_space<vmem>>, vector<1x128xf32>
    %123 = vector.broadcast %122 : vector<1x128xf32> to vector<8x128xf32>
    %124 = arith.addf %121, %123 : vector<8x128xf32>
    %125 = arith.negf %124 : vector<8x128xf32>
    %126 = math.exp %125 : vector<8x128xf32>
    %cst_48 = arith.constant 1.000000e+00 : f32
    %127 = vector.broadcast %cst_48 : f32 to vector<8x128xf32>
    %128 = arith.addf %127, %126 : vector<8x128xf32>
    %129 = arith.divf %127, %128 : vector<8x128xf32>
    %130 = math.tanh %124 : vector<8x128xf32>
    %131 = vector.extract_strided_slice %129 {offsets = [0, 0], sizes = [8, 32], strides = [1, 1]} : vector<8x128xf32> to vector<8x32xf32>
    %132 = vector.extract_strided_slice %129 {offsets = [0, 32], sizes = [8, 32], strides = [1, 1]} : vector<8x128xf32> to vector<8x32xf32>
    %133 = vector.extract_strided_slice %130 {offsets = [0, 64], sizes = [8, 32], strides = [1, 1]} : vector<8x128xf32> to vector<8x32xf32>
    %134 = vector.extract_strided_slice %129 {offsets = [0, 96], sizes = [8, 32], strides = [1, 1]} : vector<8x128xf32> to vector<8x32xf32>
    %135 = arith.mulf %132, %114 : vector<8x32xf32>
    %136 = arith.mulf %131, %133 : vector<8x32xf32>
    %137 = arith.addf %135, %136 : vector<8x32xf32>
    %138 = math.tanh %137 : vector<8x32xf32>
    %139 = arith.mulf %134, %138 : vector<8x32xf32>
    %cst_49 = arith.constant 0.000000e+00 : f32
    %140 = vector.broadcast %cst_49 : f32 to vector<8x128xf32>
    %c0_50 = arith.constant 0 : index
    %c0_51 = arith.constant 0 : index
    %c0_52 = arith.constant 0 : index
    %141 = vector.load %arg10[%c0_50, %c0_51, %c0_52] : memref<8x8x128xf32, #tpu.memory_space<vmem>>, vector<1x8x128xf32>
    %142 = vector.shape_cast %141 : vector<1x8x128xf32> to vector<8x128xf32>
    %143 = vector.shape_cast %140 : vector<8x128xf32> to vector<1x8x128xf32>
    tpu.vector_store %arg10[%c0_50, %c0_51, %c0_52], %143 {strides = array<i32>} : memref<8x8x128xf32, #tpu.memory_space<vmem>>, vector<1x8x128xf32>,
    %c0_53 = arith.constant 0 : index
    %c0_54 = arith.constant 0 : index
    %c0_55 = arith.constant 0 : index
    %144 = vector.load %arg2[%c0_53, %c0_54, %c0_55] : memref<8x8x32xf32, #tpu.memory_space<vmem>>, vector<1x8x32xf32>
    %145 = vector.shape_cast %144 : vector<1x8x32xf32> to vector<8x32xf32>
    %146 = tpu.iota {dimensions = array<i32: 1>} : vector<8x128xi32>
    %147 = tpu.concatenate %145, %139 in 1 : vector<8x32xf32>, vector<8x32xf32> -> vector<8x64xf32>
    %c0_56 = arith.constant 0 : index
    %c0_57 = arith.constant 0 : index
    %148 = vector.load %arg6[%c0_56, %c0_57] : memref<64x128xf32, #tpu.memory_space<vmem>>, vector<64x128xf32>
    %cst_58 = arith.constant dense<0.000000e+00> : vector<8x128xf32>
    %149 = tpu.matmul %147, %148, %cst_58 {dimension_numbers = #tpu.dot_dimension_numbers<[1], [0], [0], [1], [0, 0, 1, 1], [], []>} : vector<8x64xf32>, vector<64x128xf32>, vector<8x128xf32> -> vector<8x128xf32>
    %c0_59 = arith.constant 0 : index
    %c0_60 = arith.constant 0 : index
    %150 = vector.load %arg7[%c0_59, %c0_60] : memref<1x128xf32, #tpu.memory_space<vmem>>, vector<1x128xf32>
    %151 = vector.broadcast %150 : vector<1x128xf32> to vector<8x128xf32>
    %152 = arith.addf %149, %151 : vector<8x128xf32>
    %153 = arith.negf %152 : vector<8x128xf32>
    %154 = math.exp %153 : vector<8x128xf32>
    %cst_61 = arith.constant 1.000000e+00 : f32
    %155 = vector.broadcast %cst_61 : f32 to vector<8x128xf32>
    %156 = arith.addf %155, %154 : vector<8x128xf32>
    %157 = arith.divf %155, %156 : vector<8x128xf32>
    %158 = math.tanh %152 : vector<8x128xf32>
    %159 = vector.extract_strided_slice %157 {offsets = [0, 0], sizes = [8, 32], strides = [1, 1]} : vector<8x128xf32> to vector<8x32xf32>
    %160 = vector.extract_strided_slice %157 {offsets = [0, 32], sizes = [8, 32], strides = [1, 1]} : vector<8x128xf32> to vector<8x32xf32>
    %161 = vector.extract_strided_slice %158 {offsets = [0, 64], sizes = [8, 32], strides = [1, 1]} : vector<8x128xf32> to vector<8x32xf32>
    %162 = vector.extract_strided_slice %157 {offsets = [0, 96], sizes = [8, 32], strides = [1, 1]} : vector<8x128xf32> to vector<8x32xf32>
    %163 = arith.mulf %160, %137 : vector<8x32xf32>
    %164 = arith.mulf %159, %161 : vector<8x32xf32>
    %165 = arith.addf %163, %164 : vector<8x32xf32>
    %166 = math.tanh %165 : vector<8x32xf32>
    %167 = arith.mulf %162, %166 : vector<8x32xf32>
    %c0_62 = arith.constant 0 : index
    %c0_63 = arith.constant 0 : index
    %168 = vector.load %arg8[%c0_62, %c0_63] : memref<32x128xf32, #tpu.memory_space<vmem>>, vector<32x128xf32>
    %cst_64 = arith.constant dense<0.000000e+00> : vector<8x128xf32>
    %169 = tpu.matmul %167, %168, %cst_64 {dimension_numbers = #tpu.dot_dimension_numbers<[1], [0], [0], [1], [0, 0, 1, 1], [], []>} : vector<8x32xf32>, vector<32x128xf32>, vector<8x128xf32> -> vector<8x128xf32>
    %c0_65 = arith.constant 0 : index
    %c0_66 = arith.constant 0 : index
    %170 = vector.load %arg9[%c0_65, %c0_66] : memref<1x128xf32, #tpu.memory_space<vmem>>, vector<1x128xf32>
    %171 = vector.broadcast %170 : vector<1x128xf32> to vector<8x128xf32>
    %172 = arith.addf %169, %171 : vector<8x128xf32>
    %c1_67 = arith.constant 1 : index
    %c0_68 = arith.constant 0 : index
    %c0_69 = arith.constant 0 : index
    %173 = vector.load %arg10[%c1_67, %c0_68, %c0_69] : memref<8x8x128xf32, #tpu.memory_space<vmem>>, vector<1x8x128xf32>
    %174 = vector.shape_cast %173 : vector<1x8x128xf32> to vector<8x128xf32>
    %175 = vector.shape_cast %172 : vector<8x128xf32> to vector<1x8x128xf32>
    tpu.vector_store %arg10[%c1_67, %c0_68, %c0_69], %175 {strides = array<i32>} : memref<8x8x128xf32, #tpu.memory_space<vmem>>, vector<1x8x128xf32>,
    %c1_70 = arith.constant 1 : index
    %c0_71 = arith.constant 0 : index
    %c0_72 = arith.constant 0 : index
    %176 = vector.load %arg2[%c1_70, %c0_71, %c0_72] : memref<8x8x32xf32, #tpu.memory_space<vmem>>, vector<1x8x32xf32>
    %177 = vector.shape_cast %176 : vector<1x8x32xf32> to vector<8x32xf32>
    %178 = tpu.concatenate %177, %167 in 1 : vector<8x32xf32>, vector<8x32xf32> -> vector<8x64xf32>
    %c0_73 = arith.constant 0 : index
    %c0_74 = arith.constant 0 : index
    %179 = vector.load %arg6[%c0_73, %c0_74] : memref<64x128xf32, #tpu.memory_space<vmem>>, vector<64x128xf32>
    %cst_75 = arith.constant dense<0.000000e+00> : vector<8x128xf32>
    %180 = tpu.matmul %178, %179, %cst_75 {dimension_numbers = #tpu.dot_dimension_numbers<[1], [0], [0], [1], [0, 0, 1, 1], [], []>} : vector<8x64xf32>, vector<64x128xf32>, vector<8x128xf32> -> vector<8x128xf32>
    %c0_76 = arith.constant 0 : index
    %c0_77 = arith.constant 0 : index
    %181 = vector.load %arg7[%c0_76, %c0_77] : memref<1x128xf32, #tpu.memory_space<vmem>>, vector<1x128xf32>
    %182 = vector.broadcast %181 : vector<1x128xf32> to vector<8x128xf32>
    %183 = arith.addf %180, %182 : vector<8x128xf32>
    %184 = arith.negf %183 : vector<8x128xf32>
    %185 = math.exp %184 : vector<8x128xf32>
    %cst_78 = arith.constant 1.000000e+00 : f32
    %186 = vector.broadcast %cst_78 : f32 to vector<8x128xf32>
    %187 = arith.addf %186, %185 : vector<8x128xf32>
    %188 = arith.divf %186, %187 : vector<8x128xf32>
    %189 = math.tanh %183 : vector<8x128xf32>
    %190 = vector.extract_strided_slice %188 {offsets = [0, 0], sizes = [8, 32], strides = [1, 1]} : vector<8x128xf32> to vector<8x32xf32>
    %191 = vector.extract_strided_slice %188 {offsets = [0, 32], sizes = [8, 32], strides = [1, 1]} : vector<8x128xf32> to vector<8x32xf32>
    %192 = vector.extract_strided_slice %189 {offsets = [0, 64], sizes = [8, 32], strides = [1, 1]} : vector<8x128xf32> to vector<8x32xf32>
    %193 = vector.extract_strided_slice %188 {offsets = [0, 96], sizes = [8, 32], strides = [1, 1]} : vector<8x128xf32> to vector<8x32xf32>
    %194 = arith.mulf %191, %165 : vector<8x32xf32>
    %195 = arith.mulf %190, %192 : vector<8x32xf32>
    %196 = arith.addf %194, %195 : vector<8x32xf32>
    %197 = math.tanh %196 : vector<8x32xf32>
    %198 = arith.mulf %193, %197 : vector<8x32xf32>
    %c0_79 = arith.constant 0 : index
    %c0_80 = arith.constant 0 : index
    %199 = vector.load %arg8[%c0_79, %c0_80] : memref<32x128xf32, #tpu.memory_space<vmem>>, vector<32x128xf32>
    %cst_81 = arith.constant dense<0.000000e+00> : vector<8x128xf32>
    %200 = tpu.matmul %198, %199, %cst_81 {dimension_numbers = #tpu.dot_dimension_numbers<[1], [0], [0], [1], [0, 0, 1, 1], [], []>} : vector<8x32xf32>, vector<32x128xf32>, vector<8x128xf32> -> vector<8x128xf32>
    %c0_82 = arith.constant 0 : index
    %c0_83 = arith.constant 0 : index
    %201 = vector.load %arg9[%c0_82, %c0_83] : memref<1x128xf32, #tpu.memory_space<vmem>>, vector<1x128xf32>
    %202 = vector.broadcast %201 : vector<1x128xf32> to vector<8x128xf32>
    %203 = arith.addf %200, %202 : vector<8x128xf32>
    %c2_84 = arith.constant 2 : index
    %c0_85 = arith.constant 0 : index
    %c0_86 = arith.constant 0 : index
    %204 = vector.load %arg10[%c2_84, %c0_85, %c0_86] : memref<8x8x128xf32, #tpu.memory_space<vmem>>, vector<1x8x128xf32>
    %205 = vector.shape_cast %204 : vector<1x8x128xf32> to vector<8x128xf32>
    %206 = vector.shape_cast %203 : vector<8x128xf32> to vector<1x8x128xf32>
    tpu.vector_store %arg10[%c2_84, %c0_85, %c0_86], %206 {strides = array<i32>} : memref<8x8x128xf32, #tpu.memory_space<vmem>>, vector<1x8x128xf32>,
    %cst_87 = arith.constant dense<0xFF800000> : vector<8xf32>
    %207 = vector.multi_reduction <maximumf>, %203, %cst_87 [1] : vector<8x128xf32> to vector<8xf32>
    %208 = vector.shape_cast %207 : vector<8xf32> to vector<8x1xf32>
    %209 = vector.broadcast %208 : vector<8x1xf32> to vector<8x128xf32>
    %210 = arith.cmpf oeq, %203, %209 : vector<8x128xf32>
    %c128_i32 = arith.constant 128 : i32
    %211 = vector.broadcast %c128_i32 : i32 to vector<8x128xi32>
    %212 = arith.select %210, %146, %211 : vector<8x128xi1>, vector<8x128xi32>
    %cst_88 = arith.constant dense<2147483647> : vector<8xi32>
    %213 = vector.multi_reduction <minsi>, %212, %cst_88 [1] : vector<8x128xi32> to vector<8xi32>
    %214 = vector.shape_cast %213 : vector<8xi32> to vector<8x1xi32>
    %215 = vector.broadcast %214 : vector<8x1xi32> to vector<8x128xi32>
    %216 = arith.cmpi eq, %146, %215 : vector<8x128xi32>
    %217 = arith.extui %216 : vector<8x128xi1> to vector<8x128xi32>
    %218 = arith.sitofp %217 : vector<8x128xi32> to vector<8x128xf32>
    %c0_89 = arith.constant 0 : index
    %c0_90 = arith.constant 0 : index
    %219 = vector.load %arg3[%c0_89, %c0_90] : memref<128x32xf32, #tpu.memory_space<vmem>>, vector<128x32xf32>
    %cst_91 = arith.constant dense<0.000000e+00> : vector<8x32xf32>
    %220 = tpu.matmul %218, %219, %cst_91 {dimension_numbers = #tpu.dot_dimension_numbers<[1], [0], [0], [1], [0, 0, 1, 1], [], []>} : vector<8x128xf32>, vector<128x32xf32>, vector<8x32xf32> -> vector<8x32xf32>
    %221 = tpu.concatenate %220, %198 in 1 : vector<8x32xf32>, vector<8x32xf32> -> vector<8x64xf32>
    %c0_92 = arith.constant 0 : index
    %c0_93 = arith.constant 0 : index
    %222 = vector.load %arg6[%c0_92, %c0_93] : memref<64x128xf32, #tpu.memory_space<vmem>>, vector<64x128xf32>
    %cst_94 = arith.constant dense<0.000000e+00> : vector<8x128xf32>
    %223 = tpu.matmul %221, %222, %cst_94 {dimension_numbers = #tpu.dot_dimension_numbers<[1], [0], [0], [1], [0, 0, 1, 1], [], []>} : vector<8x64xf32>, vector<64x128xf32>, vector<8x128xf32> -> vector<8x128xf32>
    %c0_95 = arith.constant 0 : index
    %c0_96 = arith.constant 0 : index
    %224 = vector.load %arg7[%c0_95, %c0_96] : memref<1x128xf32, #tpu.memory_space<vmem>>, vector<1x128xf32>
    %225 = vector.broadcast %224 : vector<1x128xf32> to vector<8x128xf32>
    %226 = arith.addf %223, %225 : vector<8x128xf32>
    %227 = arith.negf %226 : vector<8x128xf32>
    %228 = math.exp %227 : vector<8x128xf32>
    %cst_97 = arith.constant 1.000000e+00 : f32
    %229 = vector.broadcast %cst_97 : f32 to vector<8x128xf32>
    %230 = arith.addf %229, %228 : vector<8x128xf32>
    %231 = arith.divf %229, %230 : vector<8x128xf32>
    %232 = math.tanh %226 : vector<8x128xf32>
    %233 = vector.extract_strided_slice %231 {offsets = [0, 0], sizes = [8, 32], strides = [1, 1]} : vector<8x128xf32> to vector<8x32xf32>
    %234 = vector.extract_strided_slice %231 {offsets = [0, 32], sizes = [8, 32], strides = [1, 1]} : vector<8x128xf32> to vector<8x32xf32>
    %235 = vector.extract_strided_slice %232 {offsets = [0, 64], sizes = [8, 32], strides = [1, 1]} : vector<8x128xf32> to vector<8x32xf32>
    %236 = vector.extract_strided_slice %231 {offsets = [0, 96], sizes = [8, 32], strides = [1, 1]} : vector<8x128xf32> to vector<8x32xf32>
    %237 = arith.mulf %234, %196 : vector<8x32xf32>
    %238 = arith.mulf %233, %235 : vector<8x32xf32>
    %239 = arith.addf %237, %238 : vector<8x32xf32>
    %240 = math.tanh %239 : vector<8x32xf32>
    %241 = arith.mulf %236, %240 : vector<8x32xf32>
    %c0_98 = arith.constant 0 : index
    %c0_99 = arith.constant 0 : index
    %242 = vector.load %arg8[%c0_98, %c0_99] : memref<32x128xf32, #tpu.memory_space<vmem>>, vector<32x128xf32>
    %cst_100 = arith.constant dense<0.000000e+00> : vector<8x128xf32>
    %243 = tpu.matmul %241, %242, %cst_100 {dimension_numbers = #tpu.dot_dimension_numbers<[1], [0], [0], [1], [0, 0, 1, 1], [], []>} : vector<8x32xf32>, vector<32x128xf32>, vector<8x128xf32> -> vector<8x128xf32>
    %c0_101 = arith.constant 0 : index
    %c0_102 = arith.constant 0 : index
    %244 = vector.load %arg9[%c0_101, %c0_102] : memref<1x128xf32, #tpu.memory_space<vmem>>, vector<1x128xf32>
    %245 = vector.broadcast %244 : vector<1x128xf32> to vector<8x128xf32>
    %246 = arith.addf %243, %245 : vector<8x128xf32>
    %c3_103 = arith.constant 3 : index
    %c0_104 = arith.constant 0 : index
    %c0_105 = arith.constant 0 : index
    %247 = vector.load %arg10[%c3_103, %c0_104, %c0_105] : memref<8x8x128xf32, #tpu.memory_space<vmem>>, vector<1x8x128xf32>
    %248 = vector.shape_cast %247 : vector<1x8x128xf32> to vector<8x128xf32>
    %249 = vector.shape_cast %246 : vector<8x128xf32> to vector<1x8x128xf32>
    tpu.vector_store %arg10[%c3_103, %c0_104, %c0_105], %249 {strides = array<i32>} : memref<8x8x128xf32, #tpu.memory_space<vmem>>, vector<1x8x128xf32>,
    %c3_106 = arith.constant 3 : index
    %c0_107 = arith.constant 0 : index
    %c0_108 = arith.constant 0 : index
    %250 = vector.load %arg2[%c3_106, %c0_107, %c0_108] : memref<8x8x32xf32, #tpu.memory_space<vmem>>, vector<1x8x32xf32>
    %251 = vector.shape_cast %250 : vector<1x8x32xf32> to vector<8x32xf32>
    %252 = tpu.concatenate %251, %241 in 1 : vector<8x32xf32>, vector<8x32xf32> -> vector<8x64xf32>
    %c0_109 = arith.constant 0 : index
    %c0_110 = arith.constant 0 : index
    %253 = vector.load %arg6[%c0_109, %c0_110] : memref<64x128xf32, #tpu.memory_space<vmem>>, vector<64x128xf32>
    %cst_111 = arith.constant dense<0.000000e+00> : vector<8x128xf32>
    %254 = tpu.matmul %252, %253, %cst_111 {dimension_numbers = #tpu.dot_dimension_numbers<[1], [0], [0], [1], [0, 0, 1, 1], [], []>} : vector<8x64xf32>, vector<64x128xf32>, vector<8x128xf32> -> vector<8x128xf32>
    %c0_112 = arith.constant 0 : index
    %c0_113 = arith.constant 0 : index
    %255 = vector.load %arg7[%c0_112, %c0_113] : memref<1x128xf32, #tpu.memory_space<vmem>>, vector<1x128xf32>
    %256 = vector.broadcast %255 : vector<1x128xf32> to vector<8x128xf32>
    %257 = arith.addf %254, %256 : vector<8x128xf32>
    %258 = arith.negf %257 : vector<8x128xf32>
    %259 = math.exp %258 : vector<8x128xf32>
    %cst_114 = arith.constant 1.000000e+00 : f32
    %260 = vector.broadcast %cst_114 : f32 to vector<8x128xf32>
    %261 = arith.addf %260, %259 : vector<8x128xf32>
    %262 = arith.divf %260, %261 : vector<8x128xf32>
    %263 = math.tanh %257 : vector<8x128xf32>
    %264 = vector.extract_strided_slice %262 {offsets = [0, 0], sizes = [8, 32], strides = [1, 1]} : vector<8x128xf32> to vector<8x32xf32>
    %265 = vector.extract_strided_slice %262 {offsets = [0, 32], sizes = [8, 32], strides = [1, 1]} : vector<8x128xf32> to vector<8x32xf32>
    %266 = vector.extract_strided_slice %263 {offsets = [0, 64], sizes = [8, 32], strides = [1, 1]} : vector<8x128xf32> to vector<8x32xf32>
    %267 = vector.extract_strided_slice %262 {offsets = [0, 96], sizes = [8, 32], strides = [1, 1]} : vector<8x128xf32> to vector<8x32xf32>
    %268 = arith.mulf %265, %239 : vector<8x32xf32>
    %269 = arith.mulf %264, %266 : vector<8x32xf32>
    %270 = arith.addf %268, %269 : vector<8x32xf32>
    %271 = math.tanh %270 : vector<8x32xf32>
    %272 = arith.mulf %267, %271 : vector<8x32xf32>
    %c0_115 = arith.constant 0 : index
    %c0_116 = arith.constant 0 : index
    %273 = vector.load %arg8[%c0_115, %c0_116] : memref<32x128xf32, #tpu.memory_space<vmem>>, vector<32x128xf32>
    %cst_117 = arith.constant dense<0.000000e+00> : vector<8x128xf32>
    %274 = tpu.matmul %272, %273, %cst_117 {dimension_numbers = #tpu.dot_dimension_numbers<[1], [0], [0], [1], [0, 0, 1, 1], [], []>} : vector<8x32xf32>, vector<32x128xf32>, vector<8x128xf32> -> vector<8x128xf32>
    %c0_118 = arith.constant 0 : index
    %c0_119 = arith.constant 0 : index
    %275 = vector.load %arg9[%c0_118, %c0_119] : memref<1x128xf32, #tpu.memory_space<vmem>>, vector<1x128xf32>
    %276 = vector.broadcast %275 : vector<1x128xf32> to vector<8x128xf32>
    %277 = arith.addf %274, %276 : vector<8x128xf32>
    %c4_120 = arith.constant 4 : index
    %c0_121 = arith.constant 0 : index
    %c0_122 = arith.constant 0 : index
    %278 = vector.load %arg10[%c4_120, %c0_121, %c0_122] : memref<8x8x128xf32, #tpu.memory_space<vmem>>, vector<1x8x128xf32>
    %279 = vector.shape_cast %278 : vector<1x8x128xf32> to vector<8x128xf32>
    %280 = vector.shape_cast %277 : vector<8x128xf32> to vector<1x8x128xf32>
    tpu.vector_store %arg10[%c4_120, %c0_121, %c0_122], %280 {strides = array<i32>} : memref<8x8x128xf32, #tpu.memory_space<vmem>>, vector<1x8x128xf32>,
    %cst_123 = arith.constant dense<0xFF800000> : vector<8xf32>
    %281 = vector.multi_reduction <maximumf>, %277, %cst_123 [1] : vector<8x128xf32> to vector<8xf32>
    %282 = vector.shape_cast %281 : vector<8xf32> to vector<8x1xf32>
    %283 = vector.broadcast %282 : vector<8x1xf32> to vector<8x128xf32>
    %284 = arith.cmpf oeq, %277, %283 : vector<8x128xf32>
    %c128_i32_124 = arith.constant 128 : i32
    %285 = vector.broadcast %c128_i32_124 : i32 to vector<8x128xi32>
    %286 = arith.select %284, %146, %285 : vector<8x128xi1>, vector<8x128xi32>
    %cst_125 = arith.constant dense<2147483647> : vector<8xi32>
    %287 = vector.multi_reduction <minsi>, %286, %cst_125 [1] : vector<8x128xi32> to vector<8xi32>
    %288 = vector.shape_cast %287 : vector<8xi32> to vector<8x1xi32>
    %289 = vector.broadcast %288 : vector<8x1xi32> to vector<8x128xi32>
    %290 = arith.cmpi eq, %146, %289 : vector<8x128xi32>
    %291 = arith.extui %290 : vector<8x128xi1> to vector<8x128xi32>
    %292 = arith.sitofp %291 : vector<8x128xi32> to vector<8x128xf32>
    %c0_126 = arith.constant 0 : index
    %c0_127 = arith.constant 0 : index
    %293 = vector.load %arg3[%c0_126, %c0_127] : memref<128x32xf32, #tpu.memory_space<vmem>>, vector<128x32xf32>
    %cst_128 = arith.constant dense<0.000000e+00> : vector<8x32xf32>
    %294 = tpu.matmul %292, %293, %cst_128 {dimension_numbers = #tpu.dot_dimension_numbers<[1], [0], [0], [1], [0, 0, 1, 1], [], []>} : vector<8x128xf32>, vector<128x32xf32>, vector<8x32xf32> -> vector<8x32xf32>
    %295 = tpu.concatenate %294, %272 in 1 : vector<8x32xf32>, vector<8x32xf32> -> vector<8x64xf32>
    %c0_129 = arith.constant 0 : index
    %c0_130 = arith.constant 0 : index
    %296 = vector.load %arg6[%c0_129, %c0_130] : memref<64x128xf32, #tpu.memory_space<vmem>>, vector<64x128xf32>
    %cst_131 = arith.constant dense<0.000000e+00> : vector<8x128xf32>
    %297 = tpu.matmul %295, %296, %cst_131 {dimension_numbers = #tpu.dot_dimension_numbers<[1], [0], [0], [1], [0, 0, 1, 1], [], []>} : vector<8x64xf32>, vector<64x128xf32>, vector<8x128xf32> -> vector<8x128xf32>
    %c0_132 = arith.constant 0 : index
    %c0_133 = arith.constant 0 : index
    %298 = vector.load %arg7[%c0_132, %c0_133] : memref<1x128xf32, #tpu.memory_space<vmem>>, vector<1x128xf32>
    %299 = vector.broadcast %298 : vector<1x128xf32> to vector<8x128xf32>
    %300 = arith.addf %297, %299 : vector<8x128xf32>
    %301 = arith.negf %300 : vector<8x128xf32>
    %302 = math.exp %301 : vector<8x128xf32>
    %cst_134 = arith.constant 1.000000e+00 : f32
    %303 = vector.broadcast %cst_134 : f32 to vector<8x128xf32>
    %304 = arith.addf %303, %302 : vector<8x128xf32>
    %305 = arith.divf %303, %304 : vector<8x128xf32>
    %306 = math.tanh %300 : vector<8x128xf32>
    %307 = vector.extract_strided_slice %305 {offsets = [0, 0], sizes = [8, 32], strides = [1, 1]} : vector<8x128xf32> to vector<8x32xf32>
    %308 = vector.extract_strided_slice %305 {offsets = [0, 32], sizes = [8, 32], strides = [1, 1]} : vector<8x128xf32> to vector<8x32xf32>
    %309 = vector.extract_strided_slice %306 {offsets = [0, 64], sizes = [8, 32], strides = [1, 1]} : vector<8x128xf32> to vector<8x32xf32>
    %310 = vector.extract_strided_slice %305 {offsets = [0, 96], sizes = [8, 32], strides = [1, 1]} : vector<8x128xf32> to vector<8x32xf32>
    %311 = arith.mulf %308, %270 : vector<8x32xf32>
    %312 = arith.mulf %307, %309 : vector<8x32xf32>
    %313 = arith.addf %311, %312 : vector<8x32xf32>
    %314 = math.tanh %313 : vector<8x32xf32>
    %315 = arith.mulf %310, %314 : vector<8x32xf32>
    %c0_135 = arith.constant 0 : index
    %c0_136 = arith.constant 0 : index
    %316 = vector.load %arg8[%c0_135, %c0_136] : memref<32x128xf32, #tpu.memory_space<vmem>>, vector<32x128xf32>
    %cst_137 = arith.constant dense<0.000000e+00> : vector<8x128xf32>
    %317 = tpu.matmul %315, %316, %cst_137 {dimension_numbers = #tpu.dot_dimension_numbers<[1], [0], [0], [1], [0, 0, 1, 1], [], []>} : vector<8x32xf32>, vector<32x128xf32>, vector<8x128xf32> -> vector<8x128xf32>
    %c0_138 = arith.constant 0 : index
    %c0_139 = arith.constant 0 : index
    %318 = vector.load %arg9[%c0_138, %c0_139] : memref<1x128xf32, #tpu.memory_space<vmem>>, vector<1x128xf32>
    %319 = vector.broadcast %318 : vector<1x128xf32> to vector<8x128xf32>
    %320 = arith.addf %317, %319 : vector<8x128xf32>
    %c5_140 = arith.constant 5 : index
    %c0_141 = arith.constant 0 : index
    %c0_142 = arith.constant 0 : index
    %321 = vector.load %arg10[%c5_140, %c0_141, %c0_142] : memref<8x8x128xf32, #tpu.memory_space<vmem>>, vector<1x8x128xf32>
    %322 = vector.shape_cast %321 : vector<1x8x128xf32> to vector<8x128xf32>
    %323 = vector.shape_cast %320 : vector<8x128xf32> to vector<1x8x128xf32>
    tpu.vector_store %arg10[%c5_140, %c0_141, %c0_142], %323 {strides = array<i32>} : memref<8x8x128xf32, #tpu.memory_space<vmem>>, vector<1x8x128xf32>,
    %c5_143 = arith.constant 5 : index
    %c0_144 = arith.constant 0 : index
    %c0_145 = arith.constant 0 : index
    %324 = vector.load %arg2[%c5_143, %c0_144, %c0_145] : memref<8x8x32xf32, #tpu.memory_space<vmem>>, vector<1x8x32xf32>
    %325 = vector.shape_cast %324 : vector<1x8x32xf32> to vector<8x32xf32>
    %326 = tpu.concatenate %325, %315 in 1 : vector<8x32xf32>, vector<8x32xf32> -> vector<8x64xf32>
    %c0_146 = arith.constant 0 : index
    %c0_147 = arith.constant 0 : index
    %327 = vector.load %arg6[%c0_146, %c0_147] : memref<64x128xf32, #tpu.memory_space<vmem>>, vector<64x128xf32>
    %cst_148 = arith.constant dense<0.000000e+00> : vector<8x128xf32>
    %328 = tpu.matmul %326, %327, %cst_148 {dimension_numbers = #tpu.dot_dimension_numbers<[1], [0], [0], [1], [0, 0, 1, 1], [], []>} : vector<8x64xf32>, vector<64x128xf32>, vector<8x128xf32> -> vector<8x128xf32>
    %c0_149 = arith.constant 0 : index
    %c0_150 = arith.constant 0 : index
    %329 = vector.load %arg7[%c0_149, %c0_150] : memref<1x128xf32, #tpu.memory_space<vmem>>, vector<1x128xf32>
    %330 = vector.broadcast %329 : vector<1x128xf32> to vector<8x128xf32>
    %331 = arith.addf %328, %330 : vector<8x128xf32>
    %332 = arith.negf %331 : vector<8x128xf32>
    %333 = math.exp %332 : vector<8x128xf32>
    %cst_151 = arith.constant 1.000000e+00 : f32
    %334 = vector.broadcast %cst_151 : f32 to vector<8x128xf32>
    %335 = arith.addf %334, %333 : vector<8x128xf32>
    %336 = arith.divf %334, %335 : vector<8x128xf32>
    %337 = math.tanh %331 : vector<8x128xf32>
    %338 = vector.extract_strided_slice %336 {offsets = [0, 0], sizes = [8, 32], strides = [1, 1]} : vector<8x128xf32> to vector<8x32xf32>
    %339 = vector.extract_strided_slice %336 {offsets = [0, 32], sizes = [8, 32], strides = [1, 1]} : vector<8x128xf32> to vector<8x32xf32>
    %340 = vector.extract_strided_slice %337 {offsets = [0, 64], sizes = [8, 32], strides = [1, 1]} : vector<8x128xf32> to vector<8x32xf32>
    %341 = vector.extract_strided_slice %336 {offsets = [0, 96], sizes = [8, 32], strides = [1, 1]} : vector<8x128xf32> to vector<8x32xf32>
    %342 = arith.mulf %339, %313 : vector<8x32xf32>
    %343 = arith.mulf %338, %340 : vector<8x32xf32>
    %344 = arith.addf %342, %343 : vector<8x32xf32>
    %345 = math.tanh %344 : vector<8x32xf32>
    %346 = arith.mulf %341, %345 : vector<8x32xf32>
    %c0_152 = arith.constant 0 : index
    %c0_153 = arith.constant 0 : index
    %347 = vector.load %arg8[%c0_152, %c0_153] : memref<32x128xf32, #tpu.memory_space<vmem>>, vector<32x128xf32>
    %cst_154 = arith.constant dense<0.000000e+00> : vector<8x128xf32>
    %348 = tpu.matmul %346, %347, %cst_154 {dimension_numbers = #tpu.dot_dimension_numbers<[1], [0], [0], [1], [0, 0, 1, 1], [], []>} : vector<8x32xf32>, vector<32x128xf32>, vector<8x128xf32> -> vector<8x128xf32>
    %c0_155 = arith.constant 0 : index
    %c0_156 = arith.constant 0 : index
    %349 = vector.load %arg9[%c0_155, %c0_156] : memref<1x128xf32, #tpu.memory_space<vmem>>, vector<1x128xf32>
    %350 = vector.broadcast %349 : vector<1x128xf32> to vector<8x128xf32>
    %351 = arith.addf %348, %350 : vector<8x128xf32>
    %c6 = arith.constant 6 : index
    %c0_157 = arith.constant 0 : index
    %c0_158 = arith.constant 0 : index
    %352 = vector.load %arg10[%c6, %c0_157, %c0_158] : memref<8x8x128xf32, #tpu.memory_space<vmem>>, vector<1x8x128xf32>
    %353 = vector.shape_cast %352 : vector<1x8x128xf32> to vector<8x128xf32>
    %354 = vector.shape_cast %351 : vector<8x128xf32> to vector<1x8x128xf32>
    tpu.vector_store %arg10[%c6, %c0_157, %c0_158], %354 {strides = array<i32>} : memref<8x8x128xf32, #tpu.memory_space<vmem>>, vector<1x8x128xf32>,
    %cst_159 = arith.constant dense<0xFF800000> : vector<8xf32>
    %355 = vector.multi_reduction <maximumf>, %351, %cst_159 [1] : vector<8x128xf32> to vector<8xf32>
    %356 = vector.shape_cast %355 : vector<8xf32> to vector<8x1xf32>
    %357 = vector.broadcast %356 : vector<8x1xf32> to vector<8x128xf32>
    %358 = arith.cmpf oeq, %351, %357 : vector<8x128xf32>
    %c128_i32_160 = arith.constant 128 : i32
    %359 = vector.broadcast %c128_i32_160 : i32 to vector<8x128xi32>
    %360 = arith.select %358, %146, %359 : vector<8x128xi1>, vector<8x128xi32>
    %cst_161 = arith.constant dense<2147483647> : vector<8xi32>
    %361 = vector.multi_reduction <minsi>, %360, %cst_161 [1] : vector<8x128xi32> to vector<8xi32>
    %362 = vector.shape_cast %361 : vector<8xi32> to vector<8x1xi32>
    %363 = vector.broadcast %362 : vector<8x1xi32> to vector<8x128xi32>
    %364 = arith.cmpi eq, %146, %363 : vector<8x128xi32>
    %365 = arith.extui %364 : vector<8x128xi1> to vector<8x128xi32>
    %366 = arith.sitofp %365 : vector<8x128xi32> to vector<8x128xf32>
    %c0_162 = arith.constant 0 : index
    %c0_163 = arith.constant 0 : index
    %367 = vector.load %arg3[%c0_162, %c0_163] : memref<128x32xf32, #tpu.memory_space<vmem>>, vector<128x32xf32>
    %cst_164 = arith.constant dense<0.000000e+00> : vector<8x32xf32>
    %368 = tpu.matmul %366, %367, %cst_164 {dimension_numbers = #tpu.dot_dimension_numbers<[1], [0], [0], [1], [0, 0, 1, 1], [], []>} : vector<8x128xf32>, vector<128x32xf32>, vector<8x32xf32> -> vector<8x32xf32>
    %369 = tpu.concatenate %368, %346 in 1 : vector<8x32xf32>, vector<8x32xf32> -> vector<8x64xf32>
    %c0_165 = arith.constant 0 : index
    %c0_166 = arith.constant 0 : index
    %370 = vector.load %arg6[%c0_165, %c0_166] : memref<64x128xf32, #tpu.memory_space<vmem>>, vector<64x128xf32>
    %cst_167 = arith.constant dense<0.000000e+00> : vector<8x128xf32>
    %371 = tpu.matmul %369, %370, %cst_167 {dimension_numbers = #tpu.dot_dimension_numbers<[1], [0], [0], [1], [0, 0, 1, 1], [], []>} : vector<8x64xf32>, vector<64x128xf32>, vector<8x128xf32> -> vector<8x128xf32>
    %c0_168 = arith.constant 0 : index
    %c0_169 = arith.constant 0 : index
    %372 = vector.load %arg7[%c0_168, %c0_169] : memref<1x128xf32, #tpu.memory_space<vmem>>, vector<1x128xf32>
    %373 = vector.broadcast %372 : vector<1x128xf32> to vector<8x128xf32>
    %374 = arith.addf %371, %373 : vector<8x128xf32>
    %375 = arith.negf %374 : vector<8x128xf32>
    %376 = math.exp %375 : vector<8x128xf32>
    %cst_170 = arith.constant 1.000000e+00 : f32
    %377 = vector.broadcast %cst_170 : f32 to vector<8x128xf32>
    %378 = arith.addf %377, %376 : vector<8x128xf32>
    %379 = arith.divf %377, %378 : vector<8x128xf32>
    %380 = math.tanh %374 : vector<8x128xf32>
    %381 = vector.extract_strided_slice %379 {offsets = [0, 0], sizes = [8, 32], strides = [1, 1]} : vector<8x128xf32> to vector<8x32xf32>
    %382 = vector.extract_strided_slice %379 {offsets = [0, 32], sizes = [8, 32], strides = [1, 1]} : vector<8x128xf32> to vector<8x32xf32>
    %383 = vector.extract_strided_slice %380 {offsets = [0, 64], sizes = [8, 32], strides = [1, 1]} : vector<8x128xf32> to vector<8x32xf32>
    %384 = vector.extract_strided_slice %379 {offsets = [0, 96], sizes = [8, 32], strides = [1, 1]} : vector<8x128xf32> to vector<8x32xf32>
    %385 = arith.mulf %382, %344 : vector<8x32xf32>
    %386 = arith.mulf %381, %383 : vector<8x32xf32>
    %387 = arith.addf %385, %386 : vector<8x32xf32>
    %388 = math.tanh %387 : vector<8x32xf32>
    %389 = arith.mulf %384, %388 : vector<8x32xf32>
    %c0_171 = arith.constant 0 : index
    %c0_172 = arith.constant 0 : index
    %390 = vector.load %arg8[%c0_171, %c0_172] : memref<32x128xf32, #tpu.memory_space<vmem>>, vector<32x128xf32>
    %cst_173 = arith.constant dense<0.000000e+00> : vector<8x128xf32>
    %391 = tpu.matmul %389, %390, %cst_173 {dimension_numbers = #tpu.dot_dimension_numbers<[1], [0], [0], [1], [0, 0, 1, 1], [], []>} : vector<8x32xf32>, vector<32x128xf32>, vector<8x128xf32> -> vector<8x128xf32>
    %c0_174 = arith.constant 0 : index
    %c0_175 = arith.constant 0 : index
    %392 = vector.load %arg9[%c0_174, %c0_175] : memref<1x128xf32, #tpu.memory_space<vmem>>, vector<1x128xf32>
    %393 = vector.broadcast %392 : vector<1x128xf32> to vector<8x128xf32>
    %394 = arith.addf %391, %393 : vector<8x128xf32>
    %c7 = arith.constant 7 : index
    %c0_176 = arith.constant 0 : index
    %c0_177 = arith.constant 0 : index
    %395 = vector.load %arg10[%c7, %c0_176, %c0_177] : memref<8x8x128xf32, #tpu.memory_space<vmem>>, vector<1x8x128xf32>
    %396 = vector.shape_cast %395 : vector<1x8x128xf32> to vector<8x128xf32>
    %397 = vector.shape_cast %394 : vector<8x128xf32> to vector<1x8x128xf32>
    tpu.vector_store %arg10[%c7, %c0_176, %c0_177], %397 {strides = array<i32>} : memref<8x8x128xf32, #tpu.memory_space<vmem>>, vector<1x8x128xf32>,
    return
  }
  func.func @transform_0(%arg0: i32) -> (i32, i32, i32) {
    %c0_i32 = arith.constant 0 : i32
    %c0_i32_0 = arith.constant 0 : i32
    %c0_i32_1 = arith.constant 0 : i32
    %c0_i32_2 = arith.constant 0 : i32
    return %c0_i32, %c0_i32_0, %c0_i32_1 : i32, i32, i32
  }
  func.func @transform_1(%arg0: i32) -> (i32, i32, i32) {
    %c0_i32 = arith.constant 0 : i32
    %c0_i32_0 = arith.constant 0 : i32
    %c0_i32_1 = arith.constant 0 : i32
    %c0_i32_2 = arith.constant 0 : i32
    return %c0_i32, %c0_i32_0, %c0_i32_1 : i32, i32, i32
  }
  func.func @transform_2(%arg0: i32) -> (i32, i32) {
    %c0_i32 = arith.constant 0 : i32
    %c0_i32_0 = arith.constant 0 : i32
    %c0_i32_1 = arith.constant 0 : i32
    return %c0_i32, %c0_i32_0 : i32, i32
  }
  func.func @transform_3(%arg0: i32) -> (i32, i32) {
    %c0_i32 = arith.constant 0 : i32
    %c0_i32_0 = arith.constant 0 : i32
    %c0_i32_1 = arith.constant 0 : i32
    return %c0_i32, %c0_i32_0 : i32, i32
  }
  func.func @transform_4(%arg0: i32) -> (i32, i32) {
    %c0_i32 = arith.constant 0 : i32
    %c0_i32_0 = arith.constant 0 : i32
    %c0_i32_1 = arith.constant 0 : i32
    return %c0_i32, %c0_i32_0 : i32, i32
  }
  func.func @transform_5(%arg0: i32) -> (i32, i32) {
    %c0_i32 = arith.constant 0 : i32
    %c0_i32_0 = arith.constant 0 : i32
    %c0_i32_1 = arith.constant 0 : i32
    return %c0_i32, %c0_i32_0 : i32, i32
  }
  func.func @transform_6(%arg0: i32) -> (i32, i32) {
    %c0_i32 = arith.constant 0 : i32
    %c0_i32_0 = arith.constant 0 : i32
    %c0_i32_1 = arith.constant 0 : i32
    return %c0_i32, %c0_i32_0 : i32, i32
  }
  func.func @transform_7(%arg0: i32) -> (i32, i32) {
    %c0_i32 = arith.constant 0 : i32
    %c0_i32_0 = arith.constant 0 : i32
    %c0_i32_1 = arith.constant 0 : i32
    return %c0_i32, %c0_i32_0 : i32, i32
  }
  func.func @transform_8(%arg0: i32) -> (i32, i32) {
    %c0_i32 = arith.constant 0 : i32
    %c0_i32_0 = arith.constant 0 : i32
    %c0_i32_1 = arith.constant 0 : i32
    return %c0_i32, %c0_i32_0 : i32, i32
  }
  func.func @transform_9(%arg0: i32) -> (i32, i32, i32) {
    %c0_i32 = arith.constant 0 : i32
    %c0_i32_0 = arith.constant 0 : i32
    %c0_i32_1 = arith.constant 0 : i32
    %c0_i32_2 = arith.constant 0 : i32
    return %c0_i32, %c0_i32_0, %c0_i32_1 : i32, i32, i32
  }
}

</mosaic_0001>

<llo_original>
// kernel: seq2seq_forward.1
$region0: #{seq2seq_forward.1}
  #allocation0 [shape = 'u32[]', space=smem, size = 0x4, offset = 0x4, fixed_abs, tag = 'smem constant byte address 0x4 - core index']
  #allocation1 [shape = 'u32[144,128]{1,0:T(1,128)}', space=vmem, size = 0x12000, scoped, tag = 'internal scratch']
  %s0 = inlined_call_operand.vmem [shape: f32[6,8,32], index: 0, kind: input, shape index: {}]
  %s1 = inlined_call_operand.vmem [shape: f32[8,8,32], index: 1, kind: input, shape index: {}]
  %s2 = inlined_call_operand.vmem [shape: f32[128,32], index: 2, kind: input, shape index: {}]
  %s3 = inlined_call_operand.vmem [shape: f32[64,128], index: 3, kind: input, shape index: {}]
  %s4 = inlined_call_operand.vmem [shape: f32[1,128], index: 4, kind: input, shape index: {}]
  %s5 = inlined_call_operand.vmem [shape: f32[64,128], index: 5, kind: input, shape index: {}]
  %s6 = inlined_call_operand.vmem [shape: f32[1,128], index: 6, kind: input, shape index: {}]
  %s7 = inlined_call_operand.vmem [shape: f32[32,128], index: 7, kind: input, shape index: {}]
  %s8 = inlined_call_operand.vmem [shape: f32[1,128], index: 8, kind: input, shape index: {}]
  %s9 = inlined_call_operand.hbm [shape: f32[8,8,128], index: 9, kind: output, shape index: {}]
  %s10 = sld [smem:[#allocation0]]
  $region46: #{seq2seq_forward.1} parent=0
    _
  %s12 = ssub.s32 1, %s10
  %s13 = scalar_select 0, %s12, %s10
  $region1: #{seq2seq_forward.1} parent=0
    #allocation2 [shape = 'u8[32768]{0}', space=vmem, size = 0x8000, scoped, tag = 'output window, operand 0, single buffered']
    #allocation3 [shape = 's32[1]{0}', space=sflag, size = 0x4, scoped, tag = 'scoped memory for seq2seq_forward.1']
    %14 = vsyncpa [#allocation3], 0
    // Predicated region
    $region2: #{seq2seq_forward.1} parent=1 // pred_check
      _
    $region3: #{seq2seq_forward.1} parent=1 // pred_check_branch
      %16 = sbr.rel (0) target = $region5
    $region4: #{seq2seq_forward.1} parent=1 // pred_region
      _
    $region5: #{seq2seq_forward.1} parent=1 // pred_fallthru
      _
    // Predicated region
    $region6: #{seq2seq_forward.1} parent=1 // pred_check
      _
    $region7: #{seq2seq_forward.1} parent=1 // pred_check_branch
      %18 = sbr.rel (0) target = $region9
    $region8: #{seq2seq_forward.1} parent=1 // pred_region
      _
    $region9: #{seq2seq_forward.1} parent=1 // pred_fallthru
      _
    // Predicated region
    $region10: #{seq2seq_forward.1} parent=1 // pred_check
      _
    $region11: #{seq2seq_forward.1} parent=1 // pred_check_branch
      %20 = sbr.rel (0) target = $region13
    $region12: #{seq2seq_forward.1} parent=1 // pred_region
      _
    $region13: #{seq2seq_forward.1} parent=1 // pred_fallthru
      _
    // Predicated region
    $region14: #{seq2seq_forward.1} parent=1 // pred_check
      _
    $region15: #{seq2seq_forward.1} parent=1 // pred_check_branch
      %22 = sbr.rel (0) target = $region17
    $region16: #{seq2seq_forward.1} parent=1 // pred_region
      _
    $region17: #{seq2seq_forward.1} parent=1 // pred_fallthru
      _
    // Predicated region
    $region18: #{seq2seq_forward.1} parent=1 // pred_check
      _
    $region19: #{seq2seq_forward.1} parent=1 // pred_check_branch
      %24 = sbr.rel (0) target = $region21
    $region20: #{seq2seq_forward.1} parent=1 // pred_region
      _
    $region21: #{seq2seq_forward.1} parent=1 // pred_fallthru
      _
    // Predicated region
    $region22: #{seq2seq_forward.1} parent=1 // pred_check
      _
    $region23: #{seq2seq_forward.1} parent=1 // pred_check_branch
      %26 = sbr.rel (0) target = $region25
    $region24: #{seq2seq_forward.1} parent=1 // pred_region
      _
    $region25: #{seq2seq_forward.1} parent=1 // pred_fallthru
      _
    // Predicated region
    $region26: #{seq2seq_forward.1} parent=1 // pred_check
      _
    $region27: #{seq2seq_forward.1} parent=1 // pred_check_branch
      %28 = sbr.rel (0) target = $region29
    $region28: #{seq2seq_forward.1} parent=1 // pred_region
      _
    $region29: #{seq2seq_forward.1} parent=1 // pred_fallthru
      _
    // Predicated region
    $region30: #{seq2seq_forward.1} parent=1 // pred_check
      _
    $region31: #{seq2seq_forward.1} parent=1 // pred_check_branch
      %30 = sbr.rel (0) target = $region33
    $region32: #{seq2seq_forward.1} parent=1 // pred_region
      _
    $region33: #{seq2seq_forward.1} parent=1 // pred_fallthru
      _
    // Predicated region
    $region34: #{seq2seq_forward.1} parent=1 // pred_check
      _
    $region35: #{seq2seq_forward.1} parent=1 // pred_check_branch
      %32 = sbr.rel (0) target = $region37
    $region36: #{seq2seq_forward.1} parent=1 // pred_region
      _
    $region37: #{seq2seq_forward.1} parent=1 // pred_fallthru
      _
    %v33 = vld [vmem:[%s0] sm:$0xff]
    %vm34 = vcmask 261120
    %v35 = vsel %vm34, %v33, 0.0
    %v36 = vld [vmem:[%s3] sm:$0xff]
    %v37 = vld [vmem:[%s3 + $0x8] sm:$0xff]
    %v38 = vld [vmem:[%s3 + $0x10] sm:$0xff]
    %v39 = vld [vmem:[%s3 + $0x18] sm:$0xff]
    %v40 = vld [vmem:[%s3 + $0x20] sm:$0xff]
    %v41 = vld [vmem:[%s3 + $0x28] sm:$0xff]
    %v42 = vld [vmem:[%s3 + $0x30] sm:$0xff]
    %v43 = vld [vmem:[%s3 + $0x38] sm:$0xff]
    %v44 = vld [vmem:[%s4] sm:$0x1]
    %v46 = vlaneseq
    %v47 = vshrl.u32 %v46, 7
    %v48 = vsub.s32 0, %v47
    %v49 = vrot.slane %v44, %v48
    %vm51 = vcmask 523264
    %v53 = vsel %vm51, %v35, 0
    %55 = vmatprep.subr.mxu0 0.0
    %56 = vmatpush1.msra.mxu0 0.0
    %57 = vmatprep.subr.mxu0 0.0
    %58 = vmatpush1.msra.mxu0 0.0
    %59 = vmatprep.subr.mxu0 0.0
    %60 = vmatpush1.msra.mxu0 0.0
    %61 = vmatprep.subr.mxu0 0.0
    %62 = vmatpush1.msra.mxu0 0.0
    %63 = vmatprep.subr.mxu0 0.0
    %64 = vmatpush1.msra.mxu0 0.0
    %65 = vmatprep.subr.mxu0 0.0
    %66 = vmatpush1.msra.mxu0 0.0
    %67 = vmatprep.subr.mxu0 0.0
    %68 = vmatpush1.msra.mxu0 0.0
    %69 = vmatprep.subr.mxu0 0.0
    %70 = vmatpush1.msra.mxu0 0.0
    %71 = vmatprep.subr.mxu0 0.0
    %72 = vmatpush1.msra.mxu0 %v43
    %73 = vmatprep.subr.mxu0 0.0
    %74 = vmatpush1.msra.mxu0 %v42
    %75 = vmatprep.subr.mxu0 0.0
    %76 = vmatpush1.msra.mxu0 %v41
    %77 = vmatprep.subr.mxu0 0.0
    %78 = vmatpush1.msra.mxu0 %v40
    %79 = vmatprep.subr.mxu0 0.0
    %80 = vmatpush1.msra.mxu0 %v39
    %81 = vmatprep.subr.mxu0 0.0
    %82 = vmatpush1.msra.mxu0 %v38
    %83 = vmatprep.subr.mxu0 0.0
    %84 = vmatpush1.msra.mxu0 %v37
    %85 = vmatprep.subr.mxu0 0.0
    %86 = vmatpush1.msra.mxu0 %v36
    %87 = vmatprep.subr.mxu0 0.0
    %88 = vmatpush2.msra.mxu0 0.0
    %89 = vmatprep.subr.mxu0 0.0
    %90 = vmatpush2.msra.mxu0 0.0
    %91 = vmatprep.subr.mxu0 0.0
    %92 = vmatpush2.msra.mxu0 0.0
    %93 = vmatprep.subr.mxu0 0.0
    %94 = vmatpush2.msra.mxu0 0.0
    %95 = vmatprep.subr.mxu0 0.0
    %96 = vmatpush2.msra.mxu0 0.0
    %97 = vmatprep.subr.mxu0 0.0
    %98 = vmatpush2.msra.mxu0 0.0
    %99 = vmatprep.subr.mxu0 0.0
    %100 = vmatpush2.msra.mxu0 0.0
    %101 = vmatprep.subr.mxu0 0.0
    %102 = vmatpush2.msra.mxu0 0.0
    %103 = vmatprep.subr.mxu0 0.0
    %104 = vmatpush2.msra.mxu0 0.0
    %105 = vmatprep.subr.mxu0 0.0
    %106 = vmatpush2.msra.mxu0 0.0
    %107 = vmatprep.subr.mxu0 0.0
    %108 = vmatpush2.msra.mxu0 0.0
    %109 = vmatprep.subr.mxu0 0.0
    %110 = vmatpush2.msra.mxu0 0.0
    %111 = vmatprep.subr.mxu0 0.0
    %112 = vmatpush2.msra.mxu0 0.0
    %113 = vmatprep.subr.mxu0 0.0
    %114 = vmatpush2.msra.mxu0 0.0
    %115 = vmatprep.subr.mxu0 0.0
    %116 = vmatpush2.msra.mxu0 0.0
    %117 = vmatprep.subr.mxu0 0.0
    %118 = vmatpush2.msra.mxu0 0.0
    %119 = vmatprep.mubr.f32.mxu0 0.0
    %120 = vmatmul.mubr.f32.gmra.mxu0 %v53
    %v121 = vpop.f32.mrf.mxu0
    %v122 = vadd.f32 %v49, %v121
    %v123 = vpop.f32.mrf.mxu0
    %124 = vdwg.mxu0
    %v125 = vxor.u32 %v122, 2147483648
    %v126 = vmul.f32 %v125, 1.442695
    %v127 = vpow.pop %v126
    %v128 = vadd.f32 %v127, 1.0
    %v129 = vrcp.pop %v128
    %v130 = vmul.f32 1.0, %v129
    %v131 = vtanh.pop %v122
    %v132 = vmul.f32 %v130, 0.0
    %134 = vrot.lane.b32.xlu0 %v131, 64
    %v135 = vpop.permute.xlu0 %134
    %v137 = vmul.f32 %v130, %v135
    %139 = vrot.lane.b32.xlu0 %v137, 32
    %v140 = vpop.permute.xlu0 %139
    %v142 = vadd.f32 %v132, %v140
    %v143 = vtanh.pop %v142
    %145 = vrot.lane.b32.xlu0 %v143, 64
    %v146 = vpop.permute.xlu0 %145
    %v148 = vmul.f32 %v130, %v146
    %s149 = scalar_lea.vmem %s0, 8
    %v150 = vld [vmem:[%s149] sm:$0xff]
    %152 = vrot.lane.b32.xlu0 %v148, 64
    %v153 = vpop.permute.xlu0 %152
    %v155 = vsel %vm34, %v150, %v153
    %v157 = vsel %vm51, %v155, 0
    %159 = vmatprep.subr.mxu0 0.0
    %160 = vmatpush1.msra.mxu0 0.0
    %161 = vmatprep.subr.mxu0 0.0
    %162 = vmatpush1.msra.mxu0 0.0
    %163 = vmatprep.subr.mxu0 0.0
    %164 = vmatpush1.msra.mxu0 0.0
    %165 = vmatprep.subr.mxu0 0.0
    %166 = vmatpush1.msra.mxu0 0.0
    %167 = vmatprep.subr.mxu0 0.0
    %168 = vmatpush1.msra.mxu0 0.0
    %169 = vmatprep.subr.mxu0 0.0
    %170 = vmatpush1.msra.mxu0 0.0
    %171 = vmatprep.subr.mxu0 0.0
    %172 = vmatpush1.msra.mxu0 0.0
    %173 = vmatprep.subr.mxu0 0.0
    %174 = vmatpush1.msra.mxu0 0.0
    %175 = vmatprep.subr.mxu0 0.0
    %176 = vmatpush1.msra.mxu0 %v43
    %177 = vmatprep.subr.mxu0 0.0
    %178 = vmatpush1.msra.mxu0 %v42
    %179 = vmatprep.subr.mxu0 0.0
    %180 = vmatpush1.msra.mxu0 %v41
    %181 = vmatprep.subr.mxu0 0.0
    %182 = vmatpush1.msra.mxu0 %v40
    %183 = vmatprep.subr.mxu0 0.0
    %184 = vmatpush1.msra.mxu0 %v39
    %185 = vmatprep.subr.mxu0 0.0
    %186 = vmatpush1.msra.mxu0 %v38
    %187 = vmatprep.subr.mxu0 0.0
    %188 = vmatpush1.msra.mxu0 %v37
    %189 = vmatprep.subr.mxu0 0.0
    %190 = vmatpush1.msra.mxu0 %v36
    %191 = vmatprep.subr.mxu0 0.0
    %192 = vmatpush2.msra.mxu0 0.0
    %193 = vmatprep.subr.mxu0 0.0
    %194 = vmatpush2.msra.mxu0 0.0
    %195 = vmatprep.subr.mxu0 0.0
    %196 = vmatpush2.msra.mxu0 0.0
    %197 = vmatprep.subr.mxu0 0.0
    %198 = vmatpush2.msra.mxu0 0.0
    %199 = vmatprep.subr.mxu0 0.0
    %200 = vmatpush2.msra.mxu0 0.0
    %201 = vmatprep.subr.mxu0 0.0
    %202 = vmatpush2.msra.mxu0 0.0
    %203 = vmatprep.subr.mxu0 0.0
    %204 = vmatpush2.msra.mxu0 0.0
    %205 = vmatprep.subr.mxu0 0.0
    %206 = vmatpush2.msra.mxu0 0.0
    %207 = vmatprep.subr.mxu0 0.0
    %208 = vmatpush2.msra.mxu0 0.0
    %209 = vmatprep.subr.mxu0 0.0
    %210 = vmatpush2.msra.mxu0 0.0
    %211 = vmatprep.subr.mxu0 0.0
    %212 = vmatpush2.msra.mxu0 0.0
    %213 = vmatprep.subr.mxu0 0.0
    %214 = vmatpush2.msra.mxu0 0.0
    %215 = vmatprep.subr.mxu0 0.0
    %216 = vmatpush2.msra.mxu0 0.0
    %217 = vmatprep.subr.mxu0 0.0
    %218 = vmatpush2.msra.mxu0 0.0
    %219 = vmatprep.subr.mxu0 0.0
    %220 = vmatpush2.msra.mxu0 0.0
    %221 = vmatprep.subr.mxu0 0.0
    %222 = vmatpush2.msra.mxu0 0.0
    %223 = vmatprep.mubr.f32.mxu0 0.0
    %224 = vmatmul.mubr.f32.gmra.mxu0 %v157
    %v225 = vpop.f32.mrf.mxu0
    %v226 = vadd.f32 %v49, %v225
    %v227 = vpop.f32.mrf.mxu0
    %228 = vdwg.mxu0
    %v229 = vxor.u32 %v226, 2147483648
    %v230 = vmul.f32 %v229, 1.442695
    %v231 = vpow.pop %v230
    %v232 = vadd.f32 %v231, 1.0
    %v233 = vrcp.pop %v232
    %v234 = vmul.f32 1.0, %v233
    %v235 = vtanh.pop %v226
    %v236 = vmul.f32 %v234, %v142
    %238 = vrot.lane.b32.xlu0 %v235, 64
    %v239 = vpop.permute.xlu0 %238
    %v241 = vmul.f32 %v234, %v239
    %243 = vrot.lane.b32.xlu0 %v241, 32
    %v244 = vpop.permute.xlu0 %243
    %v246 = vadd.f32 %v236, %v244
    %v247 = vtanh.pop %v246
    %249 = vrot.lane.b32.xlu0 %v247, 64
    %v250 = vpop.permute.xlu0 %249
    %v252 = vmul.f32 %v234, %v250
    %s253 = scalar_lea.vmem %s0, 16
    %v254 = vld [vmem:[%s253] sm:$0xff]
    %256 = vrot.lane.b32.xlu0 %v252, 64
    %v257 = vpop.permute.xlu0 %256
    %v259 = vsel %vm34, %v254, %v257
    %v261 = vsel %vm51, %v259, 0
    %263 = vmatprep.subr.mxu0 0.0
    %264 = vmatpush1.msra.mxu0 0.0
    %265 = vmatprep.subr.mxu0 0.0
    %266 = vmatpush1.msra.mxu0 0.0
    %267 = vmatprep.subr.mxu0 0.0
    %268 = vmatpush1.msra.mxu0 0.0
    %269 = vmatprep.subr.mxu0 0.0
    %270 = vmatpush1.msra.mxu0 0.0
    %271 = vmatprep.subr.mxu0 0.0
    %272 = vmatpush1.msra.mxu0 0.0
    %273 = vmatprep.subr.mxu0 0.0
    %274 = vmatpush1.msra.mxu0 0.0
    %275 = vmatprep.subr.mxu0 0.0
    %276 = vmatpush1.msra.mxu0 0.0
    %277 = vmatprep.subr.mxu0 0.0
    %278 = vmatpush1.msra.mxu0 0.0
    %279 = vmatprep.subr.mxu0 0.0
    %280 = vmatpush1.msra.mxu0 %v43
    %281 = vmatprep.subr.mxu0 0.0
    %282 = vmatpush1.msra.mxu0 %v42
    %283 = vmatprep.subr.mxu0 0.0
    %284 = vmatpush1.msra.mxu0 %v41
    %285 = vmatprep.subr.mxu0 0.0
    %286 = vmatpush1.msra.mxu0 %v40
    %287 = vmatprep.subr.mxu0 0.0
    %288 = vmatpush1.msra.mxu0 %v39
    %289 = vmatprep.subr.mxu0 0.0
    %290 = vmatpush1.msra.mxu0 %v38
    %291 = vmatprep.subr.mxu0 0.0
    %292 = vmatpush1.msra.mxu0 %v37
    %293 = vmatprep.subr.mxu0 0.0
    %294 = vmatpush1.msra.mxu0 %v36
    %295 = vmatprep.subr.mxu0 0.0
    %296 = vmatpush2.msra.mxu0 0.0
    %297 = vmatprep.subr.mxu0 0.0
    %298 = vmatpush2.msra.mxu0 0.0
    %299 = vmatprep.subr.mxu0 0.0
    %300 = vmatpush2.msra.mxu0 0.0
    %301 = vmatprep.subr.mxu0 0.0
    %302 = vmatpush2.msra.mxu0 0.0
    %303 = vmatprep.subr.mxu0 0.0
    %304 = vmatpush2.msra.mxu0 0.0
    %305 = vmatprep.subr.mxu0 0.0
    %306 = vmatpush2.msra.mxu0 0.0
    %307 = vmatprep.subr.mxu0 0.0
    %308 = vmatpush2.msra.mxu0 0.0
    %309 = vmatprep.subr.mxu0 0.0
    %310 = vmatpush2.msra.mxu0 0.0
    %311 = vmatprep.subr.mxu0 0.0
    %312 = vmatpush2.msra.mxu0 0.0
    %313 = vmatprep.subr.mxu0 0.0
    %314 = vmatpush2.msra.mxu0 0.0
    %315 = vmatprep.subr.mxu0 0.0
    %316 = vmatpush2.msra.mxu0 0.0
    %317 = vmatprep.subr.mxu0 0.0
    %318 = vmatpush2.msra.mxu0 0.0
    %319 = vmatprep.subr.mxu0 0.0
    %320 = vmatpush2.msra.mxu0 0.0
    %321 = vmatprep.subr.mxu0 0.0
    %322 = vmatpush2.msra.mxu0 0.0
    %323 = vmatprep.subr.mxu0 0.0
    %324 = vmatpush2.msra.mxu0 0.0
    %325 = vmatprep.subr.mxu0 0.0
    %326 = vmatpush2.msra.mxu0 0.0
    %327 = vmatprep.mubr.f32.mxu0 0.0
    %328 = vmatmul.mubr.f32.gmra.mxu0 %v261
    %v329 = vpop.f32.mrf.mxu0
    %v330 = vadd.f32 %v49, %v329
    %v331 = vpop.f32.mrf.mxu0
    %332 = vdwg.mxu0
    %v333 = vxor.u32 %v330, 2147483648
    %v334 = vmul.f32 %v333, 1.442695
    %v335 = vpow.pop %v334
    %v336 = vadd.f32 %v335, 1.0
    %v337 = vrcp.pop %v336
    %v338 = vmul.f32 1.0, %v337
    %v339 = vtanh.pop %v330
    %v340 = vmul.f32 %v338, %v246
    %342 = vrot.lane.b32.xlu0 %v339, 64
    %v343 = vpop.permute.xlu0 %342
    %v345 = vmul.f32 %v338, %v343
    %347 = vrot.lane.b32.xlu0 %v345, 32
    %v348 = vpop.permute.xlu0 %347
    %v350 = vadd.f32 %v340, %v348
    %v351 = vtanh.pop %v350
    %353 = vrot.lane.b32.xlu0 %v351, 64
    %v354 = vpop.permute.xlu0 %353
    %v356 = vmul.f32 %v338, %v354
    %s357 = scalar_lea.vmem %s0, 24
    %v358 = vld [vmem:[%s357] sm:$0xff]
    %360 = vrot.lane.b32.xlu0 %v356, 64
    %v361 = vpop.permute.xlu0 %360
    %v363 = vsel %vm34, %v358, %v361
    %v365 = vsel %vm51, %v363, 0
    %367 = vmatprep.subr.mxu0 0.0
    %368 = vmatpush1.msra.mxu0 0.0
    %369 = vmatprep.subr.mxu0 0.0
    %370 = vmatpush1.msra.mxu0 0.0
    %371 = vmatprep.subr.mxu0 0.0
    %372 = vmatpush1.msra.mxu0 0.0
    %373 = vmatprep.subr.mxu0 0.0
    %374 = vmatpush1.msra.mxu0 0.0
    %375 = vmatprep.subr.mxu0 0.0
    %376 = vmatpush1.msra.mxu0 0.0
    %377 = vmatprep.subr.mxu0 0.0
    %378 = vmatpush1.msra.mxu0 0.0
    %379 = vmatprep.subr.mxu0 0.0
    %380 = vmatpush1.msra.mxu0 0.0
    %381 = vmatprep.subr.mxu0 0.0
    %382 = vmatpush1.msra.mxu0 0.0
    %383 = vmatprep.subr.mxu0 0.0
    %384 = vmatpush1.msra.mxu0 %v43
    %385 = vmatprep.subr.mxu0 0.0
    %386 = vmatpush1.msra.mxu0 %v42
    %387 = vmatprep.subr.mxu0 0.0
    %388 = vmatpush1.msra.mxu0 %v41
    %389 = vmatprep.subr.mxu0 0.0
    %390 = vmatpush1.msra.mxu0 %v40
    %391 = vmatprep.subr.mxu0 0.0
    %392 = vmatpush1.msra.mxu0 %v39
    %393 = vmatprep.subr.mxu0 0.0
    %394 = vmatpush1.msra.mxu0 %v38
    %395 = vmatprep.subr.mxu0 0.0
    %396 = vmatpush1.msra.mxu0 %v37
    %397 = vmatprep.subr.mxu0 0.0
    %398 = vmatpush1.msra.mxu0 %v36
    %399 = vmatprep.subr.mxu0 0.0
    %400 = vmatpush2.msra.mxu0 0.0
    %401 = vmatprep.subr.mxu0 0.0
    %402 = vmatpush2.msra.mxu0 0.0
    %403 = vmatprep.subr.mxu0 0.0
    %404 = vmatpush2.msra.mxu0 0.0
    %405 = vmatprep.subr.mxu0 0.0
    %406 = vmatpush2.msra.mxu0 0.0
    %407 = vmatprep.subr.mxu0 0.0
    %408 = vmatpush2.msra.mxu0 0.0
    %409 = vmatprep.subr.mxu0 0.0
    %410 = vmatpush2.msra.mxu0 0.0
    %411 = vmatprep.subr.mxu0 0.0
    %412 = vmatpush2.msra.mxu0 0.0
    %413 = vmatprep.subr.mxu0 0.0
    %414 = vmatpush2.msra.mxu0 0.0
    %415 = vmatprep.subr.mxu0 0.0
    %416 = vmatpush2.msra.mxu0 0.0
    %417 = vmatprep.subr.mxu0 0.0
    %418 = vmatpush2.msra.mxu0 0.0
    %419 = vmatprep.subr.mxu0 0.0
    %420 = vmatpush2.msra.mxu0 0.0
    %421 = vmatprep.subr.mxu0 0.0
    %422 = vmatpush2.msra.mxu0 0.0
    %423 = vmatprep.subr.mxu0 0.0
    %424 = vmatpush2.msra.mxu0 0.0
    %425 = vmatprep.subr.mxu0 0.0
    %426 = vmatpush2.msra.mxu0 0.0
    %427 = vmatprep.subr.mxu0 0.0
    %428 = vmatpush2.msra.mxu0 0.0
    %429 = vmatprep.subr.mxu0 0.0
    %430 = vmatpush2.msra.mxu0 0.0
    %431 = vmatprep.mubr.f32.mxu0 0.0
    %432 = vmatmul.mubr.f32.gmra.mxu0 %v365
    %v433 = vpop.f32.mrf.mxu0
    %v434 = vadd.f32 %v49, %v433
    %v435 = vpop.f32.mrf.mxu0
    %436 = vdwg.mxu0
    %v437 = vxor.u32 %v434, 2147483648
    %v438 = vmul.f32 %v437, 1.442695
    %v439 = vpow.pop %v438
    %v440 = vadd.f32 %v439, 1.0
    %v441 = vrcp.pop %v440
    %v442 = vmul.f32 1.0, %v441
    %v443 = vtanh.pop %v434
    %v444 = vmul.f32 %v442, %v350
    %446 = vrot.lane.b32.xlu0 %v443, 64
    %v447 = vpop.permute.xlu0 %446
    %v449 = vmul.f32 %v442, %v447
    %451 = vrot.lane.b32.xlu0 %v449, 32
    %v452 = vpop.permute.xlu0 %451
    %v454 = vadd.f32 %v444, %v452
    %v455 = vtanh.pop %v454
    %457 = vrot.lane.b32.xlu0 %v455, 64
    %v458 = vpop.permute.xlu0 %457
    %v460 = vmul.f32 %v442, %v458
    %s461 = scalar_lea.vmem %s0, 32
    %v462 = vld [vmem:[%s461] sm:$0xff]
    %464 = vrot.lane.b32.xlu0 %v460, 64
    %v465 = vpop.permute.xlu0 %464
    %v467 = vsel %vm34, %v462, %v465
    %v469 = vsel %vm51, %v467, 0
    %471 = vmatprep.subr.mxu0 0.0
    %472 = vmatpush1.msra.mxu0 0.0
    %473 = vmatprep.subr.mxu0 0.0
    %474 = vmatpush1.msra.mxu0 0.0
    %475 = vmatprep.subr.mxu0 0.0
    %476 = vmatpush1.msra.mxu0 0.0
    %477 = vmatprep.subr.mxu0 0.0
    %478 = vmatpush1.msra.mxu0 0.0
    %479 = vmatprep.subr.mxu0 0.0
    %480 = vmatpush1.msra.mxu0 0.0
    %481 = vmatprep.subr.mxu0 0.0
    %482 = vmatpush1.msra.mxu0 0.0
    %483 = vmatprep.subr.mxu0 0.0
    %484 = vmatpush1.msra.mxu0 0.0
    %485 = vmatprep.subr.mxu0 0.0
    %486 = vmatpush1.msra.mxu0 0.0
    %487 = vmatprep.subr.mxu0 0.0
    %488 = vmatpush1.msra.mxu0 %v43
    %489 = vmatprep.subr.mxu0 0.0
    %490 = vmatpush1.msra.mxu0 %v42
    %491 = vmatprep.subr.mxu0 0.0
    %492 = vmatpush1.msra.mxu0 %v41
    %493 = vmatprep.subr.mxu0 0.0
    %494 = vmatpush1.msra.mxu0 %v40
    %495 = vmatprep.subr.mxu0 0.0
    %496 = vmatpush1.msra.mxu0 %v39
    %497 = vmatprep.subr.mxu0 0.0
    %498 = vmatpush1.msra.mxu0 %v38
    %499 = vmatprep.subr.mxu0 0.0
    %500 = vmatpush1.msra.mxu0 %v37
    %501 = vmatprep.subr.mxu0 0.0
    %502 = vmatpush1.msra.mxu0 %v36
    %503 = vmatprep.subr.mxu0 0.0
    %504 = vmatpush2.msra.mxu0 0.0
    %505 = vmatprep.subr.mxu0 0.0
    %506 = vmatpush2.msra.mxu0 0.0
    %507 = vmatprep.subr.mxu0 0.0
    %508 = vmatpush2.msra.mxu0 0.0
    %509 = vmatprep.subr.mxu0 0.0
    %510 = vmatpush2.msra.mxu0 0.0
    %511 = vmatprep.subr.mxu0 0.0
    %512 = vmatpush2.msra.mxu0 0.0
    %513 = vmatprep.subr.mxu0 0.0
    %514 = vmatpush2.msra.mxu0 0.0
    %515 = vmatprep.subr.mxu0 0.0
    %516 = vmatpush2.msra.mxu0 0.0
    %517 = vmatprep.subr.mxu0 0.0
    %518 = vmatpush2.msra.mxu0 0.0
    %519 = vmatprep.subr.mxu0 0.0
    %520 = vmatpush2.msra.mxu0 0.0
    %521 = vmatprep.subr.mxu0 0.0
    %522 = vmatpush2.msra.mxu0 0.0
    %523 = vmatprep.subr.mxu0 0.0
    %524 = vmatpush2.msra.mxu0 0.0
    %525 = vmatprep.subr.mxu0 0.0
    %526 = vmatpush2.msra.mxu0 0.0
    %527 = vmatprep.subr.mxu0 0.0
    %528 = vmatpush2.msra.mxu0 0.0
    %529 = vmatprep.subr.mxu0 0.0
    %530 = vmatpush2.msra.mxu0 0.0
    %531 = vmatprep.subr.mxu0 0.0
    %532 = vmatpush2.msra.mxu0 0.0
    %533 = vmatprep.subr.mxu0 0.0
    %534 = vmatpush2.msra.mxu0 0.0
    %535 = vmatprep.mubr.f32.mxu0 0.0
    %536 = vmatmul.mubr.f32.gmra.mxu0 %v469
    %v537 = vpop.f32.mrf.mxu0
    %v538 = vadd.f32 %v49, %v537
    %v539 = vpop.f32.mrf.mxu0
    %540 = vdwg.mxu0
    %v541 = vxor.u32 %v538, 2147483648
    %v542 = vmul.f32 %v541, 1.442695
    %v543 = vpow.pop %v542
    %v544 = vadd.f32 %v543, 1.0
    %v545 = vrcp.pop %v544
    %v546 = vmul.f32 1.0, %v545
    %v547 = vtanh.pop %v538
    %v548 = vmul.f32 %v546, %v454
    %550 = vrot.lane.b32.xlu0 %v547, 64
    %v551 = vpop.permute.xlu0 %550
    %v553 = vmul.f32 %v546, %v551
    %555 = vrot.lane.b32.xlu0 %v553, 32
    %v556 = vpop.permute.xlu0 %555
    %v558 = vadd.f32 %v548, %v556
    %v559 = vtanh.pop %v558
    %561 = vrot.lane.b32.xlu0 %v559, 64
    %v562 = vpop.permute.xlu0 %561
    %v564 = vmul.f32 %v546, %v562
    %s565 = scalar_lea.vmem %s0, 40
    %v566 = vld [vmem:[%s565] sm:$0xff]
    %568 = vrot.lane.b32.xlu0 %v564, 64
    %v569 = vpop.permute.xlu0 %568
    %v571 = vsel %vm34, %v566, %v569
    %v573 = vsel %vm51, %v571, 0
    %575 = vmatprep.subr.mxu0 0.0
    %576 = vmatpush1.msra.mxu0 0.0
    %577 = vmatprep.subr.mxu0 0.0
    %578 = vmatpush1.msra.mxu0 0.0
    %579 = vmatprep.subr.mxu0 0.0
    %580 = vmatpush1.msra.mxu0 0.0
    %581 = vmatprep.subr.mxu0 0.0
    %582 = vmatpush1.msra.mxu0 0.0
    %583 = vmatprep.subr.mxu0 0.0
    %584 = vmatpush1.msra.mxu0 0.0
    %585 = vmatprep.subr.mxu0 0.0
    %586 = vmatpush1.msra.mxu0 0.0
    %587 = vmatprep.subr.mxu0 0.0
    %588 = vmatpush1.msra.mxu0 0.0
    %589 = vmatprep.subr.mxu0 0.0
    %590 = vmatpush1.msra.mxu0 0.0
    %591 = vmatprep.subr.mxu0 0.0
    %592 = vmatpush1.msra.mxu0 %v43
    %593 = vmatprep.subr.mxu0 0.0
    %594 = vmatpush1.msra.mxu0 %v42
    %595 = vmatprep.subr.mxu0 0.0
    %596 = vmatpush1.msra.mxu0 %v41
    %597 = vmatprep.subr.mxu0 0.0
    %598 = vmatpush1.msra.mxu0 %v40
    %599 = vmatprep.subr.mxu0 0.0
    %600 = vmatpush1.msra.mxu0 %v39
    %601 = vmatprep.subr.mxu0 0.0
    %602 = vmatpush1.msra.mxu0 %v38
    %603 = vmatprep.subr.mxu0 0.0
    %604 = vmatpush1.msra.mxu0 %v37
    %605 = vmatprep.subr.mxu0 0.0
    %606 = vmatpush1.msra.mxu0 %v36
    %607 = vmatprep.subr.mxu0 0.0
    %608 = vmatpush2.msra.mxu0 0.0
    %609 = vmatprep.subr.mxu0 0.0
    %610 = vmatpush2.msra.mxu0 0.0
    %611 = vmatprep.subr.mxu0 0.0
    %612 = vmatpush2.msra.mxu0 0.0
    %613 = vmatprep.subr.mxu0 0.0
    %614 = vmatpush2.msra.mxu0 0.0
    %615 = vmatprep.subr.mxu0 0.0
    %616 = vmatpush2.msra.mxu0 0.0
    %617 = vmatprep.subr.mxu0 0.0
    %618 = vmatpush2.msra.mxu0 0.0
    %619 = vmatprep.subr.mxu0 0.0
    %620 = vmatpush2.msra.mxu0 0.0
    %621 = vmatprep.subr.mxu0 0.0
    %622 = vmatpush2.msra.mxu0 0.0
    %623 = vmatprep.subr.mxu0 0.0
    %624 = vmatpush2.msra.mxu0 0.0
    %625 = vmatprep.subr.mxu0 0.0
    %626 = vmatpush2.msra.mxu0 0.0
    %627 = vmatprep.subr.mxu0 0.0
    %628 = vmatpush2.msra.mxu0 0.0
    %629 = vmatprep.subr.mxu0 0.0
    %630 = vmatpush2.msra.mxu0 0.0
    %631 = vmatprep.subr.mxu0 0.0
    %632 = vmatpush2.msra.mxu0 0.0
    %633 = vmatprep.subr.mxu0 0.0
    %634 = vmatpush2.msra.mxu0 0.0
    %635 = vmatprep.subr.mxu0 0.0
    %636 = vmatpush2.msra.mxu0 0.0
    %637 = vmatprep.subr.mxu0 0.0
    %638 = vmatpush2.msra.mxu0 0.0
    %639 = vmatprep.mubr.f32.mxu0 0.0
    %640 = vmatmul.mubr.f32.gmra.mxu0 %v573
    %v641 = vpop.f32.mrf.mxu0
    %v642 = vadd.f32 %v49, %v641
    %v643 = vpop.f32.mrf.mxu0
    %644 = vdwg.mxu0
    %v645 = vxor.u32 %v642, 2147483648
    %v646 = vmul.f32 %v645, 1.442695
    %v647 = vpow.pop %v646
    %v648 = vadd.f32 %v647, 1.0
    %v649 = vrcp.pop %v648
    %v650 = vmul.f32 1.0, %v649
    %v651 = vtanh.pop %v642
    %v652 = vmul.f32 %v650, %v558
    %654 = vrot.lane.b32.xlu0 %v651, 64
    %v655 = vpop.permute.xlu0 %654
    %v657 = vmul.f32 %v650, %v655
    %659 = vrot.lane.b32.xlu0 %v657, 32
    %v660 = vpop.permute.xlu0 %659
    %v662 = vadd.f32 %v652, %v660
    %v663 = vtanh.pop %v662
    %665 = vrot.lane.b32.xlu0 %v663, 64
    %v666 = vpop.permute.xlu0 %665
    %v668 = vmul.f32 %v650, %v666
    %669 = vst [vmem:[#allocation2] sm:$0xff] 0.0
    %v670 = vld [vmem:[%s1] sm:$0xff]
    %v671 = vlaneseq
    %v672 = vand.u32 %v671, 127
    %674 = vrot.lane.b32.xlu0 %v668, 64
    %v675 = vpop.permute.xlu0 %674
    %v677 = vsel %vm34, %v670, %v675
    %v678 = vld [vmem:[%s5] sm:$0xff]
    %v679 = vld [vmem:[%s5 + $0x8] sm:$0xff]
    %v680 = vld [vmem:[%s5 + $0x10] sm:$0xff]
    %v681 = vld [vmem:[%s5 + $0x18] sm:$0xff]
    %v682 = vld [vmem:[%s5 + $0x20] sm:$0xff]
    %v683 = vld [vmem:[%s5 + $0x28] sm:$0xff]
    %v684 = vld [vmem:[%s5 + $0x30] sm:$0xff]
    %v685 = vld [vmem:[%s5 + $0x38] sm:$0xff]
    %v686 = vld [vmem:[%s6] sm:$0x1]
    %v688 = vlaneseq
    %v689 = vshrl.u32 %v688, 7
    %v690 = vsub.s32 0, %v689
    %v691 = vrot.slane %v686, %v690
    %v694 = vsel %vm51, %v677, 0
    %696 = vmatprep.subr.mxu0 0.0
    %697 = vmatpush1.msra.mxu0 0.0
    %698 = vmatprep.subr.mxu0 0.0
    %699 = vmatpush1.msra.mxu0 0.0
    %700 = vmatprep.subr.mxu0 0.0
    %701 = vmatpush1.msra.mxu0 0.0
    %702 = vmatprep.subr.mxu0 0.0
    %703 = vmatpush1.msra.mxu0 0.0
    %704 = vmatprep.subr.mxu0 0.0
    %705 = vmatpush1.msra.mxu0 0.0
    %706 = vmatprep.subr.mxu0 0.0
    %707 = vmatpush1.msra.mxu0 0.0
    %708 = vmatprep.subr.mxu0 0.0
    %709 = vmatpush1.msra.mxu0 0.0
    %710 = vmatprep.subr.mxu0 0.0
    %711 = vmatpush1.msra.mxu0 0.0
    %712 = vmatprep.subr.mxu0 0.0
    %713 = vmatpush1.msra.mxu0 %v685
    %714 = vmatprep.subr.mxu0 0.0
    %715 = vmatpush1.msra.mxu0 %v684
    %716 = vmatprep.subr.mxu0 0.0
    %717 = vmatpush1.msra.mxu0 %v683
    %718 = vmatprep.subr.mxu0 0.0
    %719 = vmatpush1.msra.mxu0 %v682
    %720 = vmatprep.subr.mxu0 0.0
    %721 = vmatpush1.msra.mxu0 %v681
    %722 = vmatprep.subr.mxu0 0.0
    %723 = vmatpush1.msra.mxu0 %v680
    %724 = vmatprep.subr.mxu0 0.0
    %725 = vmatpush1.msra.mxu0 %v679
    %726 = vmatprep.subr.mxu0 0.0
    %727 = vmatpush1.msra.mxu0 %v678
    %728 = vmatprep.subr.mxu0 0.0
    %729 = vmatpush2.msra.mxu0 0.0
    %730 = vmatprep.subr.mxu0 0.0
    %731 = vmatpush2.msra.mxu0 0.0
    %732 = vmatprep.subr.mxu0 0.0
    %733 = vmatpush2.msra.mxu0 0.0
    %734 = vmatprep.subr.mxu0 0.0
    %735 = vmatpush2.msra.mxu0 0.0
    %736 = vmatprep.subr.mxu0 0.0
    %737 = vmatpush2.msra.mxu0 0.0
    %738 = vmatprep.subr.mxu0 0.0
    %739 = vmatpush2.msra.mxu0 0.0
    %740 = vmatprep.subr.mxu0 0.0
    %741 = vmatpush2.msra.mxu0 0.0
    %742 = vmatprep.subr.mxu0 0.0
    %743 = vmatpush2.msra.mxu0 0.0
    %744 = vmatprep.subr.mxu0 0.0
    %745 = vmatpush2.msra.mxu0 0.0
    %746 = vmatprep.subr.mxu0 0.0
    %747 = vmatpush2.msra.mxu0 0.0
    %748 = vmatprep.subr.mxu0 0.0
    %749 = vmatpush2.msra.mxu0 0.0
    %750 = vmatprep.subr.mxu0 0.0
    %751 = vmatpush2.msra.mxu0 0.0
    %752 = vmatprep.subr.mxu0 0.0
    %753 = vmatpush2.msra.mxu0 0.0
    %754 = vmatprep.subr.mxu0 0.0
    %755 = vmatpush2.msra.mxu0 0.0
    %756 = vmatprep.subr.mxu0 0.0
    %757 = vmatpush2.msra.mxu0 0.0
    %758 = vmatprep.subr.mxu0 0.0
    %759 = vmatpush2.msra.mxu0 0.0
    %760 = vmatprep.mubr.f32.mxu0 0.0
    %761 = vmatmul.mubr.f32.gmra.mxu0 %v694
    %v762 = vpop.f32.mrf.mxu0
    %v763 = vadd.f32 %v691, %v762
    %v764 = vpop.f32.mrf.mxu0
    %765 = vdwg.mxu0
    %v766 = vxor.u32 %v763, 2147483648
    %v767 = vmul.f32 %v766, 1.442695
    %v768 = vpow.pop %v767
    %v769 = vadd.f32 %v768, 1.0
    %v770 = vrcp.pop %v769
    %v771 = vmul.f32 1.0, %v770
    %v772 = vtanh.pop %v763
    %v773 = vmul.f32 %v771, %v662
    %775 = vrot.lane.b32.xlu0 %v772, 64
    %v776 = vpop.permute.xlu0 %775
    %v778 = vmul.f32 %v771, %v776
    %780 = vrot.lane.b32.xlu0 %v778, 32
    %v781 = vpop.permute.xlu0 %780
    %v783 = vadd.f32 %v773, %v781
    %v784 = vtanh.pop %v783
    %786 = vrot.lane.b32.xlu0 %v784, 64
    %v787 = vpop.permute.xlu0 %786
    %v789 = vmul.f32 %v771, %v787
    %v790 = vld [vmem:[%s7] sm:$0xff]
    %v791 = vld [vmem:[%s7 + $0x8] sm:$0xff]
    %v792 = vld [vmem:[%s7 + $0x10] sm:$0xff]
    %v793 = vld [vmem:[%s7 + $0x18] sm:$0xff]
    %v794 = vld [vmem:[%s8] sm:$0x1]
    %v796 = vlaneseq
    %v797 = vshrl.u32 %v796, 7
    %v798 = vsub.s32 0, %v797
    %v799 = vrot.slane %v794, %v798
    %802 = vrot.lane.b32.xlu0 %v789, 32
    %v803 = vpop.permute.xlu0 %802
    %v804 = vsel %vm34, %v803, 0
    %806 = vmatprep.subr.mxu0 0.0
    %807 = vmatpush1.msra.mxu0 0.0
    %808 = vmatprep.subr.mxu0 0.0
    %809 = vmatpush1.msra.mxu0 0.0
    %810 = vmatprep.subr.mxu0 0.0
    %811 = vmatpush1.msra.mxu0 0.0
    %812 = vmatprep.subr.mxu0 0.0
    %813 = vmatpush1.msra.mxu0 0.0
    %814 = vmatprep.subr.mxu0 0.0
    %815 = vmatpush1.msra.mxu0 0.0
    %816 = vmatprep.subr.mxu0 0.0
    %817 = vmatpush1.msra.mxu0 0.0
    %818 = vmatprep.subr.mxu0 0.0
    %819 = vmatpush1.msra.mxu0 0.0
    %820 = vmatprep.subr.mxu0 0.0
    %821 = vmatpush1.msra.mxu0 0.0
    %822 = vmatprep.subr.mxu0 0.0
    %823 = vmatpush1.msra.mxu0 0.0
    %824 = vmatprep.subr.mxu0 0.0
    %825 = vmatpush1.msra.mxu0 0.0
    %826 = vmatprep.subr.mxu0 0.0
    %827 = vmatpush1.msra.mxu0 0.0
    %828 = vmatprep.subr.mxu0 0.0
    %829 = vmatpush1.msra.mxu0 0.0
    %830 = vmatprep.subr.mxu0 0.0
    %831 = vmatpush1.msra.mxu0 %v793
    %832 = vmatprep.subr.mxu0 0.0
    %833 = vmatpush1.msra.mxu0 %v792
    %834 = vmatprep.subr.mxu0 0.0
    %835 = vmatpush1.msra.mxu0 %v791
    %836 = vmatprep.subr.mxu0 0.0
    %837 = vmatpush1.msra.mxu0 %v790
    %838 = vmatprep.subr.mxu0 0.0
    %839 = vmatpush2.msra.mxu0 0.0
    %840 = vmatprep.subr.mxu0 0.0
    %841 = vmatpush2.msra.mxu0 0.0
    %842 = vmatprep.subr.mxu0 0.0
    %843 = vmatpush2.msra.mxu0 0.0
    %844 = vmatprep.subr.mxu0 0.0
    %845 = vmatpush2.msra.mxu0 0.0
    %846 = vmatprep.subr.mxu0 0.0
    %847 = vmatpush2.msra.mxu0 0.0
    %848 = vmatprep.subr.mxu0 0.0
    %849 = vmatpush2.msra.mxu0 0.0
    %850 = vmatprep.subr.mxu0 0.0
    %851 = vmatpush2.msra.mxu0 0.0
    %852 = vmatprep.subr.mxu0 0.0
    %853 = vmatpush2.msra.mxu0 0.0
    %854 = vmatprep.subr.mxu0 0.0
    %855 = vmatpush2.msra.mxu0 0.0
    %856 = vmatprep.subr.mxu0 0.0
    %857 = vmatpush2.msra.mxu0 0.0
    %858 = vmatprep.subr.mxu0 0.0
    %859 = vmatpush2.msra.mxu0 0.0
    %860 = vmatprep.subr.mxu0 0.0
    %861 = vmatpush2.msra.mxu0 0.0
    %862 = vmatprep.subr.mxu0 0.0
    %863 = vmatpush2.msra.mxu0 0.0
    %864 = vmatprep.subr.mxu0 0.0
    %865 = vmatpush2.msra.mxu0 0.0
    %866 = vmatprep.subr.mxu0 0.0
    %867 = vmatpush2.msra.mxu0 0.0
    %868 = vmatprep.subr.mxu0 0.0
    %869 = vmatpush2.msra.mxu0 0.0
    %870 = vmatprep.mubr.f32.mxu0 0.0
    %871 = vmatmul.mubr.f32.gmra.mxu0 %v804
    %v872 = vpop.f32.mrf.mxu0
    %v873 = vadd.f32 %v799, %v872
    %v874 = vpop.f32.mrf.mxu0
    %875 = vdwg.mxu0
    %s876 = scalar_lea.vmem [#allocation2], 8
    %877 = vst [vmem:[%s876] sm:$0xff] %v873
    %s878 = scalar_lea.vmem %s1, 8
    %v879 = vld [vmem:[%s878] sm:$0xff]
    %880 = vrot.lane.b32.xlu0 %v789, 64
    %v881 = vpop.permute.xlu0 %880
    %v883 = vsel %vm34, %v879, %v881
    %v884 = vld [vmem:[%s5] sm:$0xff]
    %v885 = vld [vmem:[%s5 + $0x8] sm:$0xff]
    %v886 = vld [vmem:[%s5 + $0x10] sm:$0xff]
    %v887 = vld [vmem:[%s5 + $0x18] sm:$0xff]
    %v888 = vld [vmem:[%s5 + $0x20] sm:$0xff]
    %v889 = vld [vmem:[%s5 + $0x28] sm:$0xff]
    %v890 = vld [vmem:[%s5 + $0x30] sm:$0xff]
    %v891 = vld [vmem:[%s5 + $0x38] sm:$0xff]
    %v892 = vld [vmem:[%s6] sm:$0x1]
    %v894 = vlaneseq
    %v895 = vshrl.u32 %v894, 7
    %v896 = vsub.s32 0, %v895
    %v897 = vrot.slane %v892, %v896
    %v900 = vsel %vm51, %v883, 0
    %902 = vmatprep.subr.mxu0 0.0
    %903 = vmatpush1.msra.mxu0 0.0
    %904 = vmatprep.subr.mxu0 0.0
    %905 = vmatpush1.msra.mxu0 0.0
    %906 = vmatprep.subr.mxu0 0.0
    %907 = vmatpush1.msra.mxu0 0.0
    %908 = vmatprep.subr.mxu0 0.0
    %909 = vmatpush1.msra.mxu0 0.0
    %910 = vmatprep.subr.mxu0 0.0
    %911 = vmatpush1.msra.mxu0 0.0
    %912 = vmatprep.subr.mxu0 0.0
    %913 = vmatpush1.msra.mxu0 0.0
    %914 = vmatprep.subr.mxu0 0.0
    %915 = vmatpush1.msra.mxu0 0.0
    %916 = vmatprep.subr.mxu0 0.0
    %917 = vmatpush1.msra.mxu0 0.0
    %918 = vmatprep.subr.mxu0 0.0
    %919 = vmatpush1.msra.mxu0 %v891
    %920 = vmatprep.subr.mxu0 0.0
    %921 = vmatpush1.msra.mxu0 %v890
    %922 = vmatprep.subr.mxu0 0.0
    %923 = vmatpush1.msra.mxu0 %v889
    %924 = vmatprep.subr.mxu0 0.0
    %925 = vmatpush1.msra.mxu0 %v888
    %926 = vmatprep.subr.mxu0 0.0
    %927 = vmatpush1.msra.mxu0 %v887
    %928 = vmatprep.subr.mxu0 0.0
    %929 = vmatpush1.msra.mxu0 %v886
    %930 = vmatprep.subr.mxu0 0.0
    %931 = vmatpush1.msra.mxu0 %v885
    %932 = vmatprep.subr.mxu0 0.0
    %933 = vmatpush1.msra.mxu0 %v884
    %934 = vmatprep.subr.mxu0 0.0
    %935 = vmatpush2.msra.mxu0 0.0
    %936 = vmatprep.subr.mxu0 0.0
    %937 = vmatpush2.msra.mxu0 0.0
    %938 = vmatprep.subr.mxu0 0.0
    %939 = vmatpush2.msra.mxu0 0.0
    %940 = vmatprep.subr.mxu0 0.0
    %941 = vmatpush2.msra.mxu0 0.0
    %942 = vmatprep.subr.mxu0 0.0
    %943 = vmatpush2.msra.mxu0 0.0
    %944 = vmatprep.subr.mxu0 0.0
    %945 = vmatpush2.msra.mxu0 0.0
    %946 = vmatprep.subr.mxu0 0.0
    %947 = vmatpush2.msra.mxu0 0.0
    %948 = vmatprep.subr.mxu0 0.0
    %949 = vmatpush2.msra.mxu0 0.0
    %950 = vmatprep.subr.mxu0 0.0
    %951 = vmatpush2.msra.mxu0 0.0
    %952 = vmatprep.subr.mxu0 0.0
    %953 = vmatpush2.msra.mxu0 0.0
    %954 = vmatprep.subr.mxu0 0.0
    %955 = vmatpush2.msra.mxu0 0.0
    %956 = vmatprep.subr.mxu0 0.0
    %957 = vmatpush2.msra.mxu0 0.0
    %958 = vmatprep.subr.mxu0 0.0
    %959 = vmatpush2.msra.mxu0 0.0
    %960 = vmatprep.subr.mxu0 0.0
    %961 = vmatpush2.msra.mxu0 0.0
    %962 = vmatprep.subr.mxu0 0.0
    %963 = vmatpush2.msra.mxu0 0.0
    %964 = vmatprep.subr.mxu0 0.0
    %965 = vmatpush2.msra.mxu0 0.0
    %966 = vmatprep.mubr.f32.mxu0 0.0
    %967 = vmatmul.mubr.f32.gmra.mxu0 %v900
    %v968 = vpop.f32.mrf.mxu0
    %v969 = vadd.f32 %v897, %v968
    %v970 = vpop.f32.mrf.mxu0
    %971 = vdwg.mxu0
    %v972 = vxor.u32 %v969, 2147483648
    %v973 = vmul.f32 %v972, 1.442695
    %v974 = vpow.pop %v973
    %v975 = vadd.f32 %v974, 1.0
    %v976 = vrcp.pop %v975
    %v977 = vmul.f32 1.0, %v976
    %v978 = vtanh.pop %v969
    %v979 = vmul.f32 %v977, %v783
    %981 = vrot.lane.b32.xlu0 %v978, 64
    %v982 = vpop.permute.xlu0 %981
    %v984 = vmul.f32 %v977, %v982
    %986 = vrot.lane.b32.xlu0 %v984, 32
    %v987 = vpop.permute.xlu0 %986
    %v989 = vadd.f32 %v979, %v987
    %v990 = vtanh.pop %v989
    %992 = vrot.lane.b32.xlu0 %v990, 64
    %v993 = vpop.permute.xlu0 %992
    %v995 = vmul.f32 %v977, %v993
    %v996 = vld [vmem:[%s7] sm:$0xff]
    %v997 = vld [vmem:[%s7 + $0x8] sm:$0xff]
    %v998 = vld [vmem:[%s7 + $0x10] sm:$0xff]
    %v999 = vld [vmem:[%s7 + $0x18] sm:$0xff]
    %v1000 = vld [vmem:[%s8] sm:$0x1]
    %v1002 = vlaneseq
    %v1003 = vshrl.u32 %v1002, 7
    %v1004 = vsub.s32 0, %v1003
    %v1005 = vrot.slane %v1000, %v1004
    %1008 = vrot.lane.b32.xlu0 %v995, 32
    %v1009 = vpop.permute.xlu0 %1008
    %v1010 = vsel %vm34, %v1009, 0
    %1012 = vmatprep.subr.mxu0 0.0
    %1013 = vmatpush1.msra.mxu0 0.0
    %1014 = vmatprep.subr.mxu0 0.0
    %1015 = vmatpush1.msra.mxu0 0.0
    %1016 = vmatprep.subr.mxu0 0.0
    %1017 = vmatpush1.msra.mxu0 0.0
    %1018 = vmatprep.subr.mxu0 0.0
    %1019 = vmatpush1.msra.mxu0 0.0
    %1020 = vmatprep.subr.mxu0 0.0
    %1021 = vmatpush1.msra.mxu0 0.0
    %1022 = vmatprep.subr.mxu0 0.0
    %1023 = vmatpush1.msra.mxu0 0.0
    %1024 = vmatprep.subr.mxu0 0.0
    %1025 = vmatpush1.msra.mxu0 0.0
    %1026 = vmatprep.subr.mxu0 0.0
    %1027 = vmatpush1.msra.mxu0 0.0
    %1028 = vmatprep.subr.mxu0 0.0
    %1029 = vmatpush1.msra.mxu0 0.0
    %1030 = vmatprep.subr.mxu0 0.0
    %1031 = vmatpush1.msra.mxu0 0.0
    %1032 = vmatprep.subr.mxu0 0.0
    %1033 = vmatpush1.msra.mxu0 0.0
    %1034 = vmatprep.subr.mxu0 0.0
    %1035 = vmatpush1.msra.mxu0 0.0
    %1036 = vmatprep.subr.mxu0 0.0
    %1037 = vmatpush1.msra.mxu0 %v999
    %1038 = vmatprep.subr.mxu0 0.0
    %1039 = vmatpush1.msra.mxu0 %v998
    %1040 = vmatprep.subr.mxu0 0.0
    %1041 = vmatpush1.msra.mxu0 %v997
    %1042 = vmatprep.subr.mxu0 0.0
    %1043 = vmatpush1.msra.mxu0 %v996
    %1044 = vmatprep.subr.mxu0 0.0
    %1045 = vmatpush2.msra.mxu0 0.0
    %1046 = vmatprep.subr.mxu0 0.0
    %1047 = vmatpush2.msra.mxu0 0.0
    %1048 = vmatprep.subr.mxu0 0.0
    %1049 = vmatpush2.msra.mxu0 0.0
    %1050 = vmatprep.subr.mxu0 0.0
    %1051 = vmatpush2.msra.mxu0 0.0
    %1052 = vmatprep.subr.mxu0 0.0
    %1053 = vmatpush2.msra.mxu0 0.0
    %1054 = vmatprep.subr.mxu0 0.0
    %1055 = vmatpush2.msra.mxu0 0.0
    %1056 = vmatprep.subr.mxu0 0.0
    %1057 = vmatpush2.msra.mxu0 0.0
    %1058 = vmatprep.subr.mxu0 0.0
    %1059 = vmatpush2.msra.mxu0 0.0
    %1060 = vmatprep.subr.mxu0 0.0
    %1061 = vmatpush2.msra.mxu0 0.0
    %1062 = vmatprep.subr.mxu0 0.0
    %1063 = vmatpush2.msra.mxu0 0.0
    %1064 = vmatprep.subr.mxu0 0.0
    %1065 = vmatpush2.msra.mxu0 0.0
    %1066 = vmatprep.subr.mxu0 0.0
    %1067 = vmatpush2.msra.mxu0 0.0
    %1068 = vmatprep.subr.mxu0 0.0
    %1069 = vmatpush2.msra.mxu0 0.0
    %1070 = vmatprep.subr.mxu0 0.0
    %1071 = vmatpush2.msra.mxu0 0.0
    %1072 = vmatprep.subr.mxu0 0.0
    %1073 = vmatpush2.msra.mxu0 0.0
    %1074 = vmatprep.subr.mxu0 0.0
    %1075 = vmatpush2.msra.mxu0 0.0
    %1076 = vmatprep.mubr.f32.mxu0 0.0
    %1077 = vmatmul.mubr.f32.gmra.mxu0 %v1010
    %v1078 = vpop.f32.mrf.mxu0
    %v1079 = vadd.f32 %v1005, %v1078
    %v1080 = vpop.f32.mrf.mxu0
    %1081 = vdwg.mxu0
    %s1082 = scalar_lea.vmem [#allocation2], 16
    %1083 = vst [vmem:[%s1082] sm:$0xff] %v1079
    %1084 = vmax.xlane.f32.xlu0 %v1079
    %v1085 = vpop.xlane.xlu0 %1084
    %vm1086 = vcmp.eq.f32.partialorder %v1079, %v1085
    %v1087 = vsel %vm1086, %v672, 128
    %v1088 = vand.u32 %v1087, 65535
    %v1089 = vshra.s32 %v1087, 16
    %v1090 = vcvt.s32.f32 %v1088
    %v1091 = vcvt.s32.f32 %v1089
    %1092 = vmin.xlane.f32.xlu0 %v1091
    %v1093 = vpop.xlane.xlu0 %1092
    %vm1094 = vcmp.eq.f32.partialorder %v1091, %v1093
    %v1095 = vsel %vm1094, %v1090, inf
    %1096 = vmin.xlane.f32.xlu0 %v1095
    %v1097 = vpop.xlane.xlu0 %1096
    %v1098 = vcvt.f32.s32 %v1097
    %v1099 = vcvt.f32.s32 %v1093
    %v1100 = vshll.u32 %v1099, 16
    %v1101 = vadd.s32 %v1100, %v1098
    %vm1102 = vcmp.eq.s32.totalorder %v672, %v1101
    %v1103 = vsel %vm1102, 1, 0
    %v1104 = vcvt.s32.f32 %v1103
    %v1105 = vld [vmem:[%s2] sm:$0xff]
    %v1106 = vld [vmem:[%s2 + $0x8] sm:$0xff]
    %v1107 = vld [vmem:[%s2 + $0x10] sm:$0xff]
    %v1108 = vld [vmem:[%s2 + $0x18] sm:$0xff]
    %v1109 = vld [vmem:[%s2 + $0x20] sm:$0xff]
    %v1110 = vld [vmem:[%s2 + $0x28] sm:$0xff]
    %v1111 = vld [vmem:[%s2 + $0x30] sm:$0xff]
    %v1112 = vld [vmem:[%s2 + $0x38] sm:$0xff]
    %v1113 = vld [vmem:[%s2 + $0x40] sm:$0xff]
    %v1114 = vld [vmem:[%s2 + $0x48] sm:$0xff]
    %v1115 = vld [vmem:[%s2 + $0x50] sm:$0xff]
    %v1116 = vld [vmem:[%s2 + $0x58] sm:$0xff]
    %v1117 = vld [vmem:[%s2 + $0x60] sm:$0xff]
    %v1118 = vld [vmem:[%s2 + $0x68] sm:$0xff]
    %v1119 = vld [vmem:[%s2 + $0x70] sm:$0xff]
    %v1120 = vld [vmem:[%s2 + $0x78] sm:$0xff]
    %1121 = vmatprep.subr.mxu0 0.0
    %1122 = vmatpush1.msra.mxu0 %v1120
    %1123 = vmatprep.subr.mxu0 0.0
    %1124 = vmatpush1.msra.mxu0 %v1119
    %1125 = vmatprep.subr.mxu0 0.0
    %1126 = vmatpush1.msra.mxu0 %v1118
    %1127 = vmatprep.subr.mxu0 0.0
    %1128 = vmatpush1.msra.mxu0 %v1117
    %1129 = vmatprep.subr.mxu0 0.0
    %1130 = vmatpush1.msra.mxu0 %v1116
    %1131 = vmatprep.subr.mxu0 0.0
    %1132 = vmatpush1.msra.mxu0 %v1115
    %1133 = vmatprep.subr.mxu0 0.0
    %1134 = vmatpush1.msra.mxu0 %v1114
    %1135 = vmatprep.subr.mxu0 0.0
    %1136 = vmatpush1.msra.mxu0 %v1113
    %1137 = vmatprep.subr.mxu0 0.0
    %1138 = vmatpush1.msra.mxu0 %v1112
    %1139 = vmatprep.subr.mxu0 0.0
    %1140 = vmatpush1.msra.mxu0 %v1111
    %1141 = vmatprep.subr.mxu0 0.0
    %1142 = vmatpush1.msra.mxu0 %v1110
    %1143 = vmatprep.subr.mxu0 0.0
    %1144 = vmatpush1.msra.mxu0 %v1109
    %1145 = vmatprep.subr.mxu0 0.0
    %1146 = vmatpush1.msra.mxu0 %v1108
    %1147 = vmatprep.subr.mxu0 0.0
    %1148 = vmatpush1.msra.mxu0 %v1107
    %1149 = vmatprep.subr.mxu0 0.0
    %1150 = vmatpush1.msra.mxu0 %v1106
    %1151 = vmatprep.subr.mxu0 0.0
    %1152 = vmatpush1.msra.mxu0 %v1105
    %1153 = vmatprep.subr.mxu0 0.0
    %1154 = vmatpush2.msra.mxu0 0.0
    %1155 = vmatprep.subr.mxu0 0.0
    %1156 = vmatpush2.msra.mxu0 0.0
    %1157 = vmatprep.subr.mxu0 0.0
    %1158 = vmatpush2.msra.mxu0 0.0
    %1159 = vmatprep.subr.mxu0 0.0
    %1160 = vmatpush2.msra.mxu0 0.0
    %1161 = vmatprep.subr.mxu0 0.0
    %1162 = vmatpush2.msra.mxu0 0.0
    %1163 = vmatprep.subr.mxu0 0.0
    %1164 = vmatpush2.msra.mxu0 0.0
    %1165 = vmatprep.subr.mxu0 0.0
    %1166 = vmatpush2.msra.mxu0 0.0
    %1167 = vmatprep.subr.mxu0 0.0
    %1168 = vmatpush2.msra.mxu0 0.0
    %1169 = vmatprep.subr.mxu0 0.0
    %1170 = vmatpush2.msra.mxu0 0.0
    %1171 = vmatprep.subr.mxu0 0.0
    %1172 = vmatpush2.msra.mxu0 0.0
    %1173 = vmatprep.subr.mxu0 0.0
    %1174 = vmatpush2.msra.mxu0 0.0
    %1175 = vmatprep.subr.mxu0 0.0
    %1176 = vmatpush2.msra.mxu0 0.0
    %1177 = vmatprep.subr.mxu0 0.0
    %1178 = vmatpush2.msra.mxu0 0.0
    %1179 = vmatprep.subr.mxu0 0.0
    %1180 = vmatpush2.msra.mxu0 0.0
    %1181 = vmatprep.subr.mxu0 0.0
    %1182 = vmatpush2.msra.mxu0 0.0
    %1183 = vmatprep.subr.mxu0 0.0
    %1184 = vmatpush2.msra.mxu0 0.0
    %1185 = vmatprep.mubr.f32.mxu0 0.0
    %1186 = vmatmul.mubr.f32.gmra.mxu0 %v1104
    %v1187 = vpop.f32.mrf.mxu0
    %v1188 = vadd.f32 0.0, %v1187
    %v1189 = vpop.f32.mrf.mxu0
    %1190 = vdwg.mxu0
    %1191 = vrot.lane.b32.xlu0 %v995, 64
    %v1192 = vpop.permute.xlu0 %1191
    %v1194 = vsel %vm34, %v1188, %v1192
    %v1195 = vld [vmem:[%s5] sm:$0xff]
    %v1196 = vld [vmem:[%s5 + $0x8] sm:$0xff]
    %v1197 = vld [vmem:[%s5 + $0x10] sm:$0xff]
    %v1198 = vld [vmem:[%s5 + $0x18] sm:$0xff]
    %v1199 = vld [vmem:[%s5 + $0x20] sm:$0xff]
    %v1200 = vld [vmem:[%s5 + $0x28] sm:$0xff]
    %v1201 = vld [vmem:[%s5 + $0x30] sm:$0xff]
    %v1202 = vld [vmem:[%s5 + $0x38] sm:$0xff]
    %v1203 = vld [vmem:[%s6] sm:$0x1]
    %v1205 = vlaneseq
    %v1206 = vshrl.u32 %v1205, 7
    %v1207 = vsub.s32 0, %v1206
    %v1208 = vrot.slane %v1203, %v1207
    %v1211 = vsel %vm51, %v1194, 0
    %1213 = vmatprep.subr.mxu0 0.0
    %1214 = vmatpush1.msra.mxu0 0.0
    %1215 = vmatprep.subr.mxu0 0.0
    %1216 = vmatpush1.msra.mxu0 0.0
    %1217 = vmatprep.subr.mxu0 0.0
    %1218 = vmatpush1.msra.mxu0 0.0
    %1219 = vmatprep.subr.mxu0 0.0
    %1220 = vmatpush1.msra.mxu0 0.0
    %1221 = vmatprep.subr.mxu0 0.0
    %1222 = vmatpush1.msra.mxu0 0.0
    %1223 = vmatprep.subr.mxu0 0.0
    %1224 = vmatpush1.msra.mxu0 0.0
    %1225 = vmatprep.subr.mxu0 0.0
    %1226 = vmatpush1.msra.mxu0 0.0
    %1227 = vmatprep.subr.mxu0 0.0
    %1228 = vmatpush1.msra.mxu0 0.0
    %1229 = vmatprep.subr.mxu0 0.0
    %1230 = vmatpush1.msra.mxu0 %v1202
    %1231 = vmatprep.subr.mxu0 0.0
    %1232 = vmatpush1.msra.mxu0 %v1201
    %1233 = vmatprep.subr.mxu0 0.0
    %1234 = vmatpush1.msra.mxu0 %v1200
    %1235 = vmatprep.subr.mxu0 0.0
    %1236 = vmatpush1.msra.mxu0 %v1199
    %1237 = vmatprep.subr.mxu0 0.0
    %1238 = vmatpush1.msra.mxu0 %v1198
    %1239 = vmatprep.subr.mxu0 0.0
    %1240 = vmatpush1.msra.mxu0 %v1197
    %1241 = vmatprep.subr.mxu0 0.0
    %1242 = vmatpush1.msra.mxu0 %v1196
    %1243 = vmatprep.subr.mxu0 0.0
    %1244 = vmatpush1.msra.mxu0 %v1195
    %1245 = vmatprep.subr.mxu0 0.0
    %1246 = vmatpush2.msra.mxu0 0.0
    %1247 = vmatprep.subr.mxu0 0.0
    %1248 = vmatpush2.msra.mxu0 0.0
    %1249 = vmatprep.subr.mxu0 0.0
    %1250 = vmatpush2.msra.mxu0 0.0
    %1251 = vmatprep.subr.mxu0 0.0
    %1252 = vmatpush2.msra.mxu0 0.0
    %1253 = vmatprep.subr.mxu0 0.0
    %1254 = vmatpush2.msra.mxu0 0.0
    %1255 = vmatprep.subr.mxu0 0.0
    %1256 = vmatpush2.msra.mxu0 0.0
    %1257 = vmatprep.subr.mxu0 0.0
    %1258 = vmatpush2.msra.mxu0 0.0
    %1259 = vmatprep.subr.mxu0 0.0
    %1260 = vmatpush2.msra.mxu0 0.0
    %1261 = vmatprep.subr.mxu0 0.0
    %1262 = vmatpush2.msra.mxu0 0.0
    %1263 = vmatprep.subr.mxu0 0.0
    %1264 = vmatpush2.msra.mxu0 0.0
    %1265 = vmatprep.subr.mxu0 0.0
    %1266 = vmatpush2.msra.mxu0 0.0
    %1267 = vmatprep.subr.mxu0 0.0
    %1268 = vmatpush2.msra.mxu0 0.0
    %1269 = vmatprep.subr.mxu0 0.0
    %1270 = vmatpush2.msra.mxu0 0.0
    %1271 = vmatprep.subr.mxu0 0.0
    %1272 = vmatpush2.msra.mxu0 0.0
    %1273 = vmatprep.subr.mxu0 0.0
    %1274 = vmatpush2.msra.mxu0 0.0
    %1275 = vmatprep.subr.mxu0 0.0
    %1276 = vmatpush2.msra.mxu0 0.0
    %1277 = vmatprep.mubr.f32.mxu0 0.0
    %1278 = vmatmul.mubr.f32.gmra.mxu0 %v1211
    %v1279 = vpop.f32.mrf.mxu0
    %v1280 = vadd.f32 %v1208, %v1279
    %v1281 = vpop.f32.mrf.mxu0
    %1282 = vdwg.mxu0
    %v1283 = vxor.u32 %v1280, 2147483648
    %v1284 = vmul.f32 %v1283, 1.442695
    %v1285 = vpow.pop %v1284
    %v1286 = vadd.f32 %v1285, 1.0
    %v1287 = vrcp.pop %v1286
    %v1288 = vmul.f32 1.0, %v1287
    %v1289 = vtanh.pop %v1280
    %v1290 = vmul.f32 %v1288, %v989
    %1292 = vrot.lane.b32.xlu0 %v1289, 64
    %v1293 = vpop.permute.xlu0 %1292
    %v1295 = vmul.f32 %v1288, %v1293
    %1297 = vrot.lane.b32.xlu0 %v1295, 32
    %v1298 = vpop.permute.xlu0 %1297
    %v1300 = vadd.f32 %v1290, %v1298
    %v1301 = vtanh.pop %v1300
    %1303 = vrot.lane.b32.xlu0 %v1301, 64
    %v1304 = vpop.permute.xlu0 %1303
    %v1306 = vmul.f32 %v1288, %v1304
    %v1307 = vld [vmem:[%s7] sm:$0xff]
    %v1308 = vld [vmem:[%s7 + $0x8] sm:$0xff]
    %v1309 = vld [vmem:[%s7 + $0x10] sm:$0xff]
    %v1310 = vld [vmem:[%s7 + $0x18] sm:$0xff]
    %v1311 = vld [vmem:[%s8] sm:$0x1]
    %v1313 = vlaneseq
    %v1314 = vshrl.u32 %v1313, 7
    %v1315 = vsub.s32 0, %v1314
    %v1316 = vrot.slane %v1311, %v1315
    %1319 = vrot.lane.b32.xlu0 %v1306, 32
    %v1320 = vpop.permute.xlu0 %1319
    %v1321 = vsel %vm34, %v1320, 0
    %1323 = vmatprep.subr.mxu0 0.0
    %1324 = vmatpush1.msra.mxu0 0.0
    %1325 = vmatprep.subr.mxu0 0.0
    %1326 = vmatpush1.msra.mxu0 0.0
    %1327 = vmatprep.subr.mxu0 0.0
    %1328 = vmatpush1.msra.mxu0 0.0
    %1329 = vmatprep.subr.mxu0 0.0
    %1330 = vmatpush1.msra.mxu0 0.0
    %1331 = vmatprep.subr.mxu0 0.0
    %1332 = vmatpush1.msra.mxu0 0.0
    %1333 = vmatprep.subr.mxu0 0.0
    %1334 = vmatpush1.msra.mxu0 0.0
    %1335 = vmatprep.subr.mxu0 0.0
    %1336 = vmatpush1.msra.mxu0 0.0
    %1337 = vmatprep.subr.mxu0 0.0
    %1338 = vmatpush1.msra.mxu0 0.0
    %1339 = vmatprep.subr.mxu0 0.0
    %1340 = vmatpush1.msra.mxu0 0.0
    %1341 = vmatprep.subr.mxu0 0.0
    %1342 = vmatpush1.msra.mxu0 0.0
    %1343 = vmatprep.subr.mxu0 0.0
    %1344 = vmatpush1.msra.mxu0 0.0
    %1345 = vmatprep.subr.mxu0 0.0
    %1346 = vmatpush1.msra.mxu0 0.0
    %1347 = vmatprep.subr.mxu0 0.0
    %1348 = vmatpush1.msra.mxu0 %v1310
    %1349 = vmatprep.subr.mxu0 0.0
    %1350 = vmatpush1.msra.mxu0 %v1309
    %1351 = vmatprep.subr.mxu0 0.0
    %1352 = vmatpush1.msra.mxu0 %v1308
    %1353 = vmatprep.subr.mxu0 0.0
    %1354 = vmatpush1.msra.mxu0 %v1307
    %1355 = vmatprep.subr.mxu0 0.0
    %1356 = vmatpush2.msra.mxu0 0.0
    %1357 = vmatprep.subr.mxu0 0.0
    %1358 = vmatpush2.msra.mxu0 0.0
    %1359 = vmatprep.subr.mxu0 0.0
    %1360 = vmatpush2.msra.mxu0 0.0
    %1361 = vmatprep.subr.mxu0 0.0
    %1362 = vmatpush2.msra.mxu0 0.0
    %1363 = vmatprep.subr.mxu0 0.0
    %1364 = vmatpush2.msra.mxu0 0.0
    %1365 = vmatprep.subr.mxu0 0.0
    %1366 = vmatpush2.msra.mxu0 0.0
    %1367 = vmatprep.subr.mxu0 0.0
    %1368 = vmatpush2.msra.mxu0 0.0
    %1369 = vmatprep.subr.mxu0 0.0
    %1370 = vmatpush2.msra.mxu0 0.0
    %1371 = vmatprep.subr.mxu0 0.0
    %1372 = vmatpush2.msra.mxu0 0.0
    %1373 = vmatprep.subr.mxu0 0.0
    %1374 = vmatpush2.msra.mxu0 0.0
    %1375 = vmatprep.subr.mxu0 0.0
    %1376 = vmatpush2.msra.mxu0 0.0
    %1377 = vmatprep.subr.mxu0 0.0
    %1378 = vmatpush2.msra.mxu0 0.0
    %1379 = vmatprep.subr.mxu0 0.0
    %1380 = vmatpush2.msra.mxu0 0.0
    %1381 = vmatprep.subr.mxu0 0.0
    %1382 = vmatpush2.msra.mxu0 0.0
    %1383 = vmatprep.subr.mxu0 0.0
    %1384 = vmatpush2.msra.mxu0 0.0
    %1385 = vmatprep.subr.mxu0 0.0
    %1386 = vmatpush2.msra.mxu0 0.0
    %1387 = vmatprep.mubr.f32.mxu0 0.0
    %1388 = vmatmul.mubr.f32.gmra.mxu0 %v1321
    %v1389 = vpop.f32.mrf.mxu0
    %v1390 = vadd.f32 %v1316, %v1389
    %v1391 = vpop.f32.mrf.mxu0
    %1392 = vdwg.mxu0
    %s1393 = scalar_lea.vmem [#allocation2], 24
    %1394 = vst [vmem:[%s1393] sm:$0xff] %v1390
    %s1395 = scalar_lea.vmem %s1, 24
    %v1396 = vld [vmem:[%s1395] sm:$0xff]
    %1397 = vrot.lane.b32.xlu0 %v1306, 64
    %v1398 = vpop.permute.xlu0 %1397
    %v1400 = vsel %vm34, %v1396, %v1398
    %v1401 = vld [vmem:[%s5] sm:$0xff]
    %v1402 = vld [vmem:[%s5 + $0x8] sm:$0xff]
    %v1403 = vld [vmem:[%s5 + $0x10] sm:$0xff]
    %v1404 = vld [vmem:[%s5 + $0x18] sm:$0xff]
    %v1405 = vld [vmem:[%s5 + $0x20] sm:$0xff]
    %v1406 = vld [vmem:[%s5 + $0x28] sm:$0xff]
    %v1407 = vld [vmem:[%s5 + $0x30] sm:$0xff]
    %v1408 = vld [vmem:[%s5 + $0x38] sm:$0xff]
    %v1409 = vld [vmem:[%s6] sm:$0x1]
    %v1411 = vlaneseq
    %v1412 = vshrl.u32 %v1411, 7
    %v1413 = vsub.s32 0, %v1412
    %v1414 = vrot.slane %v1409, %v1413
    %v1417 = vsel %vm51, %v1400, 0
    %1419 = vmatprep.subr.mxu0 0.0
    %1420 = vmatpush1.msra.mxu0 0.0
    %1421 = vmatprep.subr.mxu0 0.0
    %1422 = vmatpush1.msra.mxu0 0.0
    %1423 = vmatprep.subr.mxu0 0.0
    %1424 = vmatpush1.msra.mxu0 0.0
    %1425 = vmatprep.subr.mxu0 0.0
    %1426 = vmatpush1.msra.mxu0 0.0
    %1427 = vmatprep.subr.mxu0 0.0
    %1428 = vmatpush1.msra.mxu0 0.0
    %1429 = vmatprep.subr.mxu0 0.0
    %1430 = vmatpush1.msra.mxu0 0.0
    %1431 = vmatprep.subr.mxu0 0.0
    %1432 = vmatpush1.msra.mxu0 0.0
    %1433 = vmatprep.subr.mxu0 0.0
    %1434 = vmatpush1.msra.mxu0 0.0
    %1435 = vmatprep.subr.mxu0 0.0
    %1436 = vmatpush1.msra.mxu0 %v1408
    %1437 = vmatprep.subr.mxu0 0.0
    %1438 = vmatpush1.msra.mxu0 %v1407
    %1439 = vmatprep.subr.mxu0 0.0
    %1440 = vmatpush1.msra.mxu0 %v1406
    %1441 = vmatprep.subr.mxu0 0.0
    %1442 = vmatpush1.msra.mxu0 %v1405
    %1443 = vmatprep.subr.mxu0 0.0
    %1444 = vmatpush1.msra.mxu0 %v1404
    %1445 = vmatprep.subr.mxu0 0.0
    %1446 = vmatpush1.msra.mxu0 %v1403
    %1447 = vmatprep.subr.mxu0 0.0
    %1448 = vmatpush1.msra.mxu0 %v1402
    %1449 = vmatprep.subr.mxu0 0.0
    %1450 = vmatpush1.msra.mxu0 %v1401
    %1451 = vmatprep.subr.mxu0 0.0
    %1452 = vmatpush2.msra.mxu0 0.0
    %1453 = vmatprep.subr.mxu0 0.0
    %1454 = vmatpush2.msra.mxu0 0.0
    %1455 = vmatprep.subr.mxu0 0.0
    %1456 = vmatpush2.msra.mxu0 0.0
    %1457 = vmatprep.subr.mxu0 0.0
    %1458 = vmatpush2.msra.mxu0 0.0
    %1459 = vmatprep.subr.mxu0 0.0
    %1460 = vmatpush2.msra.mxu0 0.0
    %1461 = vmatprep.subr.mxu0 0.0
    %1462 = vmatpush2.msra.mxu0 0.0
    %1463 = vmatprep.subr.mxu0 0.0
    %1464 = vmatpush2.msra.mxu0 0.0
    %1465 = vmatprep.subr.mxu0 0.0
    %1466 = vmatpush2.msra.mxu0 0.0
    %1467 = vmatprep.subr.mxu0 0.0
    %1468 = vmatpush2.msra.mxu0 0.0
    %1469 = vmatprep.subr.mxu0 0.0
    %1470 = vmatpush2.msra.mxu0 0.0
    %1471 = vmatprep.subr.mxu0 0.0
    %1472 = vmatpush2.msra.mxu0 0.0
    %1473 = vmatprep.subr.mxu0 0.0
    %1474 = vmatpush2.msra.mxu0 0.0
    %1475 = vmatprep.subr.mxu0 0.0
    %1476 = vmatpush2.msra.mxu0 0.0
    %1477 = vmatprep.subr.mxu0 0.0
    %1478 = vmatpush2.msra.mxu0 0.0
    %1479 = vmatprep.subr.mxu0 0.0
    %1480 = vmatpush2.msra.mxu0 0.0
    %1481 = vmatprep.subr.mxu0 0.0
    %1482 = vmatpush2.msra.mxu0 0.0
    %1483 = vmatprep.mubr.f32.mxu0 0.0
    %1484 = vmatmul.mubr.f32.gmra.mxu0 %v1417
    %v1485 = vpop.f32.mrf.mxu0
    %v1486 = vadd.f32 %v1414, %v1485
    %v1487 = vpop.f32.mrf.mxu0
    %1488 = vdwg.mxu0
    %v1489 = vxor.u32 %v1486, 2147483648
    %v1490 = vmul.f32 %v1489, 1.442695
    %v1491 = vpow.pop %v1490
    %v1492 = vadd.f32 %v1491, 1.0
    %v1493 = vrcp.pop %v1492
    %v1494 = vmul.f32 1.0, %v1493
    %v1495 = vtanh.pop %v1486
    %v1496 = vmul.f32 %v1494, %v1300
    %1498 = vrot.lane.b32.xlu0 %v1495, 64
    %v1499 = vpop.permute.xlu0 %1498
    %v1501 = vmul.f32 %v1494, %v1499
    %1503 = vrot.lane.b32.xlu0 %v1501, 32
    %v1504 = vpop.permute.xlu0 %1503
    %v1506 = vadd.f32 %v1496, %v1504
    %v1507 = vtanh.pop %v1506
    %1509 = vrot.lane.b32.xlu0 %v1507, 64
    %v1510 = vpop.permute.xlu0 %1509
    %v1512 = vmul.f32 %v1494, %v1510
    %v1513 = vld [vmem:[%s7] sm:$0xff]
    %v1514 = vld [vmem:[%s7 + $0x8] sm:$0xff]
    %v1515 = vld [vmem:[%s7 + $0x10] sm:$0xff]
    %v1516 = vld [vmem:[%s7 + $0x18] sm:$0xff]
    %v1517 = vld [vmem:[%s8] sm:$0x1]
    %v1519 = vlaneseq
    %v1520 = vshrl.u32 %v1519, 7
    %v1521 = vsub.s32 0, %v1520
    %v1522 = vrot.slane %v1517, %v1521
    %1525 = vrot.lane.b32.xlu0 %v1512, 32
    %v1526 = vpop.permute.xlu0 %1525
    %v1527 = vsel %vm34, %v1526, 0
    %1529 = vmatprep.subr.mxu0 0.0
    %1530 = vmatpush1.msra.mxu0 0.0
    %1531 = vmatprep.subr.mxu0 0.0
    %1532 = vmatpush1.msra.mxu0 0.0
    %1533 = vmatprep.subr.mxu0 0.0
    %1534 = vmatpush1.msra.mxu0 0.0
    %1535 = vmatprep.subr.mxu0 0.0
    %1536 = vmatpush1.msra.mxu0 0.0
    %1537 = vmatprep.subr.mxu0 0.0
    %1538 = vmatpush1.msra.mxu0 0.0
    %1539 = vmatprep.subr.mxu0 0.0
    %1540 = vmatpush1.msra.mxu0 0.0
    %1541 = vmatprep.subr.mxu0 0.0
    %1542 = vmatpush1.msra.mxu0 0.0
    %1543 = vmatprep.subr.mxu0 0.0
    %1544 = vmatpush1.msra.mxu0 0.0
    %1545 = vmatprep.subr.mxu0 0.0
    %1546 = vmatpush1.msra.mxu0 0.0
    %1547 = vmatprep.subr.mxu0 0.0
    %1548 = vmatpush1.msra.mxu0 0.0
    %1549 = vmatprep.subr.mxu0 0.0
    %1550 = vmatpush1.msra.mxu0 0.0
    %1551 = vmatprep.subr.mxu0 0.0
    %1552 = vmatpush1.msra.mxu0 0.0
    %1553 = vmatprep.subr.mxu0 0.0
    %1554 = vmatpush1.msra.mxu0 %v1516
    %1555 = vmatprep.subr.mxu0 0.0
    %1556 = vmatpush1.msra.mxu0 %v1515
    %1557 = vmatprep.subr.mxu0 0.0
    %1558 = vmatpush1.msra.mxu0 %v1514
    %1559 = vmatprep.subr.mxu0 0.0
    %1560 = vmatpush1.msra.mxu0 %v1513
    %1561 = vmatprep.subr.mxu0 0.0
    %1562 = vmatpush2.msra.mxu0 0.0
    %1563 = vmatprep.subr.mxu0 0.0
    %1564 = vmatpush2.msra.mxu0 0.0
    %1565 = vmatprep.subr.mxu0 0.0
    %1566 = vmatpush2.msra.mxu0 0.0
    %1567 = vmatprep.subr.mxu0 0.0
    %1568 = vmatpush2.msra.mxu0 0.0
    %1569 = vmatprep.subr.mxu0 0.0
    %1570 = vmatpush2.msra.mxu0 0.0
    %1571 = vmatprep.subr.mxu0 0.0
    %1572 = vmatpush2.msra.mxu0 0.0
    %1573 = vmatprep.subr.mxu0 0.0
    %1574 = vmatpush2.msra.mxu0 0.0
    %1575 = vmatprep.subr.mxu0 0.0
    %1576 = vmatpush2.msra.mxu0 0.0
    %1577 = vmatprep.subr.mxu0 0.0
    %1578 = vmatpush2.msra.mxu0 0.0
    %1579 = vmatprep.subr.mxu0 0.0
    %1580 = vmatpush2.msra.mxu0 0.0
    %1581 = vmatprep.subr.mxu0 0.0
    %1582 = vmatpush2.msra.mxu0 0.0
    %1583 = vmatprep.subr.mxu0 0.0
    %1584 = vmatpush2.msra.mxu0 0.0
    %1585 = vmatprep.subr.mxu0 0.0
    %1586 = vmatpush2.msra.mxu0 0.0
    %1587 = vmatprep.subr.mxu0 0.0
    %1588 = vmatpush2.msra.mxu0 0.0
    %1589 = vmatprep.subr.mxu0 0.0
    %1590 = vmatpush2.msra.mxu0 0.0
    %1591 = vmatprep.subr.mxu0 0.0
    %1592 = vmatpush2.msra.mxu0 0.0
    %1593 = vmatprep.mubr.f32.mxu0 0.0
    %1594 = vmatmul.mubr.f32.gmra.mxu0 %v1527
    %v1595 = vpop.f32.mrf.mxu0
    %v1596 = vadd.f32 %v1522, %v1595
    %v1597 = vpop.f32.mrf.mxu0
    %1598 = vdwg.mxu0
    %s1599 = scalar_lea.vmem [#allocation2], 32
    %1600 = vst [vmem:[%s1599] sm:$0xff] %v1596
    %1601 = vmax.xlane.f32.xlu0 %v1596
    %v1602 = vpop.xlane.xlu0 %1601
    %vm1603 = vcmp.eq.f32.partialorder %v1596, %v1602
    %v1604 = vsel %vm1603, %v672, 128
    %v1605 = vand.u32 %v1604, 65535
    %v1606 = vshra.s32 %v1604, 16
    %v1607 = vcvt.s32.f32 %v1605
    %v1608 = vcvt.s32.f32 %v1606
    %1609 = vmin.xlane.f32.xlu0 %v1608
    %v1610 = vpop.xlane.xlu0 %1609
    %vm1611 = vcmp.eq.f32.partialorder %v1608, %v1610
    %v1612 = vsel %vm1611, %v1607, inf
    %1613 = vmin.xlane.f32.xlu0 %v1612
    %v1614 = vpop.xlane.xlu0 %1613
    %v1615 = vcvt.f32.s32 %v1614
    %v1616 = vcvt.f32.s32 %v1610
    %v1617 = vshll.u32 %v1616, 16
    %v1618 = vadd.s32 %v1617, %v1615
    %vm1619 = vcmp.eq.s32.totalorder %v672, %v1618
    %v1620 = vsel %vm1619, 1, 0
    %v1621 = vcvt.s32.f32 %v1620
    %v1622 = vld [vmem:[%s2] sm:$0xff]
    %v1623 = vld [vmem:[%s2 + $0x8] sm:$0xff]
    %v1624 = vld [vmem:[%s2 + $0x10] sm:$0xff]
    %v1625 = vld [vmem:[%s2 + $0x18] sm:$0xff]
    %v1626 = vld [vmem:[%s2 + $0x20] sm:$0xff]
    %v1627 = vld [vmem:[%s2 + $0x28] sm:$0xff]
    %v1628 = vld [vmem:[%s2 + $0x30] sm:$0xff]
    %v1629 = vld [vmem:[%s2 + $0x38] sm:$0xff]
    %v1630 = vld [vmem:[%s2 + $0x40] sm:$0xff]
    %v1631 = vld [vmem:[%s2 + $0x48] sm:$0xff]
    %v1632 = vld [vmem:[%s2 + $0x50] sm:$0xff]
    %v1633 = vld [vmem:[%s2 + $0x58] sm:$0xff]
    %v1634 = vld [vmem:[%s2 + $0x60] sm:$0xff]
    %v1635 = vld [vmem:[%s2 + $0x68] sm:$0xff]
    %v1636 = vld [vmem:[%s2 + $0x70] sm:$0xff]
    %v1637 = vld [vmem:[%s2 + $0x78] sm:$0xff]
    %1638 = vmatprep.subr.mxu0 0.0
    %1639 = vmatpush1.msra.mxu0 %v1637
    %1640 = vmatprep.subr.mxu0 0.0
    %1641 = vmatpush1.msra.mxu0 %v1636
    %1642 = vmatprep.subr.mxu0 0.0
    %1643 = vmatpush1.msra.mxu0 %v1635
    %1644 = vmatprep.subr.mxu0 0.0
    %1645 = vmatpush1.msra.mxu0 %v1634
    %1646 = vmatprep.subr.mxu0 0.0
    %1647 = vmatpush1.msra.mxu0 %v1633
    %1648 = vmatprep.subr.mxu0 0.0
    %1649 = vmatpush1.msra.mxu0 %v1632
    %1650 = vmatprep.subr.mxu0 0.0
    %1651 = vmatpush1.msra.mxu0 %v1631
    %1652 = vmatprep.subr.mxu0 0.0
    %1653 = vmatpush1.msra.mxu0 %v1630
    %1654 = vmatprep.subr.mxu0 0.0
    %1655 = vmatpush1.msra.mxu0 %v1629
    %1656 = vmatprep.subr.mxu0 0.0
    %1657 = vmatpush1.msra.mxu0 %v1628
    %1658 = vmatprep.subr.mxu0 0.0
    %1659 = vmatpush1.msra.mxu0 %v1627
    %1660 = vmatprep.subr.mxu0 0.0
    %1661 = vmatpush1.msra.mxu0 %v1626
    %1662 = vmatprep.subr.mxu0 0.0
    %1663 = vmatpush1.msra.mxu0 %v1625
    %1664 = vmatprep.subr.mxu0 0.0
    %1665 = vmatpush1.msra.mxu0 %v1624
    %1666 = vmatprep.subr.mxu0 0.0
    %1667 = vmatpush1.msra.mxu0 %v1623
    %1668 = vmatprep.subr.mxu0 0.0
    %1669 = vmatpush1.msra.mxu0 %v1622
    %1670 = vmatprep.subr.mxu0 0.0
    %1671 = vmatpush2.msra.mxu0 0.0
    %1672 = vmatprep.subr.mxu0 0.0
    %1673 = vmatpush2.msra.mxu0 0.0
    %1674 = vmatprep.subr.mxu0 0.0
    %1675 = vmatpush2.msra.mxu0 0.0
    %1676 = vmatprep.subr.mxu0 0.0
    %1677 = vmatpush2.msra.mxu0 0.0
    %1678 = vmatprep.subr.mxu0 0.0
    %1679 = vmatpush2.msra.mxu0 0.0
    %1680 = vmatprep.subr.mxu0 0.0
    %1681 = vmatpush2.msra.mxu0 0.0
    %1682 = vmatprep.subr.mxu0 0.0
    %1683 = vmatpush2.msra.mxu0 0.0
    %1684 = vmatprep.subr.mxu0 0.0
    %1685 = vmatpush2.msra.mxu0 0.0
    %1686 = vmatprep.subr.mxu0 0.0
    %1687 = vmatpush2.msra.mxu0 0.0
    %1688 = vmatprep.subr.mxu0 0.0
    %1689 = vmatpush2.msra.mxu0 0.0
    %1690 = vmatprep.subr.mxu0 0.0
    %1691 = vmatpush2.msra.mxu0 0.0
    %1692 = vmatprep.subr.mxu0 0.0
    %1693 = vmatpush2.msra.mxu0 0.0
    %1694 = vmatprep.subr.mxu0 0.0
    %1695 = vmatpush2.msra.mxu0 0.0
    %1696 = vmatprep.subr.mxu0 0.0
    %1697 = vmatpush2.msra.mxu0 0.0
    %1698 = vmatprep.subr.mxu0 0.0
    %1699 = vmatpush2.msra.mxu0 0.0
    %1700 = vmatprep.subr.mxu0 0.0
    %1701 = vmatpush2.msra.mxu0 0.0
    %1702 = vmatprep.mubr.f32.mxu0 0.0
    %1703 = vmatmul.mubr.f32.gmra.mxu0 %v1621
    %v1704 = vpop.f32.mrf.mxu0
    %v1705 = vadd.f32 0.0, %v1704
    %v1706 = vpop.f32.mrf.mxu0
    %1707 = vdwg.mxu0
    %1708 = vrot.lane.b32.xlu0 %v1512, 64
    %v1709 = vpop.permute.xlu0 %1708
    %v1711 = vsel %vm34, %v1705, %v1709
    %v1712 = vld [vmem:[%s5] sm:$0xff]
    %v1713 = vld [vmem:[%s5 + $0x8] sm:$0xff]
    %v1714 = vld [vmem:[%s5 + $0x10] sm:$0xff]
    %v1715 = vld [vmem:[%s5 + $0x18] sm:$0xff]
    %v1716 = vld [vmem:[%s5 + $0x20] sm:$0xff]
    %v1717 = vld [vmem:[%s5 + $0x28] sm:$0xff]
    %v1718 = vld [vmem:[%s5 + $0x30] sm:$0xff]
    %v1719 = vld [vmem:[%s5 + $0x38] sm:$0xff]
    %v1720 = vld [vmem:[%s6] sm:$0x1]
    %v1722 = vlaneseq
    %v1723 = vshrl.u32 %v1722, 7
    %v1724 = vsub.s32 0, %v1723
    %v1725 = vrot.slane %v1720, %v1724
    %v1728 = vsel %vm51, %v1711, 0
    %1730 = vmatprep.subr.mxu0 0.0
    %1731 = vmatpush1.msra.mxu0 0.0
    %1732 = vmatprep.subr.mxu0 0.0
    %1733 = vmatpush1.msra.mxu0 0.0
    %1734 = vmatprep.subr.mxu0 0.0
    %1735 = vmatpush1.msra.mxu0 0.0
    %1736 = vmatprep.subr.mxu0 0.0
    %1737 = vmatpush1.msra.mxu0 0.0
    %1738 = vmatprep.subr.mxu0 0.0
    %1739 = vmatpush1.msra.mxu0 0.0
    %1740 = vmatprep.subr.mxu0 0.0
    %1741 = vmatpush1.msra.mxu0 0.0
    %1742 = vmatprep.subr.mxu0 0.0
    %1743 = vmatpush1.msra.mxu0 0.0
    %1744 = vmatprep.subr.mxu0 0.0
    %1745 = vmatpush1.msra.mxu0 0.0
    %1746 = vmatprep.subr.mxu0 0.0
    %1747 = vmatpush1.msra.mxu0 %v1719
    %1748 = vmatprep.subr.mxu0 0.0
    %1749 = vmatpush1.msra.mxu0 %v1718
    %1750 = vmatprep.subr.mxu0 0.0
    %1751 = vmatpush1.msra.mxu0 %v1717
    %1752 = vmatprep.subr.mxu0 0.0
    %1753 = vmatpush1.msra.mxu0 %v1716
    %1754 = vmatprep.subr.mxu0 0.0
    %1755 = vmatpush1.msra.mxu0 %v1715
    %1756 = vmatprep.subr.mxu0 0.0
    %1757 = vmatpush1.msra.mxu0 %v1714
    %1758 = vmatprep.subr.mxu0 0.0
    %1759 = vmatpush1.msra.mxu0 %v1713
    %1760 = vmatprep.subr.mxu0 0.0
    %1761 = vmatpush1.msra.mxu0 %v1712
    %1762 = vmatprep.subr.mxu0 0.0
    %1763 = vmatpush2.msra.mxu0 0.0
    %1764 = vmatprep.subr.mxu0 0.0
    %1765 = vmatpush2.msra.mxu0 0.0
    %1766 = vmatprep.subr.mxu0 0.0
    %1767 = vmatpush2.msra.mxu0 0.0
    %1768 = vmatprep.subr.mxu0 0.0
    %1769 = vmatpush2.msra.mxu0 0.0
    %1770 = vmatprep.subr.mxu0 0.0
    %1771 = vmatpush2.msra.mxu0 0.0
    %1772 = vmatprep.subr.mxu0 0.0
    %1773 = vmatpush2.msra.mxu0 0.0
    %1774 = vmatprep.subr.mxu0 0.0
    %1775 = vmatpush2.msra.mxu0 0.0
    %1776 = vmatprep.subr.mxu0 0.0
    %1777 = vmatpush2.msra.mxu0 0.0
    %1778 = vmatprep.subr.mxu0 0.0
    %1779 = vmatpush2.msra.mxu0 0.0
    %1780 = vmatprep.subr.mxu0 0.0
    %1781 = vmatpush2.msra.mxu0 0.0
    %1782 = vmatprep.subr.mxu0 0.0
    %1783 = vmatpush2.msra.mxu0 0.0
    %1784 = vmatprep.subr.mxu0 0.0
    %1785 = vmatpush2.msra.mxu0 0.0
    %1786 = vmatprep.subr.mxu0 0.0
    %1787 = vmatpush2.msra.mxu0 0.0
    %1788 = vmatprep.subr.mxu0 0.0
    %1789 = vmatpush2.msra.mxu0 0.0
    %1790 = vmatprep.subr.mxu0 0.0
    %1791 = vmatpush2.msra.mxu0 0.0
    %1792 = vmatprep.subr.mxu0 0.0
    %1793 = vmatpush2.msra.mxu0 0.0
    %1794 = vmatprep.mubr.f32.mxu0 0.0
    %1795 = vmatmul.mubr.f32.gmra.mxu0 %v1728
    %v1796 = vpop.f32.mrf.mxu0
    %v1797 = vadd.f32 %v1725, %v1796
    %v1798 = vpop.f32.mrf.mxu0
    %1799 = vdwg.mxu0
    %v1800 = vxor.u32 %v1797, 2147483648
    %v1801 = vmul.f32 %v1800, 1.442695
    %v1802 = vpow.pop %v1801
    %v1803 = vadd.f32 %v1802, 1.0
    %v1804 = vrcp.pop %v1803
    %v1805 = vmul.f32 1.0, %v1804
    %v1806 = vtanh.pop %v1797
    %v1807 = vmul.f32 %v1805, %v1506
    %1809 = vrot.lane.b32.xlu0 %v1806, 64
    %v1810 = vpop.permute.xlu0 %1809
    %v1812 = vmul.f32 %v1805, %v1810
    %1814 = vrot.lane.b32.xlu0 %v1812, 32
    %v1815 = vpop.permute.xlu0 %1814
    %v1817 = vadd.f32 %v1807, %v1815
    %v1818 = vtanh.pop %v1817
    %1820 = vrot.lane.b32.xlu0 %v1818, 64
    %v1821 = vpop.permute.xlu0 %1820
    %v1823 = vmul.f32 %v1805, %v1821
    %v1824 = vld [vmem:[%s7] sm:$0xff]
    %v1825 = vld [vmem:[%s7 + $0x8] sm:$0xff]
    %v1826 = vld [vmem:[%s7 + $0x10] sm:$0xff]
    %v1827 = vld [vmem:[%s7 + $0x18] sm:$0xff]
    %v1828 = vld [vmem:[%s8] sm:$0x1]
    %v1830 = vlaneseq
    %v1831 = vshrl.u32 %v1830, 7
    %v1832 = vsub.s32 0, %v1831
    %v1833 = vrot.slane %v1828, %v1832
    %1836 = vrot.lane.b32.xlu0 %v1823, 32
    %v1837 = vpop.permute.xlu0 %1836
    %v1838 = vsel %vm34, %v1837, 0
    %1840 = vmatprep.subr.mxu0 0.0
    %1841 = vmatpush1.msra.mxu0 0.0
    %1842 = vmatprep.subr.mxu0 0.0
    %1843 = vmatpush1.msra.mxu0 0.0
    %1844 = vmatprep.subr.mxu0 0.0
    %1845 = vmatpush1.msra.mxu0 0.0
    %1846 = vmatprep.subr.mxu0 0.0
    %1847 = vmatpush1.msra.mxu0 0.0
    %1848 = vmatprep.subr.mxu0 0.0
    %1849 = vmatpush1.msra.mxu0 0.0
    %1850 = vmatprep.subr.mxu0 0.0
    %1851 = vmatpush1.msra.mxu0 0.0
    %1852 = vmatprep.subr.mxu0 0.0
    %1853 = vmatpush1.msra.mxu0 0.0
    %1854 = vmatprep.subr.mxu0 0.0
    %1855 = vmatpush1.msra.mxu0 0.0
    %1856 = vmatprep.subr.mxu0 0.0
    %1857 = vmatpush1.msra.mxu0 0.0
    %1858 = vmatprep.subr.mxu0 0.0
    %1859 = vmatpush1.msra.mxu0 0.0
    %1860 = vmatprep.subr.mxu0 0.0
    %1861 = vmatpush1.msra.mxu0 0.0
    %1862 = vmatprep.subr.mxu0 0.0
    %1863 = vmatpush1.msra.mxu0 0.0
    %1864 = vmatprep.subr.mxu0 0.0
    %1865 = vmatpush1.msra.mxu0 %v1827
    %1866 = vmatprep.subr.mxu0 0.0
    %1867 = vmatpush1.msra.mxu0 %v1826
    %1868 = vmatprep.subr.mxu0 0.0
    %1869 = vmatpush1.msra.mxu0 %v1825
    %1870 = vmatprep.subr.mxu0 0.0
    %1871 = vmatpush1.msra.mxu0 %v1824
    %1872 = vmatprep.subr.mxu0 0.0
    %1873 = vmatpush2.msra.mxu0 0.0
    %1874 = vmatprep.subr.mxu0 0.0
    %1875 = vmatpush2.msra.mxu0 0.0
    %1876 = vmatprep.subr.mxu0 0.0
    %1877 = vmatpush2.msra.mxu0 0.0
    %1878 = vmatprep.subr.mxu0 0.0
    %1879 = vmatpush2.msra.mxu0 0.0
    %1880 = vmatprep.subr.mxu0 0.0
    %1881 = vmatpush2.msra.mxu0 0.0
    %1882 = vmatprep.subr.mxu0 0.0
    %1883 = vmatpush2.msra.mxu0 0.0
    %1884 = vmatprep.subr.mxu0 0.0
    %1885 = vmatpush2.msra.mxu0 0.0
    %1886 = vmatprep.subr.mxu0 0.0
    %1887 = vmatpush2.msra.mxu0 0.0
    %1888 = vmatprep.subr.mxu0 0.0
    %1889 = vmatpush2.msra.mxu0 0.0
    %1890 = vmatprep.subr.mxu0 0.0
    %1891 = vmatpush2.msra.mxu0 0.0
    %1892 = vmatprep.subr.mxu0 0.0
    %1893 = vmatpush2.msra.mxu0 0.0
    %1894 = vmatprep.subr.mxu0 0.0
    %1895 = vmatpush2.msra.mxu0 0.0
    %1896 = vmatprep.subr.mxu0 0.0
    %1897 = vmatpush2.msra.mxu0 0.0
    %1898 = vmatprep.subr.mxu0 0.0
    %1899 = vmatpush2.msra.mxu0 0.0
    %1900 = vmatprep.subr.mxu0 0.0
    %1901 = vmatpush2.msra.mxu0 0.0
    %1902 = vmatprep.subr.mxu0 0.0
    %1903 = vmatpush2.msra.mxu0 0.0
    %1904 = vmatprep.mubr.f32.mxu0 0.0
    %1905 = vmatmul.mubr.f32.gmra.mxu0 %v1838
    %v1906 = vpop.f32.mrf.mxu0
    %v1907 = vadd.f32 %v1833, %v1906
    %v1908 = vpop.f32.mrf.mxu0
    %1909 = vdwg.mxu0
    %s1910 = scalar_lea.vmem [#allocation2], 40
    %1911 = vst [vmem:[%s1910] sm:$0xff] %v1907
    %s1912 = scalar_lea.vmem %s1, 40
    %v1913 = vld [vmem:[%s1912] sm:$0xff]
    %1914 = vrot.lane.b32.xlu0 %v1823, 64
    %v1915 = vpop.permute.xlu0 %1914
    %v1917 = vsel %vm34, %v1913, %v1915
    %v1918 = vld [vmem:[%s5] sm:$0xff]
    %v1919 = vld [vmem:[%s5 + $0x8] sm:$0xff]
    %v1920 = vld [vmem:[%s5 + $0x10] sm:$0xff]
    %v1921 = vld [vmem:[%s5 + $0x18] sm:$0xff]
    %v1922 = vld [vmem:[%s5 + $0x20] sm:$0xff]
    %v1923 = vld [vmem:[%s5 + $0x28] sm:$0xff]
    %v1924 = vld [vmem:[%s5 + $0x30] sm:$0xff]
    %v1925 = vld [vmem:[%s5 + $0x38] sm:$0xff]
    %v1926 = vld [vmem:[%s6] sm:$0x1]
    %v1928 = vlaneseq
    %v1929 = vshrl.u32 %v1928, 7
    %v1930 = vsub.s32 0, %v1929
    %v1931 = vrot.slane %v1926, %v1930
    %v1934 = vsel %vm51, %v1917, 0
    %1936 = vmatprep.subr.mxu0 0.0
    %1937 = vmatpush1.msra.mxu0 0.0
    %1938 = vmatprep.subr.mxu0 0.0
    %1939 = vmatpush1.msra.mxu0 0.0
    %1940 = vmatprep.subr.mxu0 0.0
    %1941 = vmatpush1.msra.mxu0 0.0
    %1942 = vmatprep.subr.mxu0 0.0
    %1943 = vmatpush1.msra.mxu0 0.0
    %1944 = vmatprep.subr.mxu0 0.0
    %1945 = vmatpush1.msra.mxu0 0.0
    %1946 = vmatprep.subr.mxu0 0.0
    %1947 = vmatpush1.msra.mxu0 0.0
    %1948 = vmatprep.subr.mxu0 0.0
    %1949 = vmatpush1.msra.mxu0 0.0
    %1950 = vmatprep.subr.mxu0 0.0
    %1951 = vmatpush1.msra.mxu0 0.0
    %1952 = vmatprep.subr.mxu0 0.0
    %1953 = vmatpush1.msra.mxu0 %v1925
    %1954 = vmatprep.subr.mxu0 0.0
    %1955 = vmatpush1.msra.mxu0 %v1924
    %1956 = vmatprep.subr.mxu0 0.0
    %1957 = vmatpush1.msra.mxu0 %v1923
    %1958 = vmatprep.subr.mxu0 0.0
    %1959 = vmatpush1.msra.mxu0 %v1922
    %1960 = vmatprep.subr.mxu0 0.0
    %1961 = vmatpush1.msra.mxu0 %v1921
    %1962 = vmatprep.subr.mxu0 0.0
    %1963 = vmatpush1.msra.mxu0 %v1920
    %1964 = vmatprep.subr.mxu0 0.0
    %1965 = vmatpush1.msra.mxu0 %v1919
    %1966 = vmatprep.subr.mxu0 0.0
    %1967 = vmatpush1.msra.mxu0 %v1918
    %1968 = vmatprep.subr.mxu0 0.0
    %1969 = vmatpush2.msra.mxu0 0.0
    %1970 = vmatprep.subr.mxu0 0.0
    %1971 = vmatpush2.msra.mxu0 0.0
    %1972 = vmatprep.subr.mxu0 0.0
    %1973 = vmatpush2.msra.mxu0 0.0
    %1974 = vmatprep.subr.mxu0 0.0
    %1975 = vmatpush2.msra.mxu0 0.0
    %1976 = vmatprep.subr.mxu0 0.0
    %1977 = vmatpush2.msra.mxu0 0.0
    %1978 = vmatprep.subr.mxu0 0.0
    %1979 = vmatpush2.msra.mxu0 0.0
    %1980 = vmatprep.subr.mxu0 0.0
    %1981 = vmatpush2.msra.mxu0 0.0
    %1982 = vmatprep.subr.mxu0 0.0
    %1983 = vmatpush2.msra.mxu0 0.0
    %1984 = vmatprep.subr.mxu0 0.0
    %1985 = vmatpush2.msra.mxu0 0.0
    %1986 = vmatprep.subr.mxu0 0.0
    %1987 = vmatpush2.msra.mxu0 0.0
    %1988 = vmatprep.subr.mxu0 0.0
    %1989 = vmatpush2.msra.mxu0 0.0
    %1990 = vmatprep.subr.mxu0 0.0
    %1991 = vmatpush2.msra.mxu0 0.0
    %1992 = vmatprep.subr.mxu0 0.0
    %1993 = vmatpush2.msra.mxu0 0.0
    %1994 = vmatprep.subr.mxu0 0.0
    %1995 = vmatpush2.msra.mxu0 0.0
    %1996 = vmatprep.subr.mxu0 0.0
    %1997 = vmatpush2.msra.mxu0 0.0
    %1998 = vmatprep.subr.mxu0 0.0
    %1999 = vmatpush2.msra.mxu0 0.0
    %2000 = vmatprep.mubr.f32.mxu0 0.0
    %2001 = vmatmul.mubr.f32.gmra.mxu0 %v1934
    %v2002 = vpop.f32.mrf.mxu0
    %v2003 = vadd.f32 %v1931, %v2002
    %v2004 = vpop.f32.mrf.mxu0
    %2005 = vdwg.mxu0
    %v2006 = vxor.u32 %v2003, 2147483648
    %v2007 = vmul.f32 %v2006, 1.442695
    %v2008 = vpow.pop %v2007
    %v2009 = vadd.f32 %v2008, 1.0
    %v2010 = vrcp.pop %v2009
    %v2011 = vmul.f32 1.0, %v2010
    %v2012 = vtanh.pop %v2003
    %v2013 = vmul.f32 %v2011, %v1817
    %2015 = vrot.lane.b32.xlu0 %v2012, 64
    %v2016 = vpop.permute.xlu0 %2015
    %v2018 = vmul.f32 %v2011, %v2016
    %2020 = vrot.lane.b32.xlu0 %v2018, 32
    %v2021 = vpop.permute.xlu0 %2020
    %v2023 = vadd.f32 %v2013, %v2021
    %v2024 = vtanh.pop %v2023
    %2026 = vrot.lane.b32.xlu0 %v2024, 64
    %v2027 = vpop.permute.xlu0 %2026
    %v2029 = vmul.f32 %v2011, %v2027
    %v2030 = vld [vmem:[%s7] sm:$0xff]
    %v2031 = vld [vmem:[%s7 + $0x8] sm:$0xff]
    %v2032 = vld [vmem:[%s7 + $0x10] sm:$0xff]
    %v2033 = vld [vmem:[%s7 + $0x18] sm:$0xff]
    %v2034 = vld [vmem:[%s8] sm:$0x1]
    %v2036 = vlaneseq
    %v2037 = vshrl.u32 %v2036, 7
    %v2038 = vsub.s32 0, %v2037
    %v2039 = vrot.slane %v2034, %v2038
    %2042 = vrot.lane.b32.xlu0 %v2029, 32
    %v2043 = vpop.permute.xlu0 %2042
    %v2044 = vsel %vm34, %v2043, 0
    %2046 = vmatprep.subr.mxu0 0.0
    %2047 = vmatpush1.msra.mxu0 0.0
    %2048 = vmatprep.subr.mxu0 0.0
    %2049 = vmatpush1.msra.mxu0 0.0
    %2050 = vmatprep.subr.mxu0 0.0
    %2051 = vmatpush1.msra.mxu0 0.0
    %2052 = vmatprep.subr.mxu0 0.0
    %2053 = vmatpush1.msra.mxu0 0.0
    %2054 = vmatprep.subr.mxu0 0.0
    %2055 = vmatpush1.msra.mxu0 0.0
    %2056 = vmatprep.subr.mxu0 0.0
    %2057 = vmatpush1.msra.mxu0 0.0
    %2058 = vmatprep.subr.mxu0 0.0
    %2059 = vmatpush1.msra.mxu0 0.0
    %2060 = vmatprep.subr.mxu0 0.0
    %2061 = vmatpush1.msra.mxu0 0.0
    %2062 = vmatprep.subr.mxu0 0.0
    %2063 = vmatpush1.msra.mxu0 0.0
    %2064 = vmatprep.subr.mxu0 0.0
    %2065 = vmatpush1.msra.mxu0 0.0
    %2066 = vmatprep.subr.mxu0 0.0
    %2067 = vmatpush1.msra.mxu0 0.0
    %2068 = vmatprep.subr.mxu0 0.0
    %2069 = vmatpush1.msra.mxu0 0.0
    %2070 = vmatprep.subr.mxu0 0.0
    %2071 = vmatpush1.msra.mxu0 %v2033
    %2072 = vmatprep.subr.mxu0 0.0
    %2073 = vmatpush1.msra.mxu0 %v2032
    %2074 = vmatprep.subr.mxu0 0.0
    %2075 = vmatpush1.msra.mxu0 %v2031
    %2076 = vmatprep.subr.mxu0 0.0
    %2077 = vmatpush1.msra.mxu0 %v2030
    %2078 = vmatprep.subr.mxu0 0.0
    %2079 = vmatpush2.msra.mxu0 0.0
    %2080 = vmatprep.subr.mxu0 0.0
    %2081 = vmatpush2.msra.mxu0 0.0
    %2082 = vmatprep.subr.mxu0 0.0
    %2083 = vmatpush2.msra.mxu0 0.0
    %2084 = vmatprep.subr.mxu0 0.0
    %2085 = vmatpush2.msra.mxu0 0.0
    %2086 = vmatprep.subr.mxu0 0.0
    %2087 = vmatpush2.msra.mxu0 0.0
    %2088 = vmatprep.subr.mxu0 0.0
    %2089 = vmatpush2.msra.mxu0 0.0
    %2090 = vmatprep.subr.mxu0 0.0
    %2091 = vmatpush2.msra.mxu0 0.0
    %2092 = vmatprep.subr.mxu0 0.0
    %2093 = vmatpush2.msra.mxu0 0.0
    %2094 = vmatprep.subr.mxu0 0.0
    %2095 = vmatpush2.msra.mxu0 0.0
    %2096 = vmatprep.subr.mxu0 0.0
    %2097 = vmatpush2.msra.mxu0 0.0
    %2098 = vmatprep.subr.mxu0 0.0
    %2099 = vmatpush2.msra.mxu0 0.0
    %2100 = vmatprep.subr.mxu0 0.0
    %2101 = vmatpush2.msra.mxu0 0.0
    %2102 = vmatprep.subr.mxu0 0.0
    %2103 = vmatpush2.msra.mxu0 0.0
    %2104 = vmatprep.subr.mxu0 0.0
    %2105 = vmatpush2.msra.mxu0 0.0
    %2106 = vmatprep.subr.mxu0 0.0
    %2107 = vmatpush2.msra.mxu0 0.0
    %2108 = vmatprep.subr.mxu0 0.0
    %2109 = vmatpush2.msra.mxu0 0.0
    %2110 = vmatprep.mubr.f32.mxu0 0.0
    %2111 = vmatmul.mubr.f32.gmra.mxu0 %v2044
    %v2112 = vpop.f32.mrf.mxu0
    %v2113 = vadd.f32 %v2039, %v2112
    %v2114 = vpop.f32.mrf.mxu0
    %2115 = vdwg.mxu0
    %s2116 = scalar_lea.vmem [#allocation2], 48
    %2117 = vst [vmem:[%s2116] sm:$0xff] %v2113
    %2118 = vmax.xlane.f32.xlu0 %v2113
    %v2119 = vpop.xlane.xlu0 %2118
    %vm2120 = vcmp.eq.f32.partialorder %v2113, %v2119
    %v2121 = vsel %vm2120, %v672, 128
    %v2122 = vand.u32 %v2121, 65535
    %v2123 = vshra.s32 %v2121, 16
    %v2124 = vcvt.s32.f32 %v2122
    %v2125 = vcvt.s32.f32 %v2123
    %2126 = vmin.xlane.f32.xlu0 %v2125
    %v2127 = vpop.xlane.xlu0 %2126
    %vm2128 = vcmp.eq.f32.partialorder %v2125, %v2127
    %v2129 = vsel %vm2128, %v2124, inf
    %2130 = vmin.xlane.f32.xlu0 %v2129
    %v2131 = vpop.xlane.xlu0 %2130
    %v2132 = vcvt.f32.s32 %v2131
    %v2133 = vcvt.f32.s32 %v2127
    %v2134 = vshll.u32 %v2133, 16
    %v2135 = vadd.s32 %v2134, %v2132
    %vm2136 = vcmp.eq.s32.totalorder %v672, %v2135
    %v2137 = vsel %vm2136, 1, 0
    %v2138 = vcvt.s32.f32 %v2137
    %v2139 = vld [vmem:[%s2] sm:$0xff]
    %v2140 = vld [vmem:[%s2 + $0x8] sm:$0xff]
    %v2141 = vld [vmem:[%s2 + $0x10] sm:$0xff]
    %v2142 = vld [vmem:[%s2 + $0x18] sm:$0xff]
    %v2143 = vld [vmem:[%s2 + $0x20] sm:$0xff]
    %v2144 = vld [vmem:[%s2 + $0x28] sm:$0xff]
    %v2145 = vld [vmem:[%s2 + $0x30] sm:$0xff]
    %v2146 = vld [vmem:[%s2 + $0x38] sm:$0xff]
    %v2147 = vld [vmem:[%s2 + $0x40] sm:$0xff]
    %v2148 = vld [vmem:[%s2 + $0x48] sm:$0xff]
    %v2149 = vld [vmem:[%s2 + $0x50] sm:$0xff]
    %v2150 = vld [vmem:[%s2 + $0x58] sm:$0xff]
    %v2151 = vld [vmem:[%s2 + $0x60] sm:$0xff]
    %v2152 = vld [vmem:[%s2 + $0x68] sm:$0xff]
    %v2153 = vld [vmem:[%s2 + $0x70] sm:$0xff]
    %v2154 = vld [vmem:[%s2 + $0x78] sm:$0xff]
    %2155 = vmatprep.subr.mxu0 0.0
    %2156 = vmatpush1.msra.mxu0 %v2154
    %2157 = vmatprep.subr.mxu0 0.0
    %2158 = vmatpush1.msra.mxu0 %v2153
    %2159 = vmatprep.subr.mxu0 0.0
    %2160 = vmatpush1.msra.mxu0 %v2152
    %2161 = vmatprep.subr.mxu0 0.0
    %2162 = vmatpush1.msra.mxu0 %v2151
    %2163 = vmatprep.subr.mxu0 0.0
    %2164 = vmatpush1.msra.mxu0 %v2150
    %2165 = vmatprep.subr.mxu0 0.0
    %2166 = vmatpush1.msra.mxu0 %v2149
    %2167 = vmatprep.subr.mxu0 0.0
    %2168 = vmatpush1.msra.mxu0 %v2148
    %2169 = vmatprep.subr.mxu0 0.0
    %2170 = vmatpush1.msra.mxu0 %v2147
    %2171 = vmatprep.subr.mxu0 0.0
    %2172 = vmatpush1.msra.mxu0 %v2146
    %2173 = vmatprep.subr.mxu0 0.0
    %2174 = vmatpush1.msra.mxu0 %v2145
    %2175 = vmatprep.subr.mxu0 0.0
    %2176 = vmatpush1.msra.mxu0 %v2144
    %2177 = vmatprep.subr.mxu0 0.0
    %2178 = vmatpush1.msra.mxu0 %v2143
    %2179 = vmatprep.subr.mxu0 0.0
    %2180 = vmatpush1.msra.mxu0 %v2142
    %2181 = vmatprep.subr.mxu0 0.0
    %2182 = vmatpush1.msra.mxu0 %v2141
    %2183 = vmatprep.subr.mxu0 0.0
    %2184 = vmatpush1.msra.mxu0 %v2140
    %2185 = vmatprep.subr.mxu0 0.0
    %2186 = vmatpush1.msra.mxu0 %v2139
    %2187 = vmatprep.subr.mxu0 0.0
    %2188 = vmatpush2.msra.mxu0 0.0
    %2189 = vmatprep.subr.mxu0 0.0
    %2190 = vmatpush2.msra.mxu0 0.0
    %2191 = vmatprep.subr.mxu0 0.0
    %2192 = vmatpush2.msra.mxu0 0.0
    %2193 = vmatprep.subr.mxu0 0.0
    %2194 = vmatpush2.msra.mxu0 0.0
    %2195 = vmatprep.subr.mxu0 0.0
    %2196 = vmatpush2.msra.mxu0 0.0
    %2197 = vmatprep.subr.mxu0 0.0
    %2198 = vmatpush2.msra.mxu0 0.0
    %2199 = vmatprep.subr.mxu0 0.0
    %2200 = vmatpush2.msra.mxu0 0.0
    %2201 = vmatprep.subr.mxu0 0.0
    %2202 = vmatpush2.msra.mxu0 0.0
    %2203 = vmatprep.subr.mxu0 0.0
    %2204 = vmatpush2.msra.mxu0 0.0
    %2205 = vmatprep.subr.mxu0 0.0
    %2206 = vmatpush2.msra.mxu0 0.0
    %2207 = vmatprep.subr.mxu0 0.0
    %2208 = vmatpush2.msra.mxu0 0.0
    %2209 = vmatprep.subr.mxu0 0.0
    %2210 = vmatpush2.msra.mxu0 0.0
    %2211 = vmatprep.subr.mxu0 0.0
    %2212 = vmatpush2.msra.mxu0 0.0
    %2213 = vmatprep.subr.mxu0 0.0
    %2214 = vmatpush2.msra.mxu0 0.0
    %2215 = vmatprep.subr.mxu0 0.0
    %2216 = vmatpush2.msra.mxu0 0.0
    %2217 = vmatprep.subr.mxu0 0.0
    %2218 = vmatpush2.msra.mxu0 0.0
    %2219 = vmatprep.mubr.f32.mxu0 0.0
    %2220 = vmatmul.mubr.f32.gmra.mxu0 %v2138
    %v2221 = vpop.f32.mrf.mxu0
    %v2222 = vadd.f32 0.0, %v2221
    %v2223 = vpop.f32.mrf.mxu0
    %2224 = vdwg.mxu0
    %2225 = vrot.lane.b32.xlu0 %v2029, 64
    %v2226 = vpop.permute.xlu0 %2225
    %v2228 = vsel %vm34, %v2222, %v2226
    %v2229 = vld [vmem:[%s5] sm:$0xff]
    %v2230 = vld [vmem:[%s5 + $0x8] sm:$0xff]
    %v2231 = vld [vmem:[%s5 + $0x10] sm:$0xff]
    %v2232 = vld [vmem:[%s5 + $0x18] sm:$0xff]
    %v2233 = vld [vmem:[%s5 + $0x20] sm:$0xff]
    %v2234 = vld [vmem:[%s5 + $0x28] sm:$0xff]
    %v2235 = vld [vmem:[%s5 + $0x30] sm:$0xff]
    %v2236 = vld [vmem:[%s5 + $0x38] sm:$0xff]
    %v2237 = vld [vmem:[%s6] sm:$0x1]
    %v2239 = vlaneseq
    %v2240 = vshrl.u32 %v2239, 7
    %v2241 = vsub.s32 0, %v2240
    %v2242 = vrot.slane %v2237, %v2241
    %v2245 = vsel %vm51, %v2228, 0
    %2247 = vmatprep.subr.mxu0 0.0
    %2248 = vmatpush1.msra.mxu0 0.0
    %2249 = vmatprep.subr.mxu0 0.0
    %2250 = vmatpush1.msra.mxu0 0.0
    %2251 = vmatprep.subr.mxu0 0.0
    %2252 = vmatpush1.msra.mxu0 0.0
    %2253 = vmatprep.subr.mxu0 0.0
    %2254 = vmatpush1.msra.mxu0 0.0
    %2255 = vmatprep.subr.mxu0 0.0
    %2256 = vmatpush1.msra.mxu0 0.0
    %2257 = vmatprep.subr.mxu0 0.0
    %2258 = vmatpush1.msra.mxu0 0.0
    %2259 = vmatprep.subr.mxu0 0.0
    %2260 = vmatpush1.msra.mxu0 0.0
    %2261 = vmatprep.subr.mxu0 0.0
    %2262 = vmatpush1.msra.mxu0 0.0
    %2263 = vmatprep.subr.mxu0 0.0
    %2264 = vmatpush1.msra.mxu0 %v2236
    %2265 = vmatprep.subr.mxu0 0.0
    %2266 = vmatpush1.msra.mxu0 %v2235
    %2267 = vmatprep.subr.mxu0 0.0
    %2268 = vmatpush1.msra.mxu0 %v2234
    %2269 = vmatprep.subr.mxu0 0.0
    %2270 = vmatpush1.msra.mxu0 %v2233
    %2271 = vmatprep.subr.mxu0 0.0
    %2272 = vmatpush1.msra.mxu0 %v2232
    %2273 = vmatprep.subr.mxu0 0.0
    %2274 = vmatpush1.msra.mxu0 %v2231
    %2275 = vmatprep.subr.mxu0 0.0
    %2276 = vmatpush1.msra.mxu0 %v2230
    %2277 = vmatprep.subr.mxu0 0.0
    %2278 = vmatpush1.msra.mxu0 %v2229
    %2279 = vmatprep.subr.mxu0 0.0
    %2280 = vmatpush2.msra.mxu0 0.0
    %2281 = vmatprep.subr.mxu0 0.0
    %2282 = vmatpush2.msra.mxu0 0.0
    %2283 = vmatprep.subr.mxu0 0.0
    %2284 = vmatpush2.msra.mxu0 0.0
    %2285 = vmatprep.subr.mxu0 0.0
    %2286 = vmatpush2.msra.mxu0 0.0
    %2287 = vmatprep.subr.mxu0 0.0
    %2288 = vmatpush2.msra.mxu0 0.0
    %2289 = vmatprep.subr.mxu0 0.0
    %2290 = vmatpush2.msra.mxu0 0.0
    %2291 = vmatprep.subr.mxu0 0.0
    %2292 = vmatpush2.msra.mxu0 0.0
    %2293 = vmatprep.subr.mxu0 0.0
    %2294 = vmatpush2.msra.mxu0 0.0
    %2295 = vmatprep.subr.mxu0 0.0
    %2296 = vmatpush2.msra.mxu0 0.0
    %2297 = vmatprep.subr.mxu0 0.0
    %2298 = vmatpush2.msra.mxu0 0.0
    %2299 = vmatprep.subr.mxu0 0.0
    %2300 = vmatpush2.msra.mxu0 0.0
    %2301 = vmatprep.subr.mxu0 0.0
    %2302 = vmatpush2.msra.mxu0 0.0
    %2303 = vmatprep.subr.mxu0 0.0
    %2304 = vmatpush2.msra.mxu0 0.0
    %2305 = vmatprep.subr.mxu0 0.0
    %2306 = vmatpush2.msra.mxu0 0.0
    %2307 = vmatprep.subr.mxu0 0.0
    %2308 = vmatpush2.msra.mxu0 0.0
    %2309 = vmatprep.subr.mxu0 0.0
    %2310 = vmatpush2.msra.mxu0 0.0
    %2311 = vmatprep.mubr.f32.mxu0 0.0
    %2312 = vmatmul.mubr.f32.gmra.mxu0 %v2245
    %v2313 = vpop.f32.mrf.mxu0
    %v2314 = vadd.f32 %v2242, %v2313
    %v2315 = vpop.f32.mrf.mxu0
    %2316 = vdwg.mxu0
    %v2317 = vxor.u32 %v2314, 2147483648
    %v2318 = vmul.f32 %v2317, 1.442695
    %v2319 = vpow.pop %v2318
    %v2320 = vadd.f32 %v2319, 1.0
    %v2321 = vrcp.pop %v2320
    %v2322 = vmul.f32 1.0, %v2321
    %v2323 = vtanh.pop %v2314
    %v2324 = vmul.f32 %v2322, %v2023
    %2326 = vrot.lane.b32.xlu0 %v2323, 64
    %v2327 = vpop.permute.xlu0 %2326
    %v2329 = vmul.f32 %v2322, %v2327
    %2331 = vrot.lane.b32.xlu0 %v2329, 32
    %v2332 = vpop.permute.xlu0 %2331
    %v2334 = vadd.f32 %v2324, %v2332
    %v2335 = vtanh.pop %v2334
    %2337 = vrot.lane.b32.xlu0 %v2335, 64
    %v2338 = vpop.permute.xlu0 %2337
    %v2340 = vmul.f32 %v2322, %v2338
    %v2341 = vld [vmem:[%s7] sm:$0xff]
    %v2342 = vld [vmem:[%s7 + $0x8] sm:$0xff]
    %v2343 = vld [vmem:[%s7 + $0x10] sm:$0xff]
    %v2344 = vld [vmem:[%s7 + $0x18] sm:$0xff]
    %v2345 = vld [vmem:[%s8] sm:$0x1]
    %v2347 = vlaneseq
    %v2348 = vshrl.u32 %v2347, 7
    %v2349 = vsub.s32 0, %v2348
    %v2350 = vrot.slane %v2345, %v2349
    %2353 = vrot.lane.b32.xlu0 %v2340, 32
    %v2354 = vpop.permute.xlu0 %2353
    %v2355 = vsel %vm34, %v2354, 0
    %2357 = vmatprep.subr.mxu0 0.0
    %2358 = vmatpush1.msra.mxu0 0.0
    %2359 = vmatprep.subr.mxu0 0.0
    %2360 = vmatpush1.msra.mxu0 0.0
    %2361 = vmatprep.subr.mxu0 0.0
    %2362 = vmatpush1.msra.mxu0 0.0
    %2363 = vmatprep.subr.mxu0 0.0
    %2364 = vmatpush1.msra.mxu0 0.0
    %2365 = vmatprep.subr.mxu0 0.0
    %2366 = vmatpush1.msra.mxu0 0.0
    %2367 = vmatprep.subr.mxu0 0.0
    %2368 = vmatpush1.msra.mxu0 0.0
    %2369 = vmatprep.subr.mxu0 0.0
    %2370 = vmatpush1.msra.mxu0 0.0
    %2371 = vmatprep.subr.mxu0 0.0
    %2372 = vmatpush1.msra.mxu0 0.0
    %2373 = vmatprep.subr.mxu0 0.0
    %2374 = vmatpush1.msra.mxu0 0.0
    %2375 = vmatprep.subr.mxu0 0.0
    %2376 = vmatpush1.msra.mxu0 0.0
    %2377 = vmatprep.subr.mxu0 0.0
    %2378 = vmatpush1.msra.mxu0 0.0
    %2379 = vmatprep.subr.mxu0 0.0
    %2380 = vmatpush1.msra.mxu0 0.0
    %2381 = vmatprep.subr.mxu0 0.0
    %2382 = vmatpush1.msra.mxu0 %v2344
    %2383 = vmatprep.subr.mxu0 0.0
    %2384 = vmatpush1.msra.mxu0 %v2343
    %2385 = vmatprep.subr.mxu0 0.0
    %2386 = vmatpush1.msra.mxu0 %v2342
    %2387 = vmatprep.subr.mxu0 0.0
    %2388 = vmatpush1.msra.mxu0 %v2341
    %2389 = vmatprep.subr.mxu0 0.0
    %2390 = vmatpush2.msra.mxu0 0.0
    %2391 = vmatprep.subr.mxu0 0.0
    %2392 = vmatpush2.msra.mxu0 0.0
    %2393 = vmatprep.subr.mxu0 0.0
    %2394 = vmatpush2.msra.mxu0 0.0
    %2395 = vmatprep.subr.mxu0 0.0
    %2396 = vmatpush2.msra.mxu0 0.0
    %2397 = vmatprep.subr.mxu0 0.0
    %2398 = vmatpush2.msra.mxu0 0.0
    %2399 = vmatprep.subr.mxu0 0.0
    %2400 = vmatpush2.msra.mxu0 0.0
    %2401 = vmatprep.subr.mxu0 0.0
    %2402 = vmatpush2.msra.mxu0 0.0
    %2403 = vmatprep.subr.mxu0 0.0
    %2404 = vmatpush2.msra.mxu0 0.0
    %2405 = vmatprep.subr.mxu0 0.0
    %2406 = vmatpush2.msra.mxu0 0.0
    %2407 = vmatprep.subr.mxu0 0.0
    %2408 = vmatpush2.msra.mxu0 0.0
    %2409 = vmatprep.subr.mxu0 0.0
    %2410 = vmatpush2.msra.mxu0 0.0
    %2411 = vmatprep.subr.mxu0 0.0
    %2412 = vmatpush2.msra.mxu0 0.0
    %2413 = vmatprep.subr.mxu0 0.0
    %2414 = vmatpush2.msra.mxu0 0.0
    %2415 = vmatprep.subr.mxu0 0.0
    %2416 = vmatpush2.msra.mxu0 0.0
    %2417 = vmatprep.subr.mxu0 0.0
    %2418 = vmatpush2.msra.mxu0 0.0
    %2419 = vmatprep.subr.mxu0 0.0
    %2420 = vmatpush2.msra.mxu0 0.0
    %2421 = vmatprep.mubr.f32.mxu0 0.0
    %2422 = vmatmul.mubr.f32.gmra.mxu0 %v2355
    %v2423 = vpop.f32.mrf.mxu0
    %v2424 = vadd.f32 %v2350, %v2423
    %v2425 = vpop.f32.mrf.mxu0
    %2426 = vdwg.mxu0
    %s2427 = scalar_lea.vmem [#allocation2], 56
    %2428 = vst [vmem:[%s2427] sm:$0xff] %v2424
    // Predicated region
    $region38: #{seq2seq_forward.1} parent=1 // pred_check
      _
    $region39: #{seq2seq_forward.1} parent=1 // pred_check_branch
      %2430 = sbr.rel (0) target = $region41
    $region40: #{seq2seq_forward.1} parent=1 // pred_region
      %s2432 = ssub.s32 1024, 1024
      %2433 = vsyncadd [#allocation3], %s2432
      %s2434 = sshll.u32 [#allocation2], 4
      %s2435 = int_to_ptr.vmem [resolvable:$true] %s2434
      %2440 = dma.vmem_to_hbm [thread:$0]  %s2435, 1024, %s9, [#allocation3], 128, 128, 8
    $region41: #{seq2seq_forward.1} parent=1 // pred_fallthru
      _
    // Predicated region
    $region42: #{seq2seq_forward.1} parent=1 // pred_check
      _
    $region43: #{seq2seq_forward.1} parent=1 // pred_check_branch
      %2442 = sbr.rel (0) target = $region45
    $region44: #{seq2seq_forward.1} parent=1 // pred_region
      %2443 = dma.done [#allocation3], 1024
    $region45: #{seq2seq_forward.1} parent=1 // pred_fallthru
      _
    %2444 = vsyncpa [#allocation3], 1

</llo_original>
